<compile_context>
chip_gen: v5e
topology: v5e:2x2
jax: 0.10.0
libtpu: 0.0.40
codegen_flags: <defaults>
</compile_context>

<pallas_src>
import math
from functools import partial

import jax
import jax.numpy as jnp
from jax.experimental import pallas as pl
from jax.experimental.pallas import tpu as pltpu


def _nhpp_kernel(kind_ref,                 # SMEM (n_chunks,) i32: 0 = Riemann chunk, 1 = event chunk
                 tcols_ref,                # (tile_t, n_cols) time-coefficient columns (w is last col)
                 delta_ref,                # (order*dim, P_pad) pair deltas, pairs on lanes
                 gsum_ref,                 # (1, P_pad) gamma_i + gamma_j, pairs on lanes
                 out_ref,                  # (1, P_pad) per-pair accumulator (resident output)
                 *, order, dim, n_coeff):
    k = pl.program_id(0)

    @pl.when(k == 0)
    def _init():
        out_ref[...] = jnp.zeros_like(out_ref)

    # Riemann step size (sample chunks) or 1/0 event-validity indicator (event chunks).
    w_col = tcols_ref[:, n_coeff:n_coeff + 1]                       # (tile_t, 1)

    # z_i(t) - z_j(t) per spatial dim, vectorized over (time sublanes, pair lanes).
    d2 = None
    for d in range(dim):
        diff = delta_ref[d:d + 1, :]                                # o = 0 term, c_0(t) = 1
        for o in range(1, order):
            diff = diff + tcols_ref[:, o - 1:o] * delta_ref[o * dim + d:o * dim + d + 1, :]
        d2 = diff * diff if d2 is None else d2 + diff * diff

    ll = gsum_ref[...] - jnp.sqrt(d2)                               # log-intensity

    kind = kind_ref[k]

    @pl.when(kind == 0)
    def _sample_chunk():                                            # + stepSize * lambda(t)
        out_ref[...] += jnp.sum(w_col * jnp.exp(ll), axis=0, keepdims=True)

    @pl.when(kind == 1)
    def _event_chunk():                                             # - log lambda(e)   (no exp here)
        out_ref[...] += jnp.sum(w_col * (-ll), axis=0, keepdims=True)


def nhpp_nm_forward(data, z0, gamma, *, num_samples=10, tile_t=None):
    """NHPP negative log-likelihood.

    data : list of (tInit, tLast, eventTimes)   (the PyTorch forward's `data`)
    z0   : (order, num_nodes, dim) f32          (the module's z0_nongrad stack)
    gamma: (num_nodes, 1) f32
    """
    z0 = jnp.asarray(z0, jnp.float32)
    gamma = jnp.asarray(gamma, jnp.float32)
    order, num_nodes, dim = int(z0.shape[0]), int(z0.shape[1]), int(z0.shape[2])

    # ---- flatten intervals into sample / event streams (mirrors the torch loop) ----
    samp_t, samp_w, evt_t = [], [], []
    for t_init, t_last, events in data:
        if t_init >= t_last:
            raise ValueError(f"The initial time {t_init} cannot be greater than {t_last}!")
        step = (t_last - t_init) / num_samples       # np.linspace(endpoint=False, retstep=True)
        for s in range(num_samples):
            samp_t.append(t_init + s * step)
            samp_w.append(step)
        for e in events:
            evt_t.append(float(e))
    n_samp, n_evt = len(samp_t), len(evt_t)

    # ---- per-pair constants, PAIR AXIS ON LANES (lane-dense, hoisted out of the kernel) ----
    ii, jj = jnp.triu_indices(num_nodes, k=1)
    n_pairs = int(ii.shape[0])
    p_pad = max(128, -(-n_pairs // 128) * 128)
    od = order * dim

    delta = jnp.transpose(z0[:, ii, :] - z0[:, jj, :], (0, 2, 1)).reshape(od, n_pairs)
    delta_p = jnp.zeros((od, p_pad), jnp.float32).at[:, :n_pairs].set(delta)
    gsum = gamma[ii, 0] + gamma[jj, 0]
    gsum_p = jnp.zeros((1, p_pad), jnp.float32).at[0, :n_pairs].set(gsum)

    # ---- auto-size the time tile: big tiles amortize per-grid-step overhead ----
    if tile_t is None:
        budget = 16 * 1024 * 1024                     # ~8 live (tile_t, P_pad) f32 temporaries
        tile_t = 2048
        while tile_t > 256 and 8 * 4 * tile_t * p_pad > budget:
            tile_t //= 2
        need = max(n_samp, n_evt, 1)
        tile_t = min(tile_t, max(256, 1 << (need - 1).bit_length()))

    # ---- packed per-time coefficient columns, already time-on-sublanes ----
    n_coeff = order - 1
    n_cols = n_coeff + 1                              # [t^1/1!, .., t^(order-1)/(order-1)!, w]

    def make_chunks(ts, ws):
        n = len(ts)
        if n == 0:
            return jnp.zeros((0, tile_t, n_cols), jnp.float32)
        n_chunks = -(-n // tile_t)
        t = jnp.zeros((n_chunks * tile_t,), jnp.float32).at[:n].set(jnp.asarray(ts, jnp.float32))
        w = jnp.zeros((n_chunks * tile_t,), jnp.float32).at[:n].set(jnp.asarray(ws, jnp.float32))
        cols = [t ** o / math.factorial(o) for o in range(1, order)] + [w]
        return jnp.stack(cols, axis=-1).reshape(n_chunks, tile_t, n_cols)

    samp_cols = make_chunks(samp_t, samp_w)           # padded rows have w=0 -> contribute 0
    evt_cols = make_chunks(evt_t, [1.0] * n_evt)      # padded rows have w=0 -> contribute 0
    n_samp_chunks = int(samp_cols.shape[0])
    n_evt_chunks = int(evt_cols.shape[0])
    c_total = n_samp_chunks + n_evt_chunks
    if c_total == 0:
        return jnp.float32(0.0)
    tcols = jnp.concatenate([samp_cols, evt_cols], axis=0)
    kind = jnp.asarray([0] * n_samp_chunks + [1] * n_evt_chunks, jnp.int32)

    kernel = partial(_nhpp_kernel, order=order, dim=dim, n_coeff=n_coeff)

    # Explicit VMEM budget (v5e scoped default is only 16 MiB); capped for v7x's 64 MiB.
    resident = 4 * p_pad * (od + 2)
    stream = 2 * 4 * tile_t * 128                     # double-buffered, lane-padded time tile
    temps = 8 * 4 * tile_t * p_pad
    vmem_limit = int(min(max(2 * resident + stream + temps + (8 << 20), 32 << 20), 64 << 20))

    def run(single_buffer_resident):
        def resident_spec(shape):
            if single_buffer_resident:
                return pl.BlockSpec(shape, lambda k, kind_ref: (0, 0),
                                    pipeline_mode=pl.Buffered(1))
            return pl.BlockSpec(shape, lambda k, kind_ref: (0, 0))

        call = pl.pallas_call(
            kernel,
            out_shape=jax.ShapeDtypeStruct((1, p_pad), jnp.float32),
            grid_spec=pltpu.PrefetchScalarGridSpec(
                num_scalar_prefetch=1,
                grid=(c_total,),
                in_specs=[
                    # one packed time stream -> one DMA descriptor per step
                    pl.BlockSpec((None, tile_t, n_cols), lambda k, kind_ref: (k, 0, 0)),
                    resident_spec((od, p_pad)),        # pair deltas   (resident)
                    resident_spec((1, p_pad)),         # gamma_i+gamma_j (resident)
                ],
                out_specs=pl.BlockSpec((1, p_pad), lambda k, kind_ref: (0, 0)),
            ),
            compiler_params=pltpu.CompilerParams(
                dimension_semantics=("arbitrary",),
                vmem_limit_bytes=vmem_limit),
        )
        return call(kind, tcols, delta_p, gsum_p)

    try:
        out = run(True)                               # single-buffer the resident constants
    except Exception:                                 # fall back if Buffered(1) is unsupported
        out = run(False)

    # Final pair reduce in the wrapper over the lane-dense output; slicing to n_pairs is
    # the (one-time) padded-pair mask.  PyTorch returns a shape-(1,) tensor; this is the
    # equivalent scalar.
    return jnp.sum(out[0, :n_pairs])


def reference_nll(data, z0, gamma, num_samples):
    """Pure-JAX reference mirroring the PyTorch loop-nest semantics."""
    order, n, _ = z0.shape
    ii, jj = jnp.triu_indices(n, k=1)
    g = gamma[:, 0]

    def log_lambda(t):
        z = sum(z0[o] * (t ** o) / math.factorial(o) for o in range(order))
        diff = z[ii, :] - z[jj, :]
        dist = jnp.sqrt(jnp.sum(diff * diff, axis=-1))
        return g[ii] + g[jj] - dist

    total = 0.0
    for t0, t1, events in data:
        step = (t1 - t0) / num_samples
        for s in range(num_samples):
            total += step * float(jnp.sum(jnp.exp(log_lambda(t0 + s * step))))
        for e in events:
            total -= float(jnp.sum(log_lambda(e)))
    return jnp.float32(total)


if __name__ == "__main__":
    # Small config consistent with the module's __init__.
    num_nodes, dim, order, num_samples = 8, 2, 3, 10

    # Deterministic parameter init (synthetic; mirrors torch.rand / torch.randn shapes).
    key = jax.random.PRNGKey(0)
    kg, kz = jax.random.split(key)
    gamma = jax.random.uniform(kg, (num_nodes, 1), dtype=jnp.float32)       # gamma ~ U[0,1)
    z0 = jax.random.normal(kz, (order, num_nodes, dim), dtype=jnp.float32)  # z0_nongrad stack

    # data = list of (tInit, tLast, eventTimes), as the PyTorch forward expects.
    data = [
        (0.0, 1.0, [0.10, 0.35, 0.80]),
        (1.0, 2.0, [1.20, 1.55]),
    ]

    result = nhpp_nm_forward(data, z0, gamma, num_samples=num_samples)
    result = jax.block_until_ready(result)

    ref = reference_nll(data, z0, gamma, num_samples)
    assert jnp.allclose(result, ref, rtol=2e-3, atol=2e-3), (result, ref)

    print("KERNEL_OK")
</pallas_src>

<mosaic_0001>
module attributes {stable_mosaic.version = 11 : i64} {
  func.func @_nhpp_kernel(%arg0: i32, %arg1: memref<2xi32, #tpu.memory_space<smem>>, %arg2: memref<1x256x3xf32, #tpu.memory_space<vmem>>, %arg3: memref<6x128xf32, #tpu.memory_space<vmem>>, %arg4: memref<1x128xf32, #tpu.memory_space<vmem>>, %arg5: memref<1x128xf32, #tpu.memory_space<vmem>>) attributes {dimension_semantics = [#tpu.dimension_semantics<arbitrary>], iteration_bounds = array<i64: 2>, scalar_prefetch = 1 : i64, scratch_operands = 0 : i64, tpu.core_type = #tpu.core_type<tc>, window_params = [{transform_indices = @transform_0, window_bounds = array<i64: 1, 256, 3>}, {pipeline_mode = #tpu.pipeline_mode<synchronous>, transform_indices = @transform_1, window_bounds = array<i64: 6, 128>}, {pipeline_mode = #tpu.pipeline_mode<synchronous>, transform_indices = @transform_2, window_bounds = array<i64: 1, 128>}, {pipeline_mode = #tpu.pipeline_mode<synchronous>, transform_indices = @transform_3, window_bounds = array<i64: 1, 128>}]} {
    %c0_i32 = arith.constant 0 : i32
    %0 = arith.cmpi eq, %arg0, %c0_i32 : i32
    %1 = arith.extui %0 : i1 to i32
    %c0_i32_0 = arith.constant 0 : i32
    %2 = arith.cmpi ne, %1, %c0_i32_0 : i32
    scf.if %2 {
      %cst = arith.constant 0.000000e+00 : f32
      %52 = vector.broadcast %cst : f32 to vector<1x128xf32>
      %c0_27 = arith.constant 0 : index
      %c0_28 = arith.constant 0 : index
      %53 = vector.load %arg5[%c0_27, %c0_28] : memref<1x128xf32, #tpu.memory_space<vmem>>, vector<1x128xf32>
      tpu.vector_store %arg5[%c0_27, %c0_28], %52 {strides = array<i32>} : memref<1x128xf32, #tpu.memory_space<vmem>>, vector<1x128xf32>,
    } else {
    }
    %c0 = arith.constant 0 : index
    %c0_1 = arith.constant 0 : index
    %c2 = arith.constant 2 : index
    %3 = vector.load %arg2[%c0, %c0_1, %c2] : memref<1x256x3xf32, #tpu.memory_space<vmem>>, vector<1x256x1xf32>
    %4 = vector.shape_cast %3 : vector<1x256x1xf32> to vector<256x1xf32>
    %c0_2 = arith.constant 0 : index
    %c0_3 = arith.constant 0 : index
    %5 = vector.load %arg3[%c0_2, %c0_3] : memref<6x128xf32, #tpu.memory_space<vmem>>, vector<1x128xf32>
    %c0_4 = arith.constant 0 : index
    %c0_5 = arith.constant 0 : index
    %c0_6 = arith.constant 0 : index
    %6 = vector.load %arg2[%c0_4, %c0_5, %c0_6] : memref<1x256x3xf32, #tpu.memory_space<vmem>>, vector<1x256x1xf32>
    %7 = vector.shape_cast %6 : vector<1x256x1xf32> to vector<256x1xf32>
    %c2_7 = arith.constant 2 : index
    %c0_8 = arith.constant 0 : index
    %8 = vector.load %arg3[%c2_7, %c0_8] : memref<6x128xf32, #tpu.memory_space<vmem>>, vector<1x128xf32>
    %9 = vector.broadcast %7 : vector<256x1xf32> to vector<256x128xf32>
    %10 = vector.broadcast %8 : vector<1x128xf32> to vector<256x128xf32>
    %11 = arith.mulf %9, %10 : vector<256x128xf32>
    %12 = vector.broadcast %5 : vector<1x128xf32> to vector<256x128xf32>
    %13 = arith.addf %12, %11 : vector<256x128xf32>
    %c0_9 = arith.constant 0 : index
    %c0_10 = arith.constant 0 : index
    %c1 = arith.constant 1 : index
    %14 = vector.load %arg2[%c0_9, %c0_10, %c1] : memref<1x256x3xf32, #tpu.memory_space<vmem>>, vector<1x256x1xf32>
    %15 = vector.shape_cast %14 : vector<1x256x1xf32> to vector<256x1xf32>
    %c4 = arith.constant 4 : index
    %c0_11 = arith.constant 0 : index
    %16 = vector.load %arg3[%c4, %c0_11] : memref<6x128xf32, #tpu.memory_space<vmem>>, vector<1x128xf32>
    %17 = vector.broadcast %15 : vector<256x1xf32> to vector<256x128xf32>
    %18 = vector.broadcast %16 : vector<1x128xf32> to vector<256x128xf32>
    %19 = arith.mulf %17, %18 : vector<256x128xf32>
    %20 = arith.addf %13, %19 : vector<256x128xf32>
    %21 = arith.mulf %20, %20 : vector<256x128xf32>
    %c1_12 = arith.constant 1 : index
    %c0_13 = arith.constant 0 : index
    %22 = vector.load %arg3[%c1_12, %c0_13] : memref<6x128xf32, #tpu.memory_space<vmem>>, vector<1x128xf32>
    %c0_14 = arith.constant 0 : index
    %c0_15 = arith.constant 0 : index
    %c0_16 = arith.constant 0 : index
    %23 = vector.load %arg2[%c0_14, %c0_15, %c0_16] : memref<1x256x3xf32, #tpu.memory_space<vmem>>, vector<1x256x1xf32>
    %24 = vector.shape_cast %23 : vector<1x256x1xf32> to vector<256x1xf32>
    %c3 = arith.constant 3 : index
    %c0_17 = arith.constant 0 : index
    %25 = vector.load %arg3[%c3, %c0_17] : memref<6x128xf32, #tpu.memory_space<vmem>>, vector<1x128xf32>
    %26 = vector.broadcast %24 : vector<256x1xf32> to vector<256x128xf32>
    %27 = vector.broadcast %25 : vector<1x128xf32> to vector<256x128xf32>
    %28 = arith.mulf %26, %27 : vector<256x128xf32>
    %29 = vector.broadcast %22 : vector<1x128xf32> to vector<256x128xf32>
    %30 = arith.addf %29, %28 : vector<256x128xf32>
    %c0_18 = arith.constant 0 : index
    %c0_19 = arith.constant 0 : index
    %c1_20 = arith.constant 1 : index
    %31 = vector.load %arg2[%c0_18, %c0_19, %c1_20] : memref<1x256x3xf32, #tpu.memory_space<vmem>>, vector<1x256x1xf32>
    %32 = vector.shape_cast %31 : vector<1x256x1xf32> to vector<256x1xf32>
    %c5 = arith.constant 5 : index
    %c0_21 = arith.constant 0 : index
    %33 = vector.load %arg3[%c5, %c0_21] : memref<6x128xf32, #tpu.memory_space<vmem>>, vector<1x128xf32>
    %34 = vector.broadcast %32 : vector<256x1xf32> to vector<256x128xf32>
    %35 = vector.broadcast %33 : vector<1x128xf32> to vector<256x128xf32>
    %36 = arith.mulf %34, %35 : vector<256x128xf32>
    %37 = arith.addf %30, %36 : vector<256x128xf32>
    %38 = arith.mulf %37, %37 : vector<256x128xf32>
    %39 = arith.addf %21, %38 : vector<256x128xf32>
    %c0_22 = arith.constant 0 : index
    %c0_23 = arith.constant 0 : index
    %40 = vector.load %arg4[%c0_22, %c0_23] : memref<1x128xf32, #tpu.memory_space<vmem>>, vector<1x128xf32>
    %41 = math.sqrt %39 : vector<256x128xf32>
    %42 = vector.broadcast %40 : vector<1x128xf32> to vector<256x128xf32>
    %43 = arith.subf %42, %41 : vector<256x128xf32>
    %44 = arith.index_cast %arg0 : i32 to index
    %45 = memref.load %arg1[%44] : memref<2xi32, #tpu.memory_space<smem>>
    %c0_i32_24 = arith.constant 0 : i32
    %46 = arith.cmpi eq, %45, %c0_i32_24 : i32
    %47 = arith.extui %46 : i1 to i32
    %c0_i32_25 = arith.constant 0 : i32
    %48 = arith.cmpi ne, %47, %c0_i32_25 : i32
    scf.if %48 {
      %c0_27 = arith.constant 0 : index
      %c0_28 = arith.constant 0 : index
      %52 = vector.load %arg5[%c0_27, %c0_28] : memref<1x128xf32, #tpu.memory_space<vmem>>, vector<1x128xf32>
      %53 = math.exp %43 : vector<256x128xf32>
      %54 = vector.broadcast %4 : vector<256x1xf32> to vector<256x128xf32>
      %55 = arith.mulf %54, %53 : vector<256x128xf32>
      %cst = arith.constant dense<0.000000e+00> : vector<128xf32>
      %56 = vector.multi_reduction <add>, %55, %cst [0] : vector<256x128xf32> to vector<128xf32>
      %57 = vector.shape_cast %56 : vector<128xf32> to vector<1x128xf32>
      %58 = arith.addf %52, %57 : vector<1x128xf32>
      %c0_29 = arith.constant 0 : index
      %c0_30 = arith.constant 0 : index
      %59 = vector.load %arg5[%c0_29, %c0_30] : memref<1x128xf32, #tpu.memory_space<vmem>>, vector<1x128xf32>
      tpu.vector_store %arg5[%c0_29, %c0_30], %58 {strides = array<i32>} : memref<1x128xf32, #tpu.memory_space<vmem>>, vector<1x128xf32>,
    } else {
    }
    %c1_i32 = arith.constant 1 : i32
    %49 = arith.cmpi eq, %45, %c1_i32 : i32
    %50 = arith.extui %49 : i1 to i32
    %c0_i32_26 = arith.constant 0 : i32
    %51 = arith.cmpi ne, %50, %c0_i32_26 : i32
    scf.if %51 {
      %c0_27 = arith.constant 0 : index
      %c0_28 = arith.constant 0 : index
      %52 = vector.load %arg5[%c0_27, %c0_28] : memref<1x128xf32, #tpu.memory_space<vmem>>, vector<1x128xf32>
      %cst = arith.constant 0.000000e+00 : f32
      %53 = vector.broadcast %cst : f32 to vector<256x128xf32>
      %54 = arith.subf %53, %43 : vector<256x128xf32>
      %55 = vector.broadcast %4 : vector<256x1xf32> to vector<256x128xf32>
      %56 = arith.mulf %55, %54 : vector<256x128xf32>
      %cst_29 = arith.constant dense<0.000000e+00> : vector<128xf32>
      %57 = vector.multi_reduction <add>, %56, %cst_29 [0] : vector<256x128xf32> to vector<128xf32>
      %58 = vector.shape_cast %57 : vector<128xf32> to vector<1x128xf32>
      %59 = arith.addf %52, %58 : vector<1x128xf32>
      %c0_30 = arith.constant 0 : index
      %c0_31 = arith.constant 0 : index
      %60 = vector.load %arg5[%c0_30, %c0_31] : memref<1x128xf32, #tpu.memory_space<vmem>>, vector<1x128xf32>
      tpu.vector_store %arg5[%c0_30, %c0_31], %59 {strides = array<i32>} : memref<1x128xf32, #tpu.memory_space<vmem>>, vector<1x128xf32>,
    } else {
    }
    return
  }
  func.func @transform_0(%arg0: i32, %arg1: memref<2xi32, #tpu.memory_space<smem>>) -> (i32, i32, i32) {
    %c0_i32 = arith.constant 0 : i32
    %c0_i32_0 = arith.constant 0 : i32
    %c0_i32_1 = arith.constant 0 : i32
    return %arg0, %c0_i32, %c0_i32_0 : i32, i32, i32
  }
  func.func @transform_1(%arg0: i32, %arg1: memref<2xi32, #tpu.memory_space<smem>>) -> (i32, i32) {
    %c0_i32 = arith.constant 0 : i32
    %c0_i32_0 = arith.constant 0 : i32
    %c0_i32_1 = arith.constant 0 : i32
    return %c0_i32, %c0_i32_0 : i32, i32
  }
  func.func @transform_2(%arg0: i32, %arg1: memref<2xi32, #tpu.memory_space<smem>>) -> (i32, i32) {
    %c0_i32 = arith.constant 0 : i32
    %c0_i32_0 = arith.constant 0 : i32
    %c0_i32_1 = arith.constant 0 : i32
    return %c0_i32, %c0_i32_0 : i32, i32
  }
  func.func @transform_3(%arg0: i32, %arg1: memref<2xi32, #tpu.memory_space<smem>>) -> (i32, i32) {
    %c0_i32 = arith.constant 0 : i32
    %c0_i32_0 = arith.constant 0 : i32
    %c0_i32_1 = arith.constant 0 : i32
    return %c0_i32, %c0_i32_0 : i32, i32
  }
}

module attributes {stable_mosaic.version = 11 : i64} {
  func.func @_nhpp_kernel(%arg0: i32, %arg1: memref<2xi32, #tpu.memory_space<smem>>, %arg2: memref<1x256x3xf32, #tpu.memory_space<vmem>>, %arg3: memref<6x128xf32, #tpu.memory_space<vmem>>, %arg4: memref<1x128xf32, #tpu.memory_space<vmem>>, %arg5: memref<1x128xf32, #tpu.memory_space<vmem>>) attributes {dimension_semantics = [#tpu.dimension_semantics<arbitrary>], iteration_bounds = array<i64: 2>, scalar_prefetch = 1 : i64, scratch_operands = 0 : i64, tpu.core_type = #tpu.core_type<tc>, window_params = [{transform_indices = @transform_0, window_bounds = array<i64: 1, 256, 3>}, {pipeline_mode = #tpu.pipeline_mode<synchronous>, transform_indices = @transform_1, window_bounds = array<i64: 6, 128>}, {pipeline_mode = #tpu.pipeline_mode<synchronous>, transform_indices = @transform_2, window_bounds = array<i64: 1, 128>}, {pipeline_mode = #tpu.pipeline_mode<synchronous>, transform_indices = @transform_3, window_bounds = array<i64: 1, 128>}]} {
    %c0_i32 = arith.constant 0 : i32
    %0 = arith.cmpi eq, %arg0, %c0_i32 : i32
    %1 = arith.extui %0 : i1 to i32
    %c0_i32_0 = arith.constant 0 : i32
    %2 = arith.cmpi ne, %1, %c0_i32_0 : i32
    scf.if %2 {
      %cst = arith.constant 0.000000e+00 : f32
      %52 = vector.broadcast %cst : f32 to vector<1x128xf32>
      %c0_27 = arith.constant 0 : index
      %c0_28 = arith.constant 0 : index
      %53 = vector.load %arg5[%c0_27, %c0_28] : memref<1x128xf32, #tpu.memory_space<vmem>>, vector<1x128xf32>
      tpu.vector_store %arg5[%c0_27, %c0_28], %52 {strides = array<i32>} : memref<1x128xf32, #tpu.memory_space<vmem>>, vector<1x128xf32>,
    } else {
    }
    %c0 = arith.constant 0 : index
    %c0_1 = arith.constant 0 : index
    %c2 = arith.constant 2 : index
    %3 = vector.load %arg2[%c0, %c0_1, %c2] : memref<1x256x3xf32, #tpu.memory_space<vmem>>, vector<1x256x1xf32>
    %4 = vector.shape_cast %3 : vector<1x256x1xf32> to vector<256x1xf32>
    %c0_2 = arith.constant 0 : index
    %c0_3 = arith.constant 0 : index
    %5 = vector.load %arg3[%c0_2, %c0_3] : memref<6x128xf32, #tpu.memory_space<vmem>>, vector<1x128xf32>
    %c0_4 = arith.constant 0 : index
    %c0_5 = arith.constant 0 : index
    %c0_6 = arith.constant 0 : index
    %6 = vector.load %arg2[%c0_4, %c0_5, %c0_6] : memref<1x256x3xf32, #tpu.memory_space<vmem>>, vector<1x256x1xf32>
    %7 = vector.shape_cast %6 : vector<1x256x1xf32> to vector<256x1xf32>
    %c2_7 = arith.constant 2 : index
    %c0_8 = arith.constant 0 : index
    %8 = vector.load %arg3[%c2_7, %c0_8] : memref<6x128xf32, #tpu.memory_space<vmem>>, vector<1x128xf32>
    %9 = vector.broadcast %7 : vector<256x1xf32> to vector<256x128xf32>
    %10 = vector.broadcast %8 : vector<1x128xf32> to vector<256x128xf32>
    %11 = arith.mulf %9, %10 : vector<256x128xf32>
    %12 = vector.broadcast %5 : vector<1x128xf32> to vector<256x128xf32>
    %13 = arith.addf %12, %11 : vector<256x128xf32>
    %c0_9 = arith.constant 0 : index
    %c0_10 = arith.constant 0 : index
    %c1 = arith.constant 1 : index
    %14 = vector.load %arg2[%c0_9, %c0_10, %c1] : memref<1x256x3xf32, #tpu.memory_space<vmem>>, vector<1x256x1xf32>
    %15 = vector.shape_cast %14 : vector<1x256x1xf32> to vector<256x1xf32>
    %c4 = arith.constant 4 : index
    %c0_11 = arith.constant 0 : index
    %16 = vector.load %arg3[%c4, %c0_11] : memref<6x128xf32, #tpu.memory_space<vmem>>, vector<1x128xf32>
    %17 = vector.broadcast %15 : vector<256x1xf32> to vector<256x128xf32>
    %18 = vector.broadcast %16 : vector<1x128xf32> to vector<256x128xf32>
    %19 = arith.mulf %17, %18 : vector<256x128xf32>
    %20 = arith.addf %13, %19 : vector<256x128xf32>
    %21 = arith.mulf %20, %20 : vector<256x128xf32>
    %c1_12 = arith.constant 1 : index
    %c0_13 = arith.constant 0 : index
    %22 = vector.load %arg3[%c1_12, %c0_13] : memref<6x128xf32, #tpu.memory_space<vmem>>, vector<1x128xf32>
    %c0_14 = arith.constant 0 : index
    %c0_15 = arith.constant 0 : index
    %c0_16 = arith.constant 0 : index
    %23 = vector.load %arg2[%c0_14, %c0_15, %c0_16] : memref<1x256x3xf32, #tpu.memory_space<vmem>>, vector<1x256x1xf32>
    %24 = vector.shape_cast %23 : vector<1x256x1xf32> to vector<256x1xf32>
    %c3 = arith.constant 3 : index
    %c0_17 = arith.constant 0 : index
    %25 = vector.load %arg3[%c3, %c0_17] : memref<6x128xf32, #tpu.memory_space<vmem>>, vector<1x128xf32>
    %26 = vector.broadcast %24 : vector<256x1xf32> to vector<256x128xf32>
    %27 = vector.broadcast %25 : vector<1x128xf32> to vector<256x128xf32>
    %28 = arith.mulf %26, %27 : vector<256x128xf32>
    %29 = vector.broadcast %22 : vector<1x128xf32> to vector<256x128xf32>
    %30 = arith.addf %29, %28 : vector<256x128xf32>
    %c0_18 = arith.constant 0 : index
    %c0_19 = arith.constant 0 : index
    %c1_20 = arith.constant 1 : index
    %31 = vector.load %arg2[%c0_18, %c0_19, %c1_20] : memref<1x256x3xf32, #tpu.memory_space<vmem>>, vector<1x256x1xf32>
    %32 = vector.shape_cast %31 : vector<1x256x1xf32> to vector<256x1xf32>
    %c5 = arith.constant 5 : index
    %c0_21 = arith.constant 0 : index
    %33 = vector.load %arg3[%c5, %c0_21] : memref<6x128xf32, #tpu.memory_space<vmem>>, vector<1x128xf32>
    %34 = vector.broadcast %32 : vector<256x1xf32> to vector<256x128xf32>
    %35 = vector.broadcast %33 : vector<1x128xf32> to vector<256x128xf32>
    %36 = arith.mulf %34, %35 : vector<256x128xf32>
    %37 = arith.addf %30, %36 : vector<256x128xf32>
    %38 = arith.mulf %37, %37 : vector<256x128xf32>
    %39 = arith.addf %21, %38 : vector<256x128xf32>
    %c0_22 = arith.constant 0 : index
    %c0_23 = arith.constant 0 : index
    %40 = vector.load %arg4[%c0_22, %c0_23] : memref<1x128xf32, #tpu.memory_space<vmem>>, vector<1x128xf32>
    %41 = math.sqrt %39 : vector<256x128xf32>
    %42 = vector.broadcast %40 : vector<1x128xf32> to vector<256x128xf32>
    %43 = arith.subf %42, %41 : vector<256x128xf32>
    %44 = arith.index_cast %arg0 : i32 to index
    %45 = memref.load %arg1[%44] : memref<2xi32, #tpu.memory_space<smem>>
    %c0_i32_24 = arith.constant 0 : i32
    %46 = arith.cmpi eq, %45, %c0_i32_24 : i32
    %47 = arith.extui %46 : i1 to i32
    %c0_i32_25 = arith.constant 0 : i32
    %48 = arith.cmpi ne, %47, %c0_i32_25 : i32
    scf.if %48 {
      %c0_27 = arith.constant 0 : index
      %c0_28 = arith.constant 0 : index
      %52 = vector.load %arg5[%c0_27, %c0_28] : memref<1x128xf32, #tpu.memory_space<vmem>>, vector<1x128xf32>
      %53 = math.exp %43 : vector<256x128xf32>
      %54 = vector.broadcast %4 : vector<256x1xf32> to vector<256x128xf32>
      %55 = arith.mulf %54, %53 : vector<256x128xf32>
      %cst = arith.constant dense<0.000000e+00> : vector<128xf32>
      %56 = vector.multi_reduction <add>, %55, %cst [0] : vector<256x128xf32> to vector<128xf32>
      %57 = vector.shape_cast %56 : vector<128xf32> to vector<1x128xf32>
      %58 = arith.addf %52, %57 : vector<1x128xf32>
      %c0_29 = arith.constant 0 : index
      %c0_30 = arith.constant 0 : index
      %59 = vector.load %arg5[%c0_29, %c0_30] : memref<1x128xf32, #tpu.memory_space<vmem>>, vector<1x128xf32>
      tpu.vector_store %arg5[%c0_29, %c0_30], %58 {strides = array<i32>} : memref<1x128xf32, #tpu.memory_space<vmem>>, vector<1x128xf32>,
    } else {
    }
    %c1_i32 = arith.constant 1 : i32
    %49 = arith.cmpi eq, %45, %c1_i32 : i32
    %50 = arith.extui %49 : i1 to i32
    %c0_i32_26 = arith.constant 0 : i32
    %51 = arith.cmpi ne, %50, %c0_i32_26 : i32
    scf.if %51 {
      %c0_27 = arith.constant 0 : index
      %c0_28 = arith.constant 0 : index
      %52 = vector.load %arg5[%c0_27, %c0_28] : memref<1x128xf32, #tpu.memory_space<vmem>>, vector<1x128xf32>
      %cst = arith.constant 0.000000e+00 : f32
      %53 = vector.broadcast %cst : f32 to vector<256x128xf32>
      %54 = arith.subf %53, %43 : vector<256x128xf32>
      %55 = vector.broadcast %4 : vector<256x1xf32> to vector<256x128xf32>
      %56 = arith.mulf %55, %54 : vector<256x128xf32>
      %cst_29 = arith.constant dense<0.000000e+00> : vector<128xf32>
      %57 = vector.multi_reduction <add>, %56, %cst_29 [0] : vector<256x128xf32> to vector<128xf32>
      %58 = vector.shape_cast %57 : vector<128xf32> to vector<1x128xf32>
      %59 = arith.addf %52, %58 : vector<1x128xf32>
      %c0_30 = arith.constant 0 : index
      %c0_31 = arith.constant 0 : index
      %60 = vector.load %arg5[%c0_30, %c0_31] : memref<1x128xf32, #tpu.memory_space<vmem>>, vector<1x128xf32>
      tpu.vector_store %arg5[%c0_30, %c0_31], %59 {strides = array<i32>} : memref<1x128xf32, #tpu.memory_space<vmem>>, vector<1x128xf32>,
    } else {
    }
    return
  }
  func.func @transform_0(%arg0: i32, %arg1: memref<2xi32, #tpu.memory_space<smem>>) -> (i32, i32, i32) {
    %c0_i32 = arith.constant 0 : i32
    %c0_i32_0 = arith.constant 0 : i32
    %c0_i32_1 = arith.constant 0 : i32
    return %arg0, %c0_i32, %c0_i32_0 : i32, i32, i32
  }
  func.func @transform_1(%arg0: i32, %arg1: memref<2xi32, #tpu.memory_space<smem>>) -> (i32, i32) {
    %c0_i32 = arith.constant 0 : i32
    %c0_i32_0 = arith.constant 0 : i32
    %c0_i32_1 = arith.constant 0 : i32
    return %c0_i32, %c0_i32_0 : i32, i32
  }
  func.func @transform_2(%arg0: i32, %arg1: memref<2xi32, #tpu.memory_space<smem>>) -> (i32, i32) {
    %c0_i32 = arith.constant 0 : i32
    %c0_i32_0 = arith.constant 0 : i32
    %c0_i32_1 = arith.constant 0 : i32
    return %c0_i32, %c0_i32_0 : i32, i32
  }
  func.func @transform_3(%arg0: i32, %arg1: memref<2xi32, #tpu.memory_space<smem>>) -> (i32, i32) {
    %c0_i32 = arith.constant 0 : i32
    %c0_i32_0 = arith.constant 0 : i32
    %c0_i32_1 = arith.constant 0 : i32
    return %c0_i32, %c0_i32_0 : i32, i32
  }
}

</mosaic_0001>

<llo_original>
// kernel: tpu_custom_call.1
$region0: #{tpu_custom_call.1}
  #allocation0 [shape = 'u32[]', space=smem, size = 0x4, offset = 0x4, fixed_abs, tag = 'smem constant byte address 0x4 - core index']
  #allocation1 [shape = 'u32[72,128]{1,0:T(1,128)}', space=vmem, size = 0x9000, scoped, tag = 'internal scratch']
  #allocation2 [shape = 's32[1]{0}', space=sflag, size = 0x4, scoped, tag = 'scoped memory for tpu_custom_call.1']
  #allocation3 [shape = 'u8[512]{0}', space=smem, size = 0x200, scoped, tag = 'prefetched SMEM operand 0']
  %s0 = inlined_call_operand.vmem [shape: s32[2], index: 0, kind: input, shape index: {}]
  %s1 = inlined_call_operand.vmem [shape: f32[2,256,3], index: 1, kind: input, shape index: {}]
  %s2 = inlined_call_operand.vmem [shape: f32[6,128], index: 2, kind: input, shape index: {}]
  %s3 = inlined_call_operand.vmem [shape: f32[1,128], index: 3, kind: input, shape index: {}]
  %s4 = inlined_call_operand.hbm [shape: f32[1,128], index: 4, kind: output, shape index: {}]
  %s5 = sld [smem:[#allocation0]]
  $region57: #{tpu_custom_call.1} parent=0
    _
  %s7 = ssub.s32 1, %s5
  %s8 = scalar_select 0, %s7, %s5
  %s10 = sshll.u32 %s0, 4
  %s11 = int_to_ptr.vmem [resolvable:$true] %s10
  %13 = dma.vmem_to_smem %s11, 16, [#allocation3], [#allocation2]
  %15 = dma.done [#allocation2], 16
  %16 = sfence
  $region1: #{tpu_custom_call.1} parent=0
    #allocation4 [shape = 'u8[512]{0}', space=vmem, size = 0x400, scoped, tag = 'output window, operand 0, single buffered']
    #allocation5 [shape = 's32[2]{0}', space=sflag, size = 0x8, scoped, tag = 'scoped memory for tpu_custom_call.1']
    %17 = vsyncpa [#allocation5], 0
    loop: start=0, step=1, limit=4
    $region2: #{tpu_custom_call.1} parent=1 // loop_pre_header
      _
    $region3: #{tpu_custom_call.1} parent=1 // loop_header
      %s19 = sphi 0, %s23
      %p20 = scmp.ge.s32.totalorder %s19, 4
      %s29 = sphi 0, %s31
      %s32 = sphi 0, %s29
      %s33 = sphi 0, %s32
      %s49 = sphi 0, %s33
      %s53 = sphi 0, %s53
      %s55 = sphi 0, %s53
      %s56 = sphi 0, %s55
      %s70 = sphi 0, %s56
      %s74 = sphi 0, %s74
      %s76 = sphi 0, %s74
      %s77 = sphi 0, %s76
      %s91 = sphi 0, %s77
      %s95 = sphi 0, %s95
      %s97 = sphi 0, %s95
      %s98 = sphi 0, %s97
      %s112 = sphi 0, %s98
    $region4: #{tpu_custom_call.1} parent=1 // loop_header_branch
      %22 = sbr.rel (%p20) target = $region8
    $region5: #{tpu_custom_call.1} parent=1 // loop_body
      %s24 = ssub.s32 %s19, 1
      %s25 = ssub.s32 %s19, 2
      %s26 = sadd.s32 %s19, 1
      %s27 = ssub.s32 %s19, %s26
      %p28 = scmp.eq.s32.totalorder %s27, 0
      %s30 = sadd.s32 %s29, 1
      %s31 = scalar_select %p28, %s29, %s30
      %p34 = pneg %p28
      %p35 = scmp.eq.s32.totalorder %s19, 1
      %p36 = por %p34, %p35
      %p37 = scmp.ne.s32.totalorder %s29, %s32
      %p38 = scmp.eq.s32.totalorder %s19, 0
      %p39 = por %p37, %p38
      %p40 = scmp.ne.s32.totalorder %s29, %s32
      %p41 = scmp.eq.s32.totalorder %s24, 1
      %p42 = por %p40, %p41
      %p43 = scmp.ne.s32.totalorder %s32, %s33
      %p44 = scmp.eq.s32.totalorder %s24, 0
      %p45 = por %p43, %p44
      %p46 = scmp.ne.s32.totalorder %s32, %s33
      %p47 = scmp.eq.s32.totalorder %s25, 1
      %p48 = por %p46, %p47
      %p50 = scmp.ne.s32.totalorder %s33, %s49
      %p51 = scmp.eq.s32.totalorder %s25, 0
      %p52 = por %p50, %p51
      %s54 = sadd.s32 %s53, 1
      %p57 = scmp.eq.s32.totalorder %s19, 1
      %p58 = scmp.ne.s32.totalorder %s53, %s55
      %p59 = scmp.eq.s32.totalorder %s19, 0
      %p60 = por %p58, %p59
      %p61 = scmp.ne.s32.totalorder %s53, %s55
      %p62 = scmp.eq.s32.totalorder %s24, 1
      %p63 = por %p61, %p62
      %p64 = scmp.ne.s32.totalorder %s55, %s56
      %p65 = scmp.eq.s32.totalorder %s24, 0
      %p66 = por %p64, %p65
      %p67 = scmp.ne.s32.totalorder %s55, %s56
      %p68 = scmp.eq.s32.totalorder %s25, 1
      %p69 = por %p67, %p68
      %p71 = scmp.ne.s32.totalorder %s56, %s70
      %p72 = scmp.eq.s32.totalorder %s25, 0
      %p73 = por %p71, %p72
      %s75 = sadd.s32 %s74, 1
      %p78 = scmp.eq.s32.totalorder %s19, 1
      %p79 = scmp.ne.s32.totalorder %s74, %s76
      %p80 = scmp.eq.s32.totalorder %s19, 0
      %p81 = por %p79, %p80
      %p82 = scmp.ne.s32.totalorder %s74, %s76
      %p83 = scmp.eq.s32.totalorder %s24, 1
      %p84 = por %p82, %p83
      %p85 = scmp.ne.s32.totalorder %s76, %s77
      %p86 = scmp.eq.s32.totalorder %s24, 0
      %p87 = por %p85, %p86
      %p88 = scmp.ne.s32.totalorder %s76, %s77
      %p89 = scmp.eq.s32.totalorder %s25, 1
      %p90 = por %p88, %p89
      %p92 = scmp.ne.s32.totalorder %s77, %s91
      %p93 = scmp.eq.s32.totalorder %s25, 0
      %p94 = por %p92, %p93
      %s96 = sadd.s32 %s95, 1
      %p99 = scmp.eq.s32.totalorder %s19, 1
      %p100 = scmp.ne.s32.totalorder %s95, %s97
      %p101 = scmp.eq.s32.totalorder %s19, 0
      %p102 = por %p100, %p101
      %p103 = scmp.ne.s32.totalorder %s95, %s97
      %p104 = scmp.eq.s32.totalorder %s24, 1
      %p105 = por %p103, %p104
      %p106 = scmp.ne.s32.totalorder %s97, %s98
      %p107 = scmp.eq.s32.totalorder %s24, 0
      %p108 = por %p106, %p107
      %p109 = scmp.ne.s32.totalorder %s97, %s98
      %p110 = scmp.eq.s32.totalorder %s25, 1
      %p111 = por %p109, %p110
      %p113 = scmp.ne.s32.totalorder %s98, %s112
      %p114 = scmp.eq.s32.totalorder %s25, 0
      %p115 = por %p113, %p114
      %p116 = scmp.le.s32.totalorder 1, %s19
      %p117 = scmp.lt.s32.totalorder %s19, 3
      %p118 = pnand %p116, %p117
      %p119 = pneg %p118
      // Predicated region
      $region9: #{tpu_custom_call.1} parent=5 // pred_check
        _
      $region10: #{tpu_custom_call.1} parent=5 // pred_check_branch
        %121 = sbr.rel (%p118) target = $region12
      $region11: #{tpu_custom_call.1} parent=5 // pred_region
        %s122 = ssub.s32 %s19, 1
        // Predicated region
        $region13: #{tpu_custom_call.1} parent=11 // pred_check
          %p123 = pneg %p66
        $region14: #{tpu_custom_call.1} parent=11 // pred_check_branch
          %125 = sbr.rel (%p123) target = $region16
        $region15: #{tpu_custom_call.1} parent=11 // pred_region
          _
        $region16: #{tpu_custom_call.1} parent=11 // pred_fallthru
          _
        // Predicated region
        $region17: #{tpu_custom_call.1} parent=11 // pred_check
          %p126 = pneg %p87
        $region18: #{tpu_custom_call.1} parent=11 // pred_check_branch
          %128 = sbr.rel (%p126) target = $region20
        $region19: #{tpu_custom_call.1} parent=11 // pred_region
          _
        $region20: #{tpu_custom_call.1} parent=11 // pred_fallthru
          _
      $region12: #{tpu_custom_call.1} parent=5 // pred_fallthru
        _
      %p129 = scmp.lt.s32.totalorder %s19, 2
      // Predicated region
      $region21: #{tpu_custom_call.1} parent=5 // pred_check
        %p130 = pneg %p129
      $region22: #{tpu_custom_call.1} parent=5 // pred_check_branch
        %132 = sbr.rel (%p130) target = $region24
      $region23: #{tpu_custom_call.1} parent=5 // pred_region
        // Predicated region
        $region25: #{tpu_custom_call.1} parent=23 // pred_check
          %p133 = pneg %p39
        $region26: #{tpu_custom_call.1} parent=23 // pred_check_branch
          %135 = sbr.rel (%p133) target = $region28
        $region27: #{tpu_custom_call.1} parent=23 // pred_region
          %p136 = scmp.lt.s32.totalorder %s19, 1
          %s137 = scalar_select %p136, %s19, 1
          %s138 = smul.addr %s137, 32
          %s139 = smul.addr %s138, 8
          %s140 = scalar_lea.vmem %s1, %s139
        $region28: #{tpu_custom_call.1} parent=23 // pred_fallthru
          _
      $region24: #{tpu_custom_call.1} parent=5 // pred_fallthru
        _
      %p141 = scmp.le.s32.totalorder 1, %s19
      %p142 = scmp.lt.s32.totalorder %s19, 3
      %p143 = pnand %p141, %p142
      %p144 = pneg %p143
      // Predicated region
      $region29: #{tpu_custom_call.1} parent=5 // pred_check
        _
      $region30: #{tpu_custom_call.1} parent=5 // pred_check_branch
        %146 = sbr.rel (%p143) target = $region32
      $region31: #{tpu_custom_call.1} parent=5 // pred_region
        %s147 = ssub.s32 %s19, 1
        %p148 = scmp.lt.s32.totalorder %s24, 1
        %s149 = scalar_select %p148, %s24, 1
        %s150 = smul.addr %s149, 32
        %s151 = smul.addr %s150, 8
        %s152 = scalar_lea.vmem %s1, %s151
        %p153 = pneg %p45
        %p154 = pneg %p42
        %p155 = pneg %p66
        %p156 = pneg %p63
        %p157 = pneg %p87
        %p158 = pneg %p84
        %p159 = pneg %p108
        %p160 = pneg %p105
        %p161 = scmp.lt.s32.totalorder %s24, 1
        %s162 = scalar_select %p161, %s24, 1
        %s163 = smul.addr %s162, 32
        %s164 = smul.addr %s163, 8
        %s165 = scalar_lea.vmem %s1, %s164
        %p166 = scmp.eq.s32.totalorder %s24, 0
        // Predicated region
        $region33: #{tpu_custom_call.1} parent=31 // pred_check
          %p167 = pneg %p166
        $region34: #{tpu_custom_call.1} parent=31 // pred_check_branch
          %169 = sbr.rel (%p167) target = $region36
        $region35: #{tpu_custom_call.1} parent=31 // pred_region
          %170 = vst [vmem:[#allocation4] sm:$0x1] 0.0
        $region36: #{tpu_custom_call.1} parent=31 // pred_fallthru
          _
        %v171 = vld [vmem:[%s165] sm:$0xff]
        %v172 = vld [vmem:[%s165 + $0x8] sm:$0xff]
        %v173 = vld [vmem:[%s165 + $0x10] sm:$0xff]
        %v174 = vld [vmem:[%s165 + $0x18] sm:$0xff]
        %v175 = vld [vmem:[%s165 + $0x20] sm:$0xff]
        %v176 = vld [vmem:[%s165 + $0x28] sm:$0xff]
        %v177 = vld [vmem:[%s165 + $0x30] sm:$0xff]
        %v178 = vld [vmem:[%s165 + $0x38] sm:$0xff]
        %v179 = vld [vmem:[%s165 + $0x40] sm:$0xff]
        %v180 = vld [vmem:[%s165 + $0x48] sm:$0xff]
        %v181 = vld [vmem:[%s165 + $0x50] sm:$0xff]
        %v182 = vld [vmem:[%s165 + $0x58] sm:$0xff]
        %v183 = vld [vmem:[%s165 + $0x60] sm:$0xff]
        %v184 = vld [vmem:[%s165 + $0x68] sm:$0xff]
        %v185 = vld [vmem:[%s165 + $0x70] sm:$0xff]
        %v186 = vld [vmem:[%s165 + $0x78] sm:$0xff]
        %v187 = vld [vmem:[%s165 + $0x80] sm:$0xff]
        %v188 = vld [vmem:[%s165 + $0x88] sm:$0xff]
        %v189 = vld [vmem:[%s165 + $0x90] sm:$0xff]
        %v190 = vld [vmem:[%s165 + $0x98] sm:$0xff]
        %v191 = vld [vmem:[%s165 + $0xa0] sm:$0xff]
        %v192 = vld [vmem:[%s165 + $0xa8] sm:$0xff]
        %v193 = vld [vmem:[%s165 + $0xb0] sm:$0xff]
        %v194 = vld [vmem:[%s165 + $0xb8] sm:$0xff]
        %v195 = vld [vmem:[%s165 + $0xc0] sm:$0xff]
        %v196 = vld [vmem:[%s165 + $0xc8] sm:$0xff]
        %v197 = vld [vmem:[%s165 + $0xd0] sm:$0xff]
        %v198 = vld [vmem:[%s165 + $0xd8] sm:$0xff]
        %v199 = vld [vmem:[%s165 + $0xe0] sm:$0xff]
        %v200 = vld [vmem:[%s165 + $0xe8] sm:$0xff]
        %v201 = vld [vmem:[%s165 + $0xf0] sm:$0xff]
        %v202 = vld [vmem:[%s165 + $0xf8] sm:$0xff]
        %v203 = vld [vmem:[%s2] sm:$0x1]
        %v204 = vld [vmem:[%s2 + $0x2] sm:$0x1]
        %206 = vset.pattern.permute.xlu0 0
        %207 = vperm.xlu0 %206, %v171
        %v208 = vpop.permute.xlu0 %207
        %211 = vset.pattern.permute.xlu0 0
        %212 = vperm.xlu0 %211, %v172
        %v213 = vpop.permute.xlu0 %212
        %216 = vset.pattern.permute.xlu0 0
        %217 = vperm.xlu0 %216, %v173
        %v218 = vpop.permute.xlu0 %217
        %221 = vset.pattern.permute.xlu0 0
        %222 = vperm.xlu0 %221, %v174
        %v223 = vpop.permute.xlu0 %222
        %226 = vset.pattern.permute.xlu0 0
        %227 = vperm.xlu0 %226, %v175
        %v228 = vpop.permute.xlu0 %227
        %231 = vset.pattern.permute.xlu0 0
        %232 = vperm.xlu0 %231, %v176
        %v233 = vpop.permute.xlu0 %232
        %236 = vset.pattern.permute.xlu0 0
        %237 = vperm.xlu0 %236, %v177
        %v238 = vpop.permute.xlu0 %237
        %241 = vset.pattern.permute.xlu0 0
        %242 = vperm.xlu0 %241, %v178
        %v243 = vpop.permute.xlu0 %242
        %246 = vset.pattern.permute.xlu0 0
        %247 = vperm.xlu0 %246, %v179
        %v248 = vpop.permute.xlu0 %247
        %251 = vset.pattern.permute.xlu0 0
        %252 = vperm.xlu0 %251, %v180
        %v253 = vpop.permute.xlu0 %252
        %256 = vset.pattern.permute.xlu0 0
        %257 = vperm.xlu0 %256, %v181
        %v258 = vpop.permute.xlu0 %257
        %261 = vset.pattern.permute.xlu0 0
        %262 = vperm.xlu0 %261, %v182
        %v263 = vpop.permute.xlu0 %262
        %266 = vset.pattern.permute.xlu0 0
        %267 = vperm.xlu0 %266, %v183
        %v268 = vpop.permute.xlu0 %267
        %271 = vset.pattern.permute.xlu0 0
        %272 = vperm.xlu0 %271, %v184
        %v273 = vpop.permute.xlu0 %272
        %276 = vset.pattern.permute.xlu0 0
        %277 = vperm.xlu0 %276, %v185
        %v278 = vpop.permute.xlu0 %277
        %281 = vset.pattern.permute.xlu0 0
        %282 = vperm.xlu0 %281, %v186
        %v283 = vpop.permute.xlu0 %282
        %286 = vset.pattern.permute.xlu0 0
        %287 = vperm.xlu0 %286, %v187
        %v288 = vpop.permute.xlu0 %287
        %291 = vset.pattern.permute.xlu0 0
        %292 = vperm.xlu0 %291, %v188
        %v293 = vpop.permute.xlu0 %292
        %296 = vset.pattern.permute.xlu0 0
        %297 = vperm.xlu0 %296, %v189
        %v298 = vpop.permute.xlu0 %297
        %301 = vset.pattern.permute.xlu0 0
        %302 = vperm.xlu0 %301, %v190
        %v303 = vpop.permute.xlu0 %302
        %306 = vset.pattern.permute.xlu0 0
        %307 = vperm.xlu0 %306, %v191
        %v308 = vpop.permute.xlu0 %307
        %311 = vset.pattern.permute.xlu0 0
        %312 = vperm.xlu0 %311, %v192
        %v313 = vpop.permute.xlu0 %312
        %316 = vset.pattern.permute.xlu0 0
        %317 = vperm.xlu0 %316, %v193
        %v318 = vpop.permute.xlu0 %317
        %321 = vset.pattern.permute.xlu0 0
        %322 = vperm.xlu0 %321, %v194
        %v323 = vpop.permute.xlu0 %322
        %326 = vset.pattern.permute.xlu0 0
        %327 = vperm.xlu0 %326, %v195
        %v328 = vpop.permute.xlu0 %327
        %331 = vset.pattern.permute.xlu0 0
        %332 = vperm.xlu0 %331, %v196
        %v333 = vpop.permute.xlu0 %332
        %336 = vset.pattern.permute.xlu0 0
        %337 = vperm.xlu0 %336, %v197
        %v338 = vpop.permute.xlu0 %337
        %341 = vset.pattern.permute.xlu0 0
        %342 = vperm.xlu0 %341, %v198
        %v343 = vpop.permute.xlu0 %342
        %346 = vset.pattern.permute.xlu0 0
        %347 = vperm.xlu0 %346, %v199
        %v348 = vpop.permute.xlu0 %347
        %351 = vset.pattern.permute.xlu0 0
        %352 = vperm.xlu0 %351, %v200
        %v353 = vpop.permute.xlu0 %352
        %356 = vset.pattern.permute.xlu0 0
        %357 = vperm.xlu0 %356, %v201
        %v358 = vpop.permute.xlu0 %357
        %361 = vset.pattern.permute.xlu0 0
        %362 = vperm.xlu0 %361, %v202
        %v363 = vpop.permute.xlu0 %362
        %v365 = vperm.slane %v204, 0
        %v366 = vmul.f32 %v208, %v365
        %v367 = vmul.f32 %v213, %v365
        %v368 = vmul.f32 %v218, %v365
        %v369 = vmul.f32 %v223, %v365
        %v370 = vmul.f32 %v228, %v365
        %v371 = vmul.f32 %v233, %v365
        %v372 = vmul.f32 %v238, %v365
        %v373 = vmul.f32 %v243, %v365
        %v374 = vmul.f32 %v248, %v365
        %v375 = vmul.f32 %v253, %v365
        %v376 = vmul.f32 %v258, %v365
        %v377 = vmul.f32 %v263, %v365
        %v378 = vmul.f32 %v268, %v365
        %v379 = vmul.f32 %v273, %v365
        %v380 = vmul.f32 %v278, %v365
        %v381 = vmul.f32 %v283, %v365
        %v382 = vmul.f32 %v288, %v365
        %v383 = vmul.f32 %v293, %v365
        %v384 = vmul.f32 %v298, %v365
        %v385 = vmul.f32 %v303, %v365
        %v386 = vmul.f32 %v308, %v365
        %v387 = vmul.f32 %v313, %v365
        %v388 = vmul.f32 %v318, %v365
        %v389 = vmul.f32 %v323, %v365
        %v390 = vmul.f32 %v328, %v365
        %v391 = vmul.f32 %v333, %v365
        %v392 = vmul.f32 %v338, %v365
        %v393 = vmul.f32 %v343, %v365
        %v394 = vmul.f32 %v348, %v365
        %v395 = vmul.f32 %v353, %v365
        %v396 = vmul.f32 %v358, %v365
        %v397 = vmul.f32 %v363, %v365
        %v398 = vperm.slane %v203, 0
        %v399 = vadd.f32 %v398, %v366
        %v400 = vadd.f32 %v398, %v367
        %v401 = vadd.f32 %v398, %v368
        %v402 = vadd.f32 %v398, %v369
        %v403 = vadd.f32 %v398, %v370
        %v404 = vadd.f32 %v398, %v371
        %v405 = vadd.f32 %v398, %v372
        %v406 = vadd.f32 %v398, %v373
        %v407 = vadd.f32 %v398, %v374
        %v408 = vadd.f32 %v398, %v375
        %v409 = vadd.f32 %v398, %v376
        %v410 = vadd.f32 %v398, %v377
        %v411 = vadd.f32 %v398, %v378
        %v412 = vadd.f32 %v398, %v379
        %v413 = vadd.f32 %v398, %v380
        %v414 = vadd.f32 %v398, %v381
        %v415 = vadd.f32 %v398, %v382
        %v416 = vadd.f32 %v398, %v383
        %v417 = vadd.f32 %v398, %v384
        %v418 = vadd.f32 %v398, %v385
        %v419 = vadd.f32 %v398, %v386
        %v420 = vadd.f32 %v398, %v387
        %v421 = vadd.f32 %v398, %v388
        %v422 = vadd.f32 %v398, %v389
        %v423 = vadd.f32 %v398, %v390
        %v424 = vadd.f32 %v398, %v391
        %v425 = vadd.f32 %v398, %v392
        %v426 = vadd.f32 %v398, %v393
        %v427 = vadd.f32 %v398, %v394
        %v428 = vadd.f32 %v398, %v395
        %v429 = vadd.f32 %v398, %v396
        %v430 = vadd.f32 %v398, %v397
        %v431 = vld [vmem:[%s2 + $0x4] sm:$0x1]
        %432 = vset.pattern.permute.xlu0 1
        %433 = vperm.xlu0 %432, %v171
        %v434 = vpop.permute.xlu0 %433
        %436 = vset.pattern.permute.xlu0 1
        %437 = vperm.xlu0 %436, %v172
        %v438 = vpop.permute.xlu0 %437
        %440 = vset.pattern.permute.xlu0 1
        %441 = vperm.xlu0 %440, %v173
        %v442 = vpop.permute.xlu0 %441
        %444 = vset.pattern.permute.xlu0 1
        %445 = vperm.xlu0 %444, %v174
        %v446 = vpop.permute.xlu0 %445
        %448 = vset.pattern.permute.xlu0 1
        %449 = vperm.xlu0 %448, %v175
        %v450 = vpop.permute.xlu0 %449
        %452 = vset.pattern.permute.xlu0 1
        %453 = vperm.xlu0 %452, %v176
        %v454 = vpop.permute.xlu0 %453
        %456 = vset.pattern.permute.xlu0 1
        %457 = vperm.xlu0 %456, %v177
        %v458 = vpop.permute.xlu0 %457
        %460 = vset.pattern.permute.xlu0 1
        %461 = vperm.xlu0 %460, %v178
        %v462 = vpop.permute.xlu0 %461
        %464 = vset.pattern.permute.xlu0 1
        %465 = vperm.xlu0 %464, %v179
        %v466 = vpop.permute.xlu0 %465
        %468 = vset.pattern.permute.xlu0 1
        %469 = vperm.xlu0 %468, %v180
        %v470 = vpop.permute.xlu0 %469
        %472 = vset.pattern.permute.xlu0 1
        %473 = vperm.xlu0 %472, %v181
        %v474 = vpop.permute.xlu0 %473
        %476 = vset.pattern.permute.xlu0 1
        %477 = vperm.xlu0 %476, %v182
        %v478 = vpop.permute.xlu0 %477
        %480 = vset.pattern.permute.xlu0 1
        %481 = vperm.xlu0 %480, %v183
        %v482 = vpop.permute.xlu0 %481
        %484 = vset.pattern.permute.xlu0 1
        %485 = vperm.xlu0 %484, %v184
        %v486 = vpop.permute.xlu0 %485
        %488 = vset.pattern.permute.xlu0 1
        %489 = vperm.xlu0 %488, %v185
        %v490 = vpop.permute.xlu0 %489
        %492 = vset.pattern.permute.xlu0 1
        %493 = vperm.xlu0 %492, %v186
        %v494 = vpop.permute.xlu0 %493
        %496 = vset.pattern.permute.xlu0 1
        %497 = vperm.xlu0 %496, %v187
        %v498 = vpop.permute.xlu0 %497
        %500 = vset.pattern.permute.xlu0 1
        %501 = vperm.xlu0 %500, %v188
        %v502 = vpop.permute.xlu0 %501
        %504 = vset.pattern.permute.xlu0 1
        %505 = vperm.xlu0 %504, %v189
        %v506 = vpop.permute.xlu0 %505
        %508 = vset.pattern.permute.xlu0 1
        %509 = vperm.xlu0 %508, %v190
        %v510 = vpop.permute.xlu0 %509
        %512 = vset.pattern.permute.xlu0 1
        %513 = vperm.xlu0 %512, %v191
        %v514 = vpop.permute.xlu0 %513
        %516 = vset.pattern.permute.xlu0 1
        %517 = vperm.xlu0 %516, %v192
        %v518 = vpop.permute.xlu0 %517
        %520 = vset.pattern.permute.xlu0 1
        %521 = vperm.xlu0 %520, %v193
        %v522 = vpop.permute.xlu0 %521
        %524 = vset.pattern.permute.xlu0 1
        %525 = vperm.xlu0 %524, %v194
        %v526 = vpop.permute.xlu0 %525
        %528 = vset.pattern.permute.xlu0 1
        %529 = vperm.xlu0 %528, %v195
        %v530 = vpop.permute.xlu0 %529
        %532 = vset.pattern.permute.xlu0 1
        %533 = vperm.xlu0 %532, %v196
        %v534 = vpop.permute.xlu0 %533
        %536 = vset.pattern.permute.xlu0 1
        %537 = vperm.xlu0 %536, %v197
        %v538 = vpop.permute.xlu0 %537
        %540 = vset.pattern.permute.xlu0 1
        %541 = vperm.xlu0 %540, %v198
        %v542 = vpop.permute.xlu0 %541
        %544 = vset.pattern.permute.xlu0 1
        %545 = vperm.xlu0 %544, %v199
        %v546 = vpop.permute.xlu0 %545
        %548 = vset.pattern.permute.xlu0 1
        %549 = vperm.xlu0 %548, %v200
        %v550 = vpop.permute.xlu0 %549
        %552 = vset.pattern.permute.xlu0 1
        %553 = vperm.xlu0 %552, %v201
        %v554 = vpop.permute.xlu0 %553
        %556 = vset.pattern.permute.xlu0 1
        %557 = vperm.xlu0 %556, %v202
        %v558 = vpop.permute.xlu0 %557
        %v560 = vperm.slane %v431, 0
        %v561 = vmul.f32 %v434, %v560
        %v562 = vmul.f32 %v438, %v560
        %v563 = vmul.f32 %v442, %v560
        %v564 = vmul.f32 %v446, %v560
        %v565 = vmul.f32 %v450, %v560
        %v566 = vmul.f32 %v454, %v560
        %v567 = vmul.f32 %v458, %v560
        %v568 = vmul.f32 %v462, %v560
        %v569 = vmul.f32 %v466, %v560
        %v570 = vmul.f32 %v470, %v560
        %v571 = vmul.f32 %v474, %v560
        %v572 = vmul.f32 %v478, %v560
        %v573 = vmul.f32 %v482, %v560
        %v574 = vmul.f32 %v486, %v560
        %v575 = vmul.f32 %v490, %v560
        %v576 = vmul.f32 %v494, %v560
        %v577 = vmul.f32 %v498, %v560
        %v578 = vmul.f32 %v502, %v560
        %v579 = vmul.f32 %v506, %v560
        %v580 = vmul.f32 %v510, %v560
        %v581 = vmul.f32 %v514, %v560
        %v582 = vmul.f32 %v518, %v560
        %v583 = vmul.f32 %v522, %v560
        %v584 = vmul.f32 %v526, %v560
        %v585 = vmul.f32 %v530, %v560
        %v586 = vmul.f32 %v534, %v560
        %v587 = vmul.f32 %v538, %v560
        %v588 = vmul.f32 %v542, %v560
        %v589 = vmul.f32 %v546, %v560
        %v590 = vmul.f32 %v550, %v560
        %v591 = vmul.f32 %v554, %v560
        %v592 = vmul.f32 %v558, %v560
        %v593 = vadd.f32 %v399, %v561
        %v594 = vadd.f32 %v400, %v562
        %v595 = vadd.f32 %v401, %v563
        %v596 = vadd.f32 %v402, %v564
        %v597 = vadd.f32 %v403, %v565
        %v598 = vadd.f32 %v404, %v566
        %v599 = vadd.f32 %v405, %v567
        %v600 = vadd.f32 %v406, %v568
        %v601 = vadd.f32 %v407, %v569
        %v602 = vadd.f32 %v408, %v570
        %v603 = vadd.f32 %v409, %v571
        %v604 = vadd.f32 %v410, %v572
        %v605 = vadd.f32 %v411, %v573
        %v606 = vadd.f32 %v412, %v574
        %v607 = vadd.f32 %v413, %v575
        %v608 = vadd.f32 %v414, %v576
        %v609 = vadd.f32 %v415, %v577
        %v610 = vadd.f32 %v416, %v578
        %v611 = vadd.f32 %v417, %v579
        %v612 = vadd.f32 %v418, %v580
        %v613 = vadd.f32 %v419, %v581
        %v614 = vadd.f32 %v420, %v582
        %v615 = vadd.f32 %v421, %v583
        %v616 = vadd.f32 %v422, %v584
        %v617 = vadd.f32 %v423, %v585
        %v618 = vadd.f32 %v424, %v586
        %v619 = vadd.f32 %v425, %v587
        %v620 = vadd.f32 %v426, %v588
        %v621 = vadd.f32 %v427, %v589
        %v622 = vadd.f32 %v428, %v590
        %v623 = vadd.f32 %v429, %v591
        %v624 = vadd.f32 %v430, %v592
        %v625 = vmul.f32 %v593, %v593
        %v626 = vmul.f32 %v594, %v594
        %v627 = vmul.f32 %v595, %v595
        %v628 = vmul.f32 %v596, %v596
        %v629 = vmul.f32 %v597, %v597
        %v630 = vmul.f32 %v598, %v598
        %v631 = vmul.f32 %v599, %v599
        %v632 = vmul.f32 %v600, %v600
        %v633 = vmul.f32 %v601, %v601
        %v634 = vmul.f32 %v602, %v602
        %v635 = vmul.f32 %v603, %v603
        %v636 = vmul.f32 %v604, %v604
        %v637 = vmul.f32 %v605, %v605
        %v638 = vmul.f32 %v606, %v606
        %v639 = vmul.f32 %v607, %v607
        %v640 = vmul.f32 %v608, %v608
        %v641 = vmul.f32 %v609, %v609
        %v642 = vmul.f32 %v610, %v610
        %v643 = vmul.f32 %v611, %v611
        %v644 = vmul.f32 %v612, %v612
        %v645 = vmul.f32 %v613, %v613
        %v646 = vmul.f32 %v614, %v614
        %v647 = vmul.f32 %v615, %v615
        %v648 = vmul.f32 %v616, %v616
        %v649 = vmul.f32 %v617, %v617
        %v650 = vmul.f32 %v618, %v618
        %v651 = vmul.f32 %v619, %v619
        %v652 = vmul.f32 %v620, %v620
        %v653 = vmul.f32 %v621, %v621
        %v654 = vmul.f32 %v622, %v622
        %v655 = vmul.f32 %v623, %v623
        %v656 = vmul.f32 %v624, %v624
        %v657 = vld [vmem:[%s2 + $0x1] sm:$0x1]
        %v658 = vld [vmem:[%s2 + $0x3] sm:$0x1]
        %v659 = vperm.slane %v658, 0
        %v660 = vmul.f32 %v208, %v659
        %v661 = vmul.f32 %v213, %v659
        %v662 = vmul.f32 %v218, %v659
        %v663 = vmul.f32 %v223, %v659
        %v664 = vmul.f32 %v228, %v659
        %v665 = vmul.f32 %v233, %v659
        %v666 = vmul.f32 %v238, %v659
        %v667 = vmul.f32 %v243, %v659
        %v668 = vmul.f32 %v248, %v659
        %v669 = vmul.f32 %v253, %v659
        %v670 = vmul.f32 %v258, %v659
        %v671 = vmul.f32 %v263, %v659
        %v672 = vmul.f32 %v268, %v659
        %v673 = vmul.f32 %v273, %v659
        %v674 = vmul.f32 %v278, %v659
        %v675 = vmul.f32 %v283, %v659
        %v676 = vmul.f32 %v288, %v659
        %v677 = vmul.f32 %v293, %v659
        %v678 = vmul.f32 %v298, %v659
        %v679 = vmul.f32 %v303, %v659
        %v680 = vmul.f32 %v308, %v659
        %v681 = vmul.f32 %v313, %v659
        %v682 = vmul.f32 %v318, %v659
        %v683 = vmul.f32 %v323, %v659
        %v684 = vmul.f32 %v328, %v659
        %v685 = vmul.f32 %v333, %v659
        %v686 = vmul.f32 %v338, %v659
        %v687 = vmul.f32 %v343, %v659
        %v688 = vmul.f32 %v348, %v659
        %v689 = vmul.f32 %v353, %v659
        %v690 = vmul.f32 %v358, %v659
        %v691 = vmul.f32 %v363, %v659
        %v692 = vperm.slane %v657, 0
        %v693 = vadd.f32 %v692, %v660
        %v694 = vadd.f32 %v692, %v661
        %v695 = vadd.f32 %v692, %v662
        %v696 = vadd.f32 %v692, %v663
        %v697 = vadd.f32 %v692, %v664
        %v698 = vadd.f32 %v692, %v665
        %v699 = vadd.f32 %v692, %v666
        %v700 = vadd.f32 %v692, %v667
        %v701 = vadd.f32 %v692, %v668
        %v702 = vadd.f32 %v692, %v669
        %v703 = vadd.f32 %v692, %v670
        %v704 = vadd.f32 %v692, %v671
        %v705 = vadd.f32 %v692, %v672
        %v706 = vadd.f32 %v692, %v673
        %v707 = vadd.f32 %v692, %v674
        %v708 = vadd.f32 %v692, %v675
        %v709 = vadd.f32 %v692, %v676
        %v710 = vadd.f32 %v692, %v677
        %v711 = vadd.f32 %v692, %v678
        %v712 = vadd.f32 %v692, %v679
        %v713 = vadd.f32 %v692, %v680
        %v714 = vadd.f32 %v692, %v681
        %v715 = vadd.f32 %v692, %v682
        %v716 = vadd.f32 %v692, %v683
        %v717 = vadd.f32 %v692, %v684
        %v718 = vadd.f32 %v692, %v685
        %v719 = vadd.f32 %v692, %v686
        %v720 = vadd.f32 %v692, %v687
        %v721 = vadd.f32 %v692, %v688
        %v722 = vadd.f32 %v692, %v689
        %v723 = vadd.f32 %v692, %v690
        %v724 = vadd.f32 %v692, %v691
        %v725 = vld [vmem:[%s2 + $0x5] sm:$0x1]
        %v726 = vperm.slane %v725, 0
        %v727 = vmul.f32 %v434, %v726
        %v728 = vmul.f32 %v438, %v726
        %v729 = vmul.f32 %v442, %v726
        %v730 = vmul.f32 %v446, %v726
        %v731 = vmul.f32 %v450, %v726
        %v732 = vmul.f32 %v454, %v726
        %v733 = vmul.f32 %v458, %v726
        %v734 = vmul.f32 %v462, %v726
        %v735 = vmul.f32 %v466, %v726
        %v736 = vmul.f32 %v470, %v726
        %v737 = vmul.f32 %v474, %v726
        %v738 = vmul.f32 %v478, %v726
        %v739 = vmul.f32 %v482, %v726
        %v740 = vmul.f32 %v486, %v726
        %v741 = vmul.f32 %v490, %v726
        %v742 = vmul.f32 %v494, %v726
        %v743 = vmul.f32 %v498, %v726
        %v744 = vmul.f32 %v502, %v726
        %v745 = vmul.f32 %v506, %v726
        %v746 = vmul.f32 %v510, %v726
        %v747 = vmul.f32 %v514, %v726
        %v748 = vmul.f32 %v518, %v726
        %v749 = vmul.f32 %v522, %v726
        %v750 = vmul.f32 %v526, %v726
        %v751 = vmul.f32 %v530, %v726
        %v752 = vmul.f32 %v534, %v726
        %v753 = vmul.f32 %v538, %v726
        %v754 = vmul.f32 %v542, %v726
        %v755 = vmul.f32 %v546, %v726
        %v756 = vmul.f32 %v550, %v726
        %v757 = vmul.f32 %v554, %v726
        %v758 = vmul.f32 %v558, %v726
        %v759 = vadd.f32 %v693, %v727
        %v760 = vadd.f32 %v694, %v728
        %v761 = vadd.f32 %v695, %v729
        %v762 = vadd.f32 %v696, %v730
        %v763 = vadd.f32 %v697, %v731
        %v764 = vadd.f32 %v698, %v732
        %v765 = vadd.f32 %v699, %v733
        %v766 = vadd.f32 %v700, %v734
        %v767 = vadd.f32 %v701, %v735
        %v768 = vadd.f32 %v702, %v736
        %v769 = vadd.f32 %v703, %v737
        %v770 = vadd.f32 %v704, %v738
        %v771 = vadd.f32 %v705, %v739
        %v772 = vadd.f32 %v706, %v740
        %v773 = vadd.f32 %v707, %v741
        %v774 = vadd.f32 %v708, %v742
        %v775 = vadd.f32 %v709, %v743
        %v776 = vadd.f32 %v710, %v744
        %v777 = vadd.f32 %v711, %v745
        %v778 = vadd.f32 %v712, %v746
        %v779 = vadd.f32 %v713, %v747
        %v780 = vadd.f32 %v714, %v748
        %v781 = vadd.f32 %v715, %v749
        %v782 = vadd.f32 %v716, %v750
        %v783 = vadd.f32 %v717, %v751
        %v784 = vadd.f32 %v718, %v752
        %v785 = vadd.f32 %v719, %v753
        %v786 = vadd.f32 %v720, %v754
        %v787 = vadd.f32 %v721, %v755
        %v788 = vadd.f32 %v722, %v756
        %v789 = vadd.f32 %v723, %v757
        %v790 = vadd.f32 %v724, %v758
        %v791 = vmul.f32 %v759, %v759
        %v792 = vmul.f32 %v760, %v760
        %v793 = vmul.f32 %v761, %v761
        %v794 = vmul.f32 %v762, %v762
        %v795 = vmul.f32 %v763, %v763
        %v796 = vmul.f32 %v764, %v764
        %v797 = vmul.f32 %v765, %v765
        %v798 = vmul.f32 %v766, %v766
        %v799 = vmul.f32 %v767, %v767
        %v800 = vmul.f32 %v768, %v768
        %v801 = vmul.f32 %v769, %v769
        %v802 = vmul.f32 %v770, %v770
        %v803 = vmul.f32 %v771, %v771
        %v804 = vmul.f32 %v772, %v772
        %v805 = vmul.f32 %v773, %v773
        %v806 = vmul.f32 %v774, %v774
        %v807 = vmul.f32 %v775, %v775
        %v808 = vmul.f32 %v776, %v776
        %v809 = vmul.f32 %v777, %v777
        %v810 = vmul.f32 %v778, %v778
        %v811 = vmul.f32 %v779, %v779
        %v812 = vmul.f32 %v780, %v780
        %v813 = vmul.f32 %v781, %v781
        %v814 = vmul.f32 %v782, %v782
        %v815 = vmul.f32 %v783, %v783
        %v816 = vmul.f32 %v784, %v784
        %v817 = vmul.f32 %v785, %v785
        %v818 = vmul.f32 %v786, %v786
        %v819 = vmul.f32 %v787, %v787
        %v820 = vmul.f32 %v788, %v788
        %v821 = vmul.f32 %v789, %v789
        %v822 = vmul.f32 %v790, %v790
        %v823 = vadd.f32 %v625, %v791
        %v824 = vadd.f32 %v626, %v792
        %v825 = vadd.f32 %v627, %v793
        %v826 = vadd.f32 %v628, %v794
        %v827 = vadd.f32 %v629, %v795
        %v828 = vadd.f32 %v630, %v796
        %v829 = vadd.f32 %v631, %v797
        %v830 = vadd.f32 %v632, %v798
        %v831 = vadd.f32 %v633, %v799
        %v832 = vadd.f32 %v634, %v800
        %v833 = vadd.f32 %v635, %v801
        %v834 = vadd.f32 %v636, %v802
        %v835 = vadd.f32 %v637, %v803
        %v836 = vadd.f32 %v638, %v804
        %v837 = vadd.f32 %v639, %v805
        %v838 = vadd.f32 %v640, %v806
        %v839 = vadd.f32 %v641, %v807
        %v840 = vadd.f32 %v642, %v808
        %v841 = vadd.f32 %v643, %v809
        %v842 = vadd.f32 %v644, %v810
        %v843 = vadd.f32 %v645, %v811
        %v844 = vadd.f32 %v646, %v812
        %v845 = vadd.f32 %v647, %v813
        %v846 = vadd.f32 %v648, %v814
        %v847 = vadd.f32 %v649, %v815
        %v848 = vadd.f32 %v650, %v816
        %v849 = vadd.f32 %v651, %v817
        %v850 = vadd.f32 %v652, %v818
        %v851 = vadd.f32 %v653, %v819
        %v852 = vadd.f32 %v654, %v820
        %v853 = vadd.f32 %v655, %v821
        %v854 = vadd.f32 %v656, %v822
        %v855 = vld [vmem:[%s3] sm:$0x1]
        %v856 = vrsqrt.pop %v823
        %v857 = vmul.f32 %v856, %v823
        %v858 = vmul.f32 %v857, %v856
        %v859 = vmul.f32 0.5, %v858
        %v860 = vsub.f32 1.5, %v859
        %v861 = vmul.f32 %v856, %v860
        %v862 = vmul.f32 %v823, %v861
        %vm863 = vcmp.eq.f32.partialorder %v823, inf
        %v864 = vsel %vm863, %v823, %v862
        %vm865 = vcmp.eq.f32.partialorder %v823, 0.0
        %v866 = vand.u32 %v823, 2147483648
        %v867 = vsel %vm865, %v866, %v864
        %v868 = vrsqrt.pop %v824
        %v869 = vmul.f32 %v868, %v824
        %v870 = vmul.f32 %v869, %v868
        %v871 = vmul.f32 0.5, %v870
        %v872 = vsub.f32 1.5, %v871
        %v873 = vmul.f32 %v868, %v872
        %v874 = vmul.f32 %v824, %v873
        %vm875 = vcmp.eq.f32.partialorder %v824, inf
        %v876 = vsel %vm875, %v824, %v874
        %vm877 = vcmp.eq.f32.partialorder %v824, 0.0
        %v878 = vand.u32 %v824, 2147483648
        %v879 = vsel %vm877, %v878, %v876
        %v880 = vrsqrt.pop %v825
        %v881 = vmul.f32 %v880, %v825
        %v882 = vmul.f32 %v881, %v880
        %v883 = vmul.f32 0.5, %v882
        %v884 = vsub.f32 1.5, %v883
        %v885 = vmul.f32 %v880, %v884
        %v886 = vmul.f32 %v825, %v885
        %vm887 = vcmp.eq.f32.partialorder %v825, inf
        %v888 = vsel %vm887, %v825, %v886
        %vm889 = vcmp.eq.f32.partialorder %v825, 0.0
        %v890 = vand.u32 %v825, 2147483648
        %v891 = vsel %vm889, %v890, %v888
        %v892 = vrsqrt.pop %v826
        %v893 = vmul.f32 %v892, %v826
        %v894 = vmul.f32 %v893, %v892
        %v895 = vmul.f32 0.5, %v894
        %v896 = vsub.f32 1.5, %v895
        %v897 = vmul.f32 %v892, %v896
        %v898 = vmul.f32 %v826, %v897
        %vm899 = vcmp.eq.f32.partialorder %v826, inf
        %v900 = vsel %vm899, %v826, %v898
        %vm901 = vcmp.eq.f32.partialorder %v826, 0.0
        %v902 = vand.u32 %v826, 2147483648
        %v903 = vsel %vm901, %v902, %v900
        %v904 = vrsqrt.pop %v827
        %v905 = vmul.f32 %v904, %v827
        %v906 = vmul.f32 %v905, %v904
        %v907 = vmul.f32 0.5, %v906
        %v908 = vsub.f32 1.5, %v907
        %v909 = vmul.f32 %v904, %v908
        %v910 = vmul.f32 %v827, %v909
        %vm911 = vcmp.eq.f32.partialorder %v827, inf
        %v912 = vsel %vm911, %v827, %v910
        %vm913 = vcmp.eq.f32.partialorder %v827, 0.0
        %v914 = vand.u32 %v827, 2147483648
        %v915 = vsel %vm913, %v914, %v912
        %v916 = vrsqrt.pop %v828
        %v917 = vmul.f32 %v916, %v828
        %v918 = vmul.f32 %v917, %v916
        %v919 = vmul.f32 0.5, %v918
        %v920 = vsub.f32 1.5, %v919
        %v921 = vmul.f32 %v916, %v920
        %v922 = vmul.f32 %v828, %v921
        %vm923 = vcmp.eq.f32.partialorder %v828, inf
        %v924 = vsel %vm923, %v828, %v922
        %vm925 = vcmp.eq.f32.partialorder %v828, 0.0
        %v926 = vand.u32 %v828, 2147483648
        %v927 = vsel %vm925, %v926, %v924
        %v928 = vrsqrt.pop %v829
        %v929 = vmul.f32 %v928, %v829
        %v930 = vmul.f32 %v929, %v928
        %v931 = vmul.f32 0.5, %v930
        %v932 = vsub.f32 1.5, %v931
        %v933 = vmul.f32 %v928, %v932
        %v934 = vmul.f32 %v829, %v933
        %vm935 = vcmp.eq.f32.partialorder %v829, inf
        %v936 = vsel %vm935, %v829, %v934
        %vm937 = vcmp.eq.f32.partialorder %v829, 0.0
        %v938 = vand.u32 %v829, 2147483648
        %v939 = vsel %vm937, %v938, %v936
        %v940 = vrsqrt.pop %v830
        %v941 = vmul.f32 %v940, %v830
        %v942 = vmul.f32 %v941, %v940
        %v943 = vmul.f32 0.5, %v942
        %v944 = vsub.f32 1.5, %v943
        %v945 = vmul.f32 %v940, %v944
        %v946 = vmul.f32 %v830, %v945
        %vm947 = vcmp.eq.f32.partialorder %v830, inf
        %v948 = vsel %vm947, %v830, %v946
        %vm949 = vcmp.eq.f32.partialorder %v830, 0.0
        %v950 = vand.u32 %v830, 2147483648
        %v951 = vsel %vm949, %v950, %v948
        %v952 = vrsqrt.pop %v831
        %v953 = vmul.f32 %v952, %v831
        %v954 = vmul.f32 %v953, %v952
        %v955 = vmul.f32 0.5, %v954
        %v956 = vsub.f32 1.5, %v955
        %v957 = vmul.f32 %v952, %v956
        %v958 = vmul.f32 %v831, %v957
        %vm959 = vcmp.eq.f32.partialorder %v831, inf
        %v960 = vsel %vm959, %v831, %v958
        %vm961 = vcmp.eq.f32.partialorder %v831, 0.0
        %v962 = vand.u32 %v831, 2147483648
        %v963 = vsel %vm961, %v962, %v960
        %v964 = vrsqrt.pop %v832
        %v965 = vmul.f32 %v964, %v832
        %v966 = vmul.f32 %v965, %v964
        %v967 = vmul.f32 0.5, %v966
        %v968 = vsub.f32 1.5, %v967
        %v969 = vmul.f32 %v964, %v968
        %v970 = vmul.f32 %v832, %v969
        %vm971 = vcmp.eq.f32.partialorder %v832, inf
        %v972 = vsel %vm971, %v832, %v970
        %vm973 = vcmp.eq.f32.partialorder %v832, 0.0
        %v974 = vand.u32 %v832, 2147483648
        %v975 = vsel %vm973, %v974, %v972
        %v976 = vrsqrt.pop %v833
        %v977 = vmul.f32 %v976, %v833
        %v978 = vmul.f32 %v977, %v976
        %v979 = vmul.f32 0.5, %v978
        %v980 = vsub.f32 1.5, %v979
        %v981 = vmul.f32 %v976, %v980
        %v982 = vmul.f32 %v833, %v981
        %vm983 = vcmp.eq.f32.partialorder %v833, inf
        %v984 = vsel %vm983, %v833, %v982
        %vm985 = vcmp.eq.f32.partialorder %v833, 0.0
        %v986 = vand.u32 %v833, 2147483648
        %v987 = vsel %vm985, %v986, %v984
        %v988 = vrsqrt.pop %v834
        %v989 = vmul.f32 %v988, %v834
        %v990 = vmul.f32 %v989, %v988
        %v991 = vmul.f32 0.5, %v990
        %v992 = vsub.f32 1.5, %v991
        %v993 = vmul.f32 %v988, %v992
        %v994 = vmul.f32 %v834, %v993
        %vm995 = vcmp.eq.f32.partialorder %v834, inf
        %v996 = vsel %vm995, %v834, %v994
        %vm997 = vcmp.eq.f32.partialorder %v834, 0.0
        %v998 = vand.u32 %v834, 2147483648
        %v999 = vsel %vm997, %v998, %v996
        %v1000 = vrsqrt.pop %v835
        %v1001 = vmul.f32 %v1000, %v835
        %v1002 = vmul.f32 %v1001, %v1000
        %v1003 = vmul.f32 0.5, %v1002
        %v1004 = vsub.f32 1.5, %v1003
        %v1005 = vmul.f32 %v1000, %v1004
        %v1006 = vmul.f32 %v835, %v1005
        %vm1007 = vcmp.eq.f32.partialorder %v835, inf
        %v1008 = vsel %vm1007, %v835, %v1006
        %vm1009 = vcmp.eq.f32.partialorder %v835, 0.0
        %v1010 = vand.u32 %v835, 2147483648
        %v1011 = vsel %vm1009, %v1010, %v1008
        %v1012 = vrsqrt.pop %v836
        %v1013 = vmul.f32 %v1012, %v836
        %v1014 = vmul.f32 %v1013, %v1012
        %v1015 = vmul.f32 0.5, %v1014
        %v1016 = vsub.f32 1.5, %v1015
        %v1017 = vmul.f32 %v1012, %v1016
        %v1018 = vmul.f32 %v836, %v1017
        %vm1019 = vcmp.eq.f32.partialorder %v836, inf
        %v1020 = vsel %vm1019, %v836, %v1018
        %vm1021 = vcmp.eq.f32.partialorder %v836, 0.0
        %v1022 = vand.u32 %v836, 2147483648
        %v1023 = vsel %vm1021, %v1022, %v1020
        %v1024 = vrsqrt.pop %v837
        %v1025 = vmul.f32 %v1024, %v837
        %v1026 = vmul.f32 %v1025, %v1024
        %v1027 = vmul.f32 0.5, %v1026
        %v1028 = vsub.f32 1.5, %v1027
        %v1029 = vmul.f32 %v1024, %v1028
        %v1030 = vmul.f32 %v837, %v1029
        %vm1031 = vcmp.eq.f32.partialorder %v837, inf
        %v1032 = vsel %vm1031, %v837, %v1030
        %vm1033 = vcmp.eq.f32.partialorder %v837, 0.0
        %v1034 = vand.u32 %v837, 2147483648
        %v1035 = vsel %vm1033, %v1034, %v1032
        %v1036 = vrsqrt.pop %v838
        %v1037 = vmul.f32 %v1036, %v838
        %v1038 = vmul.f32 %v1037, %v1036
        %v1039 = vmul.f32 0.5, %v1038
        %v1040 = vsub.f32 1.5, %v1039
        %v1041 = vmul.f32 %v1036, %v1040
        %v1042 = vmul.f32 %v838, %v1041
        %vm1043 = vcmp.eq.f32.partialorder %v838, inf
        %v1044 = vsel %vm1043, %v838, %v1042
        %vm1045 = vcmp.eq.f32.partialorder %v838, 0.0
        %v1046 = vand.u32 %v838, 2147483648
        %v1047 = vsel %vm1045, %v1046, %v1044
        %v1048 = vrsqrt.pop %v839
        %v1049 = vmul.f32 %v1048, %v839
        %v1050 = vmul.f32 %v1049, %v1048
        %v1051 = vmul.f32 0.5, %v1050
        %v1052 = vsub.f32 1.5, %v1051
        %v1053 = vmul.f32 %v1048, %v1052
        %v1054 = vmul.f32 %v839, %v1053
        %vm1055 = vcmp.eq.f32.partialorder %v839, inf
        %v1056 = vsel %vm1055, %v839, %v1054
        %vm1057 = vcmp.eq.f32.partialorder %v839, 0.0
        %v1058 = vand.u32 %v839, 2147483648
        %v1059 = vsel %vm1057, %v1058, %v1056
        %v1060 = vrsqrt.pop %v840
        %v1061 = vmul.f32 %v1060, %v840
        %v1062 = vmul.f32 %v1061, %v1060
        %v1063 = vmul.f32 0.5, %v1062
        %v1064 = vsub.f32 1.5, %v1063
        %v1065 = vmul.f32 %v1060, %v1064
        %v1066 = vmul.f32 %v840, %v1065
        %vm1067 = vcmp.eq.f32.partialorder %v840, inf
        %v1068 = vsel %vm1067, %v840, %v1066
        %vm1069 = vcmp.eq.f32.partialorder %v840, 0.0
        %v1070 = vand.u32 %v840, 2147483648
        %v1071 = vsel %vm1069, %v1070, %v1068
        %v1072 = vrsqrt.pop %v841
        %v1073 = vmul.f32 %v1072, %v841
        %v1074 = vmul.f32 %v1073, %v1072
        %v1075 = vmul.f32 0.5, %v1074
        %v1076 = vsub.f32 1.5, %v1075
        %v1077 = vmul.f32 %v1072, %v1076
        %v1078 = vmul.f32 %v841, %v1077
        %vm1079 = vcmp.eq.f32.partialorder %v841, inf
        %v1080 = vsel %vm1079, %v841, %v1078
        %vm1081 = vcmp.eq.f32.partialorder %v841, 0.0
        %v1082 = vand.u32 %v841, 2147483648
        %v1083 = vsel %vm1081, %v1082, %v1080
        %v1084 = vrsqrt.pop %v842
        %v1085 = vmul.f32 %v1084, %v842
        %v1086 = vmul.f32 %v1085, %v1084
        %v1087 = vmul.f32 0.5, %v1086
        %v1088 = vsub.f32 1.5, %v1087
        %v1089 = vmul.f32 %v1084, %v1088
        %v1090 = vmul.f32 %v842, %v1089
        %vm1091 = vcmp.eq.f32.partialorder %v842, inf
        %v1092 = vsel %vm1091, %v842, %v1090
        %vm1093 = vcmp.eq.f32.partialorder %v842, 0.0
        %v1094 = vand.u32 %v842, 2147483648
        %v1095 = vsel %vm1093, %v1094, %v1092
        %v1096 = vrsqrt.pop %v843
        %v1097 = vmul.f32 %v1096, %v843
        %v1098 = vmul.f32 %v1097, %v1096
        %v1099 = vmul.f32 0.5, %v1098
        %v1100 = vsub.f32 1.5, %v1099
        %v1101 = vmul.f32 %v1096, %v1100
        %v1102 = vmul.f32 %v843, %v1101
        %vm1103 = vcmp.eq.f32.partialorder %v843, inf
        %v1104 = vsel %vm1103, %v843, %v1102
        %vm1105 = vcmp.eq.f32.partialorder %v843, 0.0
        %v1106 = vand.u32 %v843, 2147483648
        %v1107 = vsel %vm1105, %v1106, %v1104
        %v1108 = vrsqrt.pop %v844
        %v1109 = vmul.f32 %v1108, %v844
        %v1110 = vmul.f32 %v1109, %v1108
        %v1111 = vmul.f32 0.5, %v1110
        %v1112 = vsub.f32 1.5, %v1111
        %v1113 = vmul.f32 %v1108, %v1112
        %v1114 = vmul.f32 %v844, %v1113
        %vm1115 = vcmp.eq.f32.partialorder %v844, inf
        %v1116 = vsel %vm1115, %v844, %v1114
        %vm1117 = vcmp.eq.f32.partialorder %v844, 0.0
        %v1118 = vand.u32 %v844, 2147483648
        %v1119 = vsel %vm1117, %v1118, %v1116
        %v1120 = vrsqrt.pop %v845
        %v1121 = vmul.f32 %v1120, %v845
        %v1122 = vmul.f32 %v1121, %v1120
        %v1123 = vmul.f32 0.5, %v1122
        %v1124 = vsub.f32 1.5, %v1123
        %v1125 = vmul.f32 %v1120, %v1124
        %v1126 = vmul.f32 %v845, %v1125
        %vm1127 = vcmp.eq.f32.partialorder %v845, inf
        %v1128 = vsel %vm1127, %v845, %v1126
        %vm1129 = vcmp.eq.f32.partialorder %v845, 0.0
        %v1130 = vand.u32 %v845, 2147483648
        %v1131 = vsel %vm1129, %v1130, %v1128
        %v1132 = vrsqrt.pop %v846
        %v1133 = vmul.f32 %v1132, %v846
        %v1134 = vmul.f32 %v1133, %v1132
        %v1135 = vmul.f32 0.5, %v1134
        %v1136 = vsub.f32 1.5, %v1135
        %v1137 = vmul.f32 %v1132, %v1136
        %v1138 = vmul.f32 %v846, %v1137
        %vm1139 = vcmp.eq.f32.partialorder %v846, inf
        %v1140 = vsel %vm1139, %v846, %v1138
        %vm1141 = vcmp.eq.f32.partialorder %v846, 0.0
        %v1142 = vand.u32 %v846, 2147483648
        %v1143 = vsel %vm1141, %v1142, %v1140
        %v1144 = vrsqrt.pop %v847
        %v1145 = vmul.f32 %v1144, %v847
        %v1146 = vmul.f32 %v1145, %v1144
        %v1147 = vmul.f32 0.5, %v1146
        %v1148 = vsub.f32 1.5, %v1147
        %v1149 = vmul.f32 %v1144, %v1148
        %v1150 = vmul.f32 %v847, %v1149
        %vm1151 = vcmp.eq.f32.partialorder %v847, inf
        %v1152 = vsel %vm1151, %v847, %v1150
        %vm1153 = vcmp.eq.f32.partialorder %v847, 0.0
        %v1154 = vand.u32 %v847, 2147483648
        %v1155 = vsel %vm1153, %v1154, %v1152
        %v1156 = vrsqrt.pop %v848
        %v1157 = vmul.f32 %v1156, %v848
        %v1158 = vmul.f32 %v1157, %v1156
        %v1159 = vmul.f32 0.5, %v1158
        %v1160 = vsub.f32 1.5, %v1159
        %v1161 = vmul.f32 %v1156, %v1160
        %v1162 = vmul.f32 %v848, %v1161
        %vm1163 = vcmp.eq.f32.partialorder %v848, inf
        %v1164 = vsel %vm1163, %v848, %v1162
        %vm1165 = vcmp.eq.f32.partialorder %v848, 0.0
        %v1166 = vand.u32 %v848, 2147483648
        %v1167 = vsel %vm1165, %v1166, %v1164
        %v1168 = vrsqrt.pop %v849
        %v1169 = vmul.f32 %v1168, %v849
        %v1170 = vmul.f32 %v1169, %v1168
        %v1171 = vmul.f32 0.5, %v1170
        %v1172 = vsub.f32 1.5, %v1171
        %v1173 = vmul.f32 %v1168, %v1172
        %v1174 = vmul.f32 %v849, %v1173
        %vm1175 = vcmp.eq.f32.partialorder %v849, inf
        %v1176 = vsel %vm1175, %v849, %v1174
        %vm1177 = vcmp.eq.f32.partialorder %v849, 0.0
        %v1178 = vand.u32 %v849, 2147483648
        %v1179 = vsel %vm1177, %v1178, %v1176
        %v1180 = vrsqrt.pop %v850
        %v1181 = vmul.f32 %v1180, %v850
        %v1182 = vmul.f32 %v1181, %v1180
        %v1183 = vmul.f32 0.5, %v1182
        %v1184 = vsub.f32 1.5, %v1183
        %v1185 = vmul.f32 %v1180, %v1184
        %v1186 = vmul.f32 %v850, %v1185
        %vm1187 = vcmp.eq.f32.partialorder %v850, inf
        %v1188 = vsel %vm1187, %v850, %v1186
        %vm1189 = vcmp.eq.f32.partialorder %v850, 0.0
        %v1190 = vand.u32 %v850, 2147483648
        %v1191 = vsel %vm1189, %v1190, %v1188
        %v1192 = vrsqrt.pop %v851
        %v1193 = vmul.f32 %v1192, %v851
        %v1194 = vmul.f32 %v1193, %v1192
        %v1195 = vmul.f32 0.5, %v1194
        %v1196 = vsub.f32 1.5, %v1195
        %v1197 = vmul.f32 %v1192, %v1196
        %v1198 = vmul.f32 %v851, %v1197
        %vm1199 = vcmp.eq.f32.partialorder %v851, inf
        %v1200 = vsel %vm1199, %v851, %v1198
        %vm1201 = vcmp.eq.f32.partialorder %v851, 0.0
        %v1202 = vand.u32 %v851, 2147483648
        %v1203 = vsel %vm1201, %v1202, %v1200
        %v1204 = vrsqrt.pop %v852
        %v1205 = vmul.f32 %v1204, %v852
        %v1206 = vmul.f32 %v1205, %v1204
        %v1207 = vmul.f32 0.5, %v1206
        %v1208 = vsub.f32 1.5, %v1207
        %v1209 = vmul.f32 %v1204, %v1208
        %v1210 = vmul.f32 %v852, %v1209
        %vm1211 = vcmp.eq.f32.partialorder %v852, inf
        %v1212 = vsel %vm1211, %v852, %v1210
        %vm1213 = vcmp.eq.f32.partialorder %v852, 0.0
        %v1214 = vand.u32 %v852, 2147483648
        %v1215 = vsel %vm1213, %v1214, %v1212
        %v1216 = vrsqrt.pop %v853
        %v1217 = vmul.f32 %v1216, %v853
        %v1218 = vmul.f32 %v1217, %v1216
        %v1219 = vmul.f32 0.5, %v1218
        %v1220 = vsub.f32 1.5, %v1219
        %v1221 = vmul.f32 %v1216, %v1220
        %v1222 = vmul.f32 %v853, %v1221
        %vm1223 = vcmp.eq.f32.partialorder %v853, inf
        %v1224 = vsel %vm1223, %v853, %v1222
        %vm1225 = vcmp.eq.f32.partialorder %v853, 0.0
        %v1226 = vand.u32 %v853, 2147483648
        %v1227 = vsel %vm1225, %v1226, %v1224
        %v1228 = vrsqrt.pop %v854
        %v1229 = vmul.f32 %v1228, %v854
        %v1230 = vmul.f32 %v1229, %v1228
        %v1231 = vmul.f32 0.5, %v1230
        %v1232 = vsub.f32 1.5, %v1231
        %v1233 = vmul.f32 %v1228, %v1232
        %v1234 = vmul.f32 %v854, %v1233
        %vm1235 = vcmp.eq.f32.partialorder %v854, inf
        %v1236 = vsel %vm1235, %v854, %v1234
        %vm1237 = vcmp.eq.f32.partialorder %v854, 0.0
        %v1238 = vand.u32 %v854, 2147483648
        %v1239 = vsel %vm1237, %v1238, %v1236
        %v1241 = vperm.slane %v855, 0
        %v1243 = vsub.f32 %v1241, %v867
        %v1244 = vsub.f32 %v1241, %v879
        %v1245 = vsub.f32 %v1241, %v891
        %v1246 = vsub.f32 %v1241, %v903
        %v1247 = vsub.f32 %v1241, %v915
        %v1248 = vsub.f32 %v1241, %v927
        %v1249 = vsub.f32 %v1241, %v939
        %v1250 = vsub.f32 %v1241, %v951
        %v1251 = vsub.f32 %v1241, %v963
        %v1252 = vsub.f32 %v1241, %v975
        %v1253 = vsub.f32 %v1241, %v987
        %v1254 = vsub.f32 %v1241, %v999
        %v1255 = vsub.f32 %v1241, %v1011
        %v1256 = vsub.f32 %v1241, %v1023
        %v1257 = vsub.f32 %v1241, %v1035
        %v1258 = vsub.f32 %v1241, %v1047
        %v1259 = vsub.f32 %v1241, %v1059
        %v1260 = vsub.f32 %v1241, %v1071
        %v1261 = vsub.f32 %v1241, %v1083
        %v1262 = vsub.f32 %v1241, %v1095
        %v1263 = vsub.f32 %v1241, %v1107
        %v1264 = vsub.f32 %v1241, %v1119
        %v1265 = vsub.f32 %v1241, %v1131
        %v1266 = vsub.f32 %v1241, %v1143
        %v1267 = vsub.f32 %v1241, %v1155
        %v1268 = vsub.f32 %v1241, %v1167
        %v1269 = vsub.f32 %v1241, %v1179
        %v1270 = vsub.f32 %v1241, %v1191
        %v1271 = vsub.f32 %v1241, %v1203
        %v1272 = vsub.f32 %v1241, %v1215
        %v1273 = vsub.f32 %v1241, %v1227
        %v1274 = vsub.f32 %v1241, %v1239
        %s1275 = sld [smem:[#allocation3 + %s24]]
        %p1276 = scmp.eq.s32.totalorder %s1275, 0
        // Predicated region
        $region37: #{tpu_custom_call.1} parent=31 // pred_check
          %p1277 = pneg %p1276
        $region38: #{tpu_custom_call.1} parent=31 // pred_check_branch
          %1279 = sbr.rel (%p1277) target = $region40
        $region39: #{tpu_custom_call.1} parent=31 // pred_region
          %v1280 = vld [vmem:[#allocation4] sm:$0x1]
          %v1281 = vmul.f32 %v1243, 1.442695
          %v1282 = vpow.pop %v1281
          %v1283 = vmul.f32 %v1244, 1.442695
          %v1284 = vpow.pop %v1283
          %v1285 = vmul.f32 %v1245, 1.442695
          %v1286 = vpow.pop %v1285
          %v1287 = vmul.f32 %v1246, 1.442695
          %v1288 = vpow.pop %v1287
          %v1289 = vmul.f32 %v1247, 1.442695
          %v1290 = vpow.pop %v1289
          %v1291 = vmul.f32 %v1248, 1.442695
          %v1292 = vpow.pop %v1291
          %v1293 = vmul.f32 %v1249, 1.442695
          %v1294 = vpow.pop %v1293
          %v1295 = vmul.f32 %v1250, 1.442695
          %v1296 = vpow.pop %v1295
          %v1297 = vmul.f32 %v1251, 1.442695
          %v1298 = vpow.pop %v1297
          %v1299 = vmul.f32 %v1252, 1.442695
          %v1300 = vpow.pop %v1299
          %v1301 = vmul.f32 %v1253, 1.442695
          %v1302 = vpow.pop %v1301
          %v1303 = vmul.f32 %v1254, 1.442695
          %v1304 = vpow.pop %v1303
          %v1305 = vmul.f32 %v1255, 1.442695
          %v1306 = vpow.pop %v1305
          %v1307 = vmul.f32 %v1256, 1.442695
          %v1308 = vpow.pop %v1307
          %v1309 = vmul.f32 %v1257, 1.442695
          %v1310 = vpow.pop %v1309
          %v1311 = vmul.f32 %v1258, 1.442695
          %v1312 = vpow.pop %v1311
          %v1313 = vmul.f32 %v1259, 1.442695
          %v1314 = vpow.pop %v1313
          %v1315 = vmul.f32 %v1260, 1.442695
          %v1316 = vpow.pop %v1315
          %v1317 = vmul.f32 %v1261, 1.442695
          %v1318 = vpow.pop %v1317
          %v1319 = vmul.f32 %v1262, 1.442695
          %v1320 = vpow.pop %v1319
          %v1321 = vmul.f32 %v1263, 1.442695
          %v1322 = vpow.pop %v1321
          %v1323 = vmul.f32 %v1264, 1.442695
          %v1324 = vpow.pop %v1323
          %v1325 = vmul.f32 %v1265, 1.442695
          %v1326 = vpow.pop %v1325
          %v1327 = vmul.f32 %v1266, 1.442695
          %v1328 = vpow.pop %v1327
          %v1329 = vmul.f32 %v1267, 1.442695
          %v1330 = vpow.pop %v1329
          %v1331 = vmul.f32 %v1268, 1.442695
          %v1332 = vpow.pop %v1331
          %v1333 = vmul.f32 %v1269, 1.442695
          %v1334 = vpow.pop %v1333
          %v1335 = vmul.f32 %v1270, 1.442695
          %v1336 = vpow.pop %v1335
          %v1337 = vmul.f32 %v1271, 1.442695
          %v1338 = vpow.pop %v1337
          %v1339 = vmul.f32 %v1272, 1.442695
          %v1340 = vpow.pop %v1339
          %v1341 = vmul.f32 %v1273, 1.442695
          %v1342 = vpow.pop %v1341
          %v1343 = vmul.f32 %v1274, 1.442695
          %v1344 = vpow.pop %v1343
          %1345 = vset.pattern.permute.xlu0 2
          %1346 = vperm.xlu0 %1345, %v171
          %v1347 = vpop.permute.xlu0 %1346
          %1349 = vset.pattern.permute.xlu0 2
          %1350 = vperm.xlu0 %1349, %v172
          %v1351 = vpop.permute.xlu0 %1350
          %1353 = vset.pattern.permute.xlu0 2
          %1354 = vperm.xlu0 %1353, %v173
          %v1355 = vpop.permute.xlu0 %1354
          %1357 = vset.pattern.permute.xlu0 2
          %1358 = vperm.xlu0 %1357, %v174
          %v1359 = vpop.permute.xlu0 %1358
          %1361 = vset.pattern.permute.xlu0 2
          %1362 = vperm.xlu0 %1361, %v175
          %v1363 = vpop.permute.xlu0 %1362
          %1365 = vset.pattern.permute.xlu0 2
          %1366 = vperm.xlu0 %1365, %v176
          %v1367 = vpop.permute.xlu0 %1366
          %1369 = vset.pattern.permute.xlu0 2
          %1370 = vperm.xlu0 %1369, %v177
          %v1371 = vpop.permute.xlu0 %1370
          %1373 = vset.pattern.permute.xlu0 2
          %1374 = vperm.xlu0 %1373, %v178
          %v1375 = vpop.permute.xlu0 %1374
          %1377 = vset.pattern.permute.xlu0 2
          %1378 = vperm.xlu0 %1377, %v179
          %v1379 = vpop.permute.xlu0 %1378
          %1381 = vset.pattern.permute.xlu0 2
          %1382 = vperm.xlu0 %1381, %v180
          %v1383 = vpop.permute.xlu0 %1382
          %1385 = vset.pattern.permute.xlu0 2
          %1386 = vperm.xlu0 %1385, %v181
          %v1387 = vpop.permute.xlu0 %1386
          %1389 = vset.pattern.permute.xlu0 2
          %1390 = vperm.xlu0 %1389, %v182
          %v1391 = vpop.permute.xlu0 %1390
          %1393 = vset.pattern.permute.xlu0 2
          %1394 = vperm.xlu0 %1393, %v183
          %v1395 = vpop.permute.xlu0 %1394
          %1397 = vset.pattern.permute.xlu0 2
          %1398 = vperm.xlu0 %1397, %v184
          %v1399 = vpop.permute.xlu0 %1398
          %1401 = vset.pattern.permute.xlu0 2
          %1402 = vperm.xlu0 %1401, %v185
          %v1403 = vpop.permute.xlu0 %1402
          %1405 = vset.pattern.permute.xlu0 2
          %1406 = vperm.xlu0 %1405, %v186
          %v1407 = vpop.permute.xlu0 %1406
          %1409 = vset.pattern.permute.xlu0 2
          %1410 = vperm.xlu0 %1409, %v187
          %v1411 = vpop.permute.xlu0 %1410
          %1413 = vset.pattern.permute.xlu0 2
          %1414 = vperm.xlu0 %1413, %v188
          %v1415 = vpop.permute.xlu0 %1414
          %1417 = vset.pattern.permute.xlu0 2
          %1418 = vperm.xlu0 %1417, %v189
          %v1419 = vpop.permute.xlu0 %1418
          %1421 = vset.pattern.permute.xlu0 2
          %1422 = vperm.xlu0 %1421, %v190
          %v1423 = vpop.permute.xlu0 %1422
          %1425 = vset.pattern.permute.xlu0 2
          %1426 = vperm.xlu0 %1425, %v191
          %v1427 = vpop.permute.xlu0 %1426
          %1429 = vset.pattern.permute.xlu0 2
          %1430 = vperm.xlu0 %1429, %v192
          %v1431 = vpop.permute.xlu0 %1430
          %1433 = vset.pattern.permute.xlu0 2
          %1434 = vperm.xlu0 %1433, %v193
          %v1435 = vpop.permute.xlu0 %1434
          %1437 = vset.pattern.permute.xlu0 2
          %1438 = vperm.xlu0 %1437, %v194
          %v1439 = vpop.permute.xlu0 %1438
          %1441 = vset.pattern.permute.xlu0 2
          %1442 = vperm.xlu0 %1441, %v195
          %v1443 = vpop.permute.xlu0 %1442
          %1445 = vset.pattern.permute.xlu0 2
          %1446 = vperm.xlu0 %1445, %v196
          %v1447 = vpop.permute.xlu0 %1446
          %1449 = vset.pattern.permute.xlu0 2
          %1450 = vperm.xlu0 %1449, %v197
          %v1451 = vpop.permute.xlu0 %1450
          %1453 = vset.pattern.permute.xlu0 2
          %1454 = vperm.xlu0 %1453, %v198
          %v1455 = vpop.permute.xlu0 %1454
          %1457 = vset.pattern.permute.xlu0 2
          %1458 = vperm.xlu0 %1457, %v199
          %v1459 = vpop.permute.xlu0 %1458
          %1461 = vset.pattern.permute.xlu0 2
          %1462 = vperm.xlu0 %1461, %v200
          %v1463 = vpop.permute.xlu0 %1462
          %1465 = vset.pattern.permute.xlu0 2
          %1466 = vperm.xlu0 %1465, %v201
          %v1467 = vpop.permute.xlu0 %1466
          %1469 = vset.pattern.permute.xlu0 2
          %1470 = vperm.xlu0 %1469, %v202
          %v1471 = vpop.permute.xlu0 %1470
          %v1473 = vmul.f32 %v1347, %v1282
          %v1474 = vmul.f32 %v1351, %v1284
          %v1475 = vmul.f32 %v1355, %v1286
          %v1476 = vmul.f32 %v1359, %v1288
          %v1477 = vmul.f32 %v1363, %v1290
          %v1478 = vmul.f32 %v1367, %v1292
          %v1479 = vmul.f32 %v1371, %v1294
          %v1480 = vmul.f32 %v1375, %v1296
          %v1481 = vmul.f32 %v1379, %v1298
          %v1482 = vmul.f32 %v1383, %v1300
          %v1483 = vmul.f32 %v1387, %v1302
          %v1484 = vmul.f32 %v1391, %v1304
          %v1485 = vmul.f32 %v1395, %v1306
          %v1486 = vmul.f32 %v1399, %v1308
          %v1487 = vmul.f32 %v1403, %v1310
          %v1488 = vmul.f32 %v1407, %v1312
          %v1489 = vmul.f32 %v1411, %v1314
          %v1490 = vmul.f32 %v1415, %v1316
          %v1491 = vmul.f32 %v1419, %v1318
          %v1492 = vmul.f32 %v1423, %v1320
          %v1493 = vmul.f32 %v1427, %v1322
          %v1494 = vmul.f32 %v1431, %v1324
          %v1495 = vmul.f32 %v1435, %v1326
          %v1496 = vmul.f32 %v1439, %v1328
          %v1497 = vmul.f32 %v1443, %v1330
          %v1498 = vmul.f32 %v1447, %v1332
          %v1499 = vmul.f32 %v1451, %v1334
          %v1500 = vmul.f32 %v1455, %v1336
          %v1501 = vmul.f32 %v1459, %v1338
          %v1502 = vmul.f32 %v1463, %v1340
          %v1503 = vmul.f32 %v1467, %v1342
          %v1504 = vmul.f32 %v1471, %v1344
          %v1505 = vadd.f32 %v1473, %v1474
          %v1506 = vadd.f32 %v1505, %v1475
          %v1507 = vadd.f32 %v1506, %v1476
          %v1508 = vadd.f32 %v1507, %v1477
          %v1509 = vadd.f32 %v1508, %v1478
          %v1510 = vadd.f32 %v1509, %v1479
          %v1511 = vadd.f32 %v1510, %v1480
          %v1512 = vadd.f32 %v1511, %v1481
          %v1513 = vadd.f32 %v1512, %v1482
          %v1514 = vadd.f32 %v1513, %v1483
          %v1515 = vadd.f32 %v1514, %v1484
          %v1516 = vadd.f32 %v1515, %v1485
          %v1517 = vadd.f32 %v1516, %v1486
          %v1518 = vadd.f32 %v1517, %v1487
          %v1519 = vadd.f32 %v1518, %v1488
          %v1520 = vadd.f32 %v1519, %v1489
          %v1521 = vadd.f32 %v1520, %v1490
          %v1522 = vadd.f32 %v1521, %v1491
          %v1523 = vadd.f32 %v1522, %v1492
          %v1524 = vadd.f32 %v1523, %v1493
          %v1525 = vadd.f32 %v1524, %v1494
          %v1526 = vadd.f32 %v1525, %v1495
          %v1527 = vadd.f32 %v1526, %v1496
          %v1528 = vadd.f32 %v1527, %v1497
          %v1529 = vadd.f32 %v1528, %v1498
          %v1530 = vadd.f32 %v1529, %v1499
          %v1531 = vadd.f32 %v1530, %v1500
          %v1532 = vadd.f32 %v1531, %v1501
          %v1533 = vadd.f32 %v1532, %v1502
          %v1534 = vadd.f32 %v1533, %v1503
          %v1535 = vadd.f32 %v1534, %v1504
          %v1536 = vrot.slane %v1535, 4
          %v1537 = vadd.f32 %v1535, %v1536
          %v1538 = vrot.slane %v1537, 2
          %v1539 = vadd.f32 %v1537, %v1538
          %v1540 = vrot.slane %v1539, 1
          %v1541 = vadd.f32 %v1539, %v1540
          %v1542 = vadd.f32 %v1280, %v1541
          %1543 = vst [vmem:[#allocation4] sm:$0x1] %v1542
        $region40: #{tpu_custom_call.1} parent=31 // pred_fallthru
          _
        %p1544 = scmp.eq.s32.totalorder %s1275, 1
        // Predicated region
        $region41: #{tpu_custom_call.1} parent=31 // pred_check
          %p1545 = pneg %p1544
        $region42: #{tpu_custom_call.1} parent=31 // pred_check_branch
          %1547 = sbr.rel (%p1545) target = $region44
        $region43: #{tpu_custom_call.1} parent=31 // pred_region
          %v1548 = vld [vmem:[#allocation4] sm:$0x1]
          %v1549 = vsub.f32 0.0, %v1243
          %v1550 = vsub.f32 0.0, %v1244
          %v1551 = vsub.f32 0.0, %v1245
          %v1552 = vsub.f32 0.0, %v1246
          %v1553 = vsub.f32 0.0, %v1247
          %v1554 = vsub.f32 0.0, %v1248
          %v1555 = vsub.f32 0.0, %v1249
          %v1556 = vsub.f32 0.0, %v1250
          %v1557 = vsub.f32 0.0, %v1251
          %v1558 = vsub.f32 0.0, %v1252
          %v1559 = vsub.f32 0.0, %v1253
          %v1560 = vsub.f32 0.0, %v1254
          %v1561 = vsub.f32 0.0, %v1255
          %v1562 = vsub.f32 0.0, %v1256
          %v1563 = vsub.f32 0.0, %v1257
          %v1564 = vsub.f32 0.0, %v1258
          %v1565 = vsub.f32 0.0, %v1259
          %v1566 = vsub.f32 0.0, %v1260
          %v1567 = vsub.f32 0.0, %v1261
          %v1568 = vsub.f32 0.0, %v1262
          %v1569 = vsub.f32 0.0, %v1263
          %v1570 = vsub.f32 0.0, %v1264
          %v1571 = vsub.f32 0.0, %v1265
          %v1572 = vsub.f32 0.0, %v1266
          %v1573 = vsub.f32 0.0, %v1267
          %v1574 = vsub.f32 0.0, %v1268
          %v1575 = vsub.f32 0.0, %v1269
          %v1576 = vsub.f32 0.0, %v1270
          %v1577 = vsub.f32 0.0, %v1271
          %v1578 = vsub.f32 0.0, %v1272
          %v1579 = vsub.f32 0.0, %v1273
          %v1580 = vsub.f32 0.0, %v1274
          %1581 = vset.pattern.permute.xlu0 2
          %1582 = vperm.xlu0 %1581, %v171
          %v1583 = vpop.permute.xlu0 %1582
          %1585 = vset.pattern.permute.xlu0 2
          %1586 = vperm.xlu0 %1585, %v172
          %v1587 = vpop.permute.xlu0 %1586
          %1589 = vset.pattern.permute.xlu0 2
          %1590 = vperm.xlu0 %1589, %v173
          %v1591 = vpop.permute.xlu0 %1590
          %1593 = vset.pattern.permute.xlu0 2
          %1594 = vperm.xlu0 %1593, %v174
          %v1595 = vpop.permute.xlu0 %1594
          %1597 = vset.pattern.permute.xlu0 2
          %1598 = vperm.xlu0 %1597, %v175
          %v1599 = vpop.permute.xlu0 %1598
          %1601 = vset.pattern.permute.xlu0 2
          %1602 = vperm.xlu0 %1601, %v176
          %v1603 = vpop.permute.xlu0 %1602
          %1605 = vset.pattern.permute.xlu0 2
          %1606 = vperm.xlu0 %1605, %v177
          %v1607 = vpop.permute.xlu0 %1606
          %1609 = vset.pattern.permute.xlu0 2
          %1610 = vperm.xlu0 %1609, %v178
          %v1611 = vpop.permute.xlu0 %1610
          %1613 = vset.pattern.permute.xlu0 2
          %1614 = vperm.xlu0 %1613, %v179
          %v1615 = vpop.permute.xlu0 %1614
          %1617 = vset.pattern.permute.xlu0 2
          %1618 = vperm.xlu0 %1617, %v180
          %v1619 = vpop.permute.xlu0 %1618
          %1621 = vset.pattern.permute.xlu0 2
          %1622 = vperm.xlu0 %1621, %v181
          %v1623 = vpop.permute.xlu0 %1622
          %1625 = vset.pattern.permute.xlu0 2
          %1626 = vperm.xlu0 %1625, %v182
          %v1627 = vpop.permute.xlu0 %1626
          %1629 = vset.pattern.permute.xlu0 2
          %1630 = vperm.xlu0 %1629, %v183
          %v1631 = vpop.permute.xlu0 %1630
          %1633 = vset.pattern.permute.xlu0 2
          %1634 = vperm.xlu0 %1633, %v184
          %v1635 = vpop.permute.xlu0 %1634
          %1637 = vset.pattern.permute.xlu0 2
          %1638 = vperm.xlu0 %1637, %v185
          %v1639 = vpop.permute.xlu0 %1638
          %1641 = vset.pattern.permute.xlu0 2
          %1642 = vperm.xlu0 %1641, %v186
          %v1643 = vpop.permute.xlu0 %1642
          %1645 = vset.pattern.permute.xlu0 2
          %1646 = vperm.xlu0 %1645, %v187
          %v1647 = vpop.permute.xlu0 %1646
          %1649 = vset.pattern.permute.xlu0 2
          %1650 = vperm.xlu0 %1649, %v188
          %v1651 = vpop.permute.xlu0 %1650
          %1653 = vset.pattern.permute.xlu0 2
          %1654 = vperm.xlu0 %1653, %v189
          %v1655 = vpop.permute.xlu0 %1654
          %1657 = vset.pattern.permute.xlu0 2
          %1658 = vperm.xlu0 %1657, %v190
          %v1659 = vpop.permute.xlu0 %1658
          %1661 = vset.pattern.permute.xlu0 2
          %1662 = vperm.xlu0 %1661, %v191
          %v1663 = vpop.permute.xlu0 %1662
          %1665 = vset.pattern.permute.xlu0 2
          %1666 = vperm.xlu0 %1665, %v192
          %v1667 = vpop.permute.xlu0 %1666
          %1669 = vset.pattern.permute.xlu0 2
          %1670 = vperm.xlu0 %1669, %v193
          %v1671 = vpop.permute.xlu0 %1670
          %1673 = vset.pattern.permute.xlu0 2
          %1674 = vperm.xlu0 %1673, %v194
          %v1675 = vpop.permute.xlu0 %1674
          %1677 = vset.pattern.permute.xlu0 2
          %1678 = vperm.xlu0 %1677, %v195
          %v1679 = vpop.permute.xlu0 %1678
          %1681 = vset.pattern.permute.xlu0 2
          %1682 = vperm.xlu0 %1681, %v196
          %v1683 = vpop.permute.xlu0 %1682
          %1685 = vset.pattern.permute.xlu0 2
          %1686 = vperm.xlu0 %1685, %v197
          %v1687 = vpop.permute.xlu0 %1686
          %1689 = vset.pattern.permute.xlu0 2
          %1690 = vperm.xlu0 %1689, %v198
          %v1691 = vpop.permute.xlu0 %1690
          %1693 = vset.pattern.permute.xlu0 2
          %1694 = vperm.xlu0 %1693, %v199
          %v1695 = vpop.permute.xlu0 %1694
          %1697 = vset.pattern.permute.xlu0 2
          %1698 = vperm.xlu0 %1697, %v200
          %v1699 = vpop.permute.xlu0 %1698
          %1701 = vset.pattern.permute.xlu0 2
          %1702 = vperm.xlu0 %1701, %v201
          %v1703 = vpop.permute.xlu0 %1702
          %1705 = vset.pattern.permute.xlu0 2
          %1706 = vperm.xlu0 %1705, %v202
          %v1707 = vpop.permute.xlu0 %1706
          %v1709 = vmul.f32 %v1583, %v1549
          %v1710 = vmul.f32 %v1587, %v1550
          %v1711 = vmul.f32 %v1591, %v1551
          %v1712 = vmul.f32 %v1595, %v1552
          %v1713 = vmul.f32 %v1599, %v1553
          %v1714 = vmul.f32 %v1603, %v1554
          %v1715 = vmul.f32 %v1607, %v1555
          %v1716 = vmul.f32 %v1611, %v1556
          %v1717 = vmul.f32 %v1615, %v1557
          %v1718 = vmul.f32 %v1619, %v1558
          %v1719 = vmul.f32 %v1623, %v1559
          %v1720 = vmul.f32 %v1627, %v1560
          %v1721 = vmul.f32 %v1631, %v1561
          %v1722 = vmul.f32 %v1635, %v1562
          %v1723 = vmul.f32 %v1639, %v1563
          %v1724 = vmul.f32 %v1643, %v1564
          %v1725 = vmul.f32 %v1647, %v1565
          %v1726 = vmul.f32 %v1651, %v1566
          %v1727 = vmul.f32 %v1655, %v1567
          %v1728 = vmul.f32 %v1659, %v1568
          %v1729 = vmul.f32 %v1663, %v1569
          %v1730 = vmul.f32 %v1667, %v1570
          %v1731 = vmul.f32 %v1671, %v1571
          %v1732 = vmul.f32 %v1675, %v1572
          %v1733 = vmul.f32 %v1679, %v1573
          %v1734 = vmul.f32 %v1683, %v1574
          %v1735 = vmul.f32 %v1687, %v1575
          %v1736 = vmul.f32 %v1691, %v1576
          %v1737 = vmul.f32 %v1695, %v1577
          %v1738 = vmul.f32 %v1699, %v1578
          %v1739 = vmul.f32 %v1703, %v1579
          %v1740 = vmul.f32 %v1707, %v1580
          %v1741 = vadd.f32 %v1709, %v1710
          %v1742 = vadd.f32 %v1741, %v1711
          %v1743 = vadd.f32 %v1742, %v1712
          %v1744 = vadd.f32 %v1743, %v1713
          %v1745 = vadd.f32 %v1744, %v1714
          %v1746 = vadd.f32 %v1745, %v1715
          %v1747 = vadd.f32 %v1746, %v1716
          %v1748 = vadd.f32 %v1747, %v1717
          %v1749 = vadd.f32 %v1748, %v1718
          %v1750 = vadd.f32 %v1749, %v1719
          %v1751 = vadd.f32 %v1750, %v1720
          %v1752 = vadd.f32 %v1751, %v1721
          %v1753 = vadd.f32 %v1752, %v1722
          %v1754 = vadd.f32 %v1753, %v1723
          %v1755 = vadd.f32 %v1754, %v1724
          %v1756 = vadd.f32 %v1755, %v1725
          %v1757 = vadd.f32 %v1756, %v1726
          %v1758 = vadd.f32 %v1757, %v1727
          %v1759 = vadd.f32 %v1758, %v1728
          %v1760 = vadd.f32 %v1759, %v1729
          %v1761 = vadd.f32 %v1760, %v1730
          %v1762 = vadd.f32 %v1761, %v1731
          %v1763 = vadd.f32 %v1762, %v1732
          %v1764 = vadd.f32 %v1763, %v1733
          %v1765 = vadd.f32 %v1764, %v1734
          %v1766 = vadd.f32 %v1765, %v1735
          %v1767 = vadd.f32 %v1766, %v1736
          %v1768 = vadd.f32 %v1767, %v1737
          %v1769 = vadd.f32 %v1768, %v1738
          %v1770 = vadd.f32 %v1769, %v1739
          %v1771 = vadd.f32 %v1770, %v1740
          %v1772 = vrot.slane %v1771, 4
          %v1773 = vadd.f32 %v1771, %v1772
          %v1774 = vrot.slane %v1773, 2
          %v1775 = vadd.f32 %v1773, %v1774
          %v1776 = vrot.slane %v1775, 1
          %v1777 = vadd.f32 %v1775, %v1776
          %v1778 = vadd.f32 %v1548, %v1777
          %1779 = vst [vmem:[#allocation4] sm:$0x1] %v1778
        $region44: #{tpu_custom_call.1} parent=31 // pred_fallthru
          _
        // Predicated region
        $region45: #{tpu_custom_call.1} parent=31 // pred_check
          %p1780 = pneg %p105
        $region46: #{tpu_custom_call.1} parent=31 // pred_check_branch
          %1782 = sbr.rel (%p1780) target = $region48
        $region47: #{tpu_custom_call.1} parent=31 // pred_region
          %1784 = vsyncadd [#allocation5], 0
          %s1786 = sshll.u32 [#allocation4], 4
          %s1787 = int_to_ptr.vmem [resolvable:$true] %s1786
          %s1788 = sshll.u32 %s4, 4
          %s1789 = int_to_ptr.hbm [resolvable:$true] %s1788
          %1791 = dma.vmem_to_hbm [thread:$0]  %s1787, 16, %s1789, [#allocation5]
        $region48: #{tpu_custom_call.1} parent=31 // pred_fallthru
          _
        // Predicated region
        $region49: #{tpu_custom_call.1} parent=31 // pred_check
          %p1792 = pneg %p105
        $region50: #{tpu_custom_call.1} parent=31 // pred_check_branch
          %1794 = sbr.rel (%p1792) target = $region52
        $region51: #{tpu_custom_call.1} parent=31 // pred_region
          %1796 = dma.done [#allocation5], 16
        $region52: #{tpu_custom_call.1} parent=31 // pred_fallthru
          _
      $region32: #{tpu_custom_call.1} parent=5 // pred_fallthru
        _
      %p1797 = scmp.le.s32.totalorder 2, %s19
      // Predicated region
      $region53: #{tpu_custom_call.1} parent=5 // pred_check
        %p1798 = pneg %p1797
      $region54: #{tpu_custom_call.1} parent=5 // pred_check_branch
        %1800 = sbr.rel (%p1798) target = $region56
      $region55: #{tpu_custom_call.1} parent=5 // pred_region
        %s1801 = ssub.s32 %s19, 2
      $region56: #{tpu_custom_call.1} parent=5 // pred_fallthru
        _
    $region6: #{tpu_custom_call.1} parent=1 // loop_footer
      %s23 = sadd.s32 1, %s19
    $region7: #{tpu_custom_call.1} parent=1 // loop_footer_branch
      %18 = sbr.rel target = $region3
    $region8: #{tpu_custom_call.1} parent=1 // loop_exit
      _
    %1802 = vsyncpa [#allocation5], 1
    %s1803 = scalar_lea.sflag [#allocation5], 1
    %1804 = vsyncpa %s1803, 1

// kernel: tpu_custom_call.1
$region0: #{tpu_custom_call.1}
  #allocation0 [shape = 'u32[]', space=smem, size = 0x4, offset = 0x4, fixed_abs, tag = 'smem constant byte address 0x4 - core index']
  #allocation1 [shape = 'u32[72,128]{1,0:T(1,128)}', space=vmem, size = 0x9000, scoped, tag = 'internal scratch']
  #allocation2 [shape = 's32[1]{0}', space=sflag, size = 0x4, scoped, tag = 'scoped memory for tpu_custom_call.1']
  #allocation3 [shape = 'u8[512]{0}', space=smem, size = 0x200, scoped, tag = 'prefetched SMEM operand 0']
  %s0 = inlined_call_operand.vmem [shape: s32[2], index: 0, kind: input, shape index: {}]
  %s1 = inlined_call_operand.vmem [shape: f32[2,256,3], index: 1, kind: input, shape index: {}]
  %s2 = inlined_call_operand.vmem [shape: f32[6,128], index: 2, kind: input, shape index: {}]
  %s3 = inlined_call_operand.vmem [shape: f32[1,128], index: 3, kind: input, shape index: {}]
  %s4 = inlined_call_operand.hbm [shape: f32[1,128], index: 4, kind: output, shape index: {}]
  %s5 = sld [smem:[#allocation0]]
  $region57: #{tpu_custom_call.1} parent=0
    _
  %s7 = ssub.s32 1, %s5
  %s8 = scalar_select 0, %s7, %s5
  %s10 = sshll.u32 %s0, 4
  %s11 = int_to_ptr.vmem [resolvable:$true] %s10
  %13 = dma.vmem_to_smem %s11, 16, [#allocation3], [#allocation2]
  %15 = dma.done [#allocation2], 16
  %16 = sfence
  $region1: #{tpu_custom_call.1} parent=0
    #allocation4 [shape = 'u8[512]{0}', space=vmem, size = 0x400, scoped, tag = 'output window, operand 0, single buffered']
    #allocation5 [shape = 's32[2]{0}', space=sflag, size = 0x8, scoped, tag = 'scoped memory for tpu_custom_call.1']
    %17 = vsyncpa [#allocation5], 0
    loop: start=0, step=1, limit=4
    $region2: #{tpu_custom_call.1} parent=1 // loop_pre_header
      _
    $region3: #{tpu_custom_call.1} parent=1 // loop_header
      %s19 = sphi 0, %s23
      %p20 = scmp.ge.s32.totalorder %s19, 4
      %s29 = sphi 0, %s31
      %s32 = sphi 0, %s29
      %s33 = sphi 0, %s32
      %s49 = sphi 0, %s33
      %s53 = sphi 0, %s53
      %s55 = sphi 0, %s53
      %s56 = sphi 0, %s55
      %s70 = sphi 0, %s56
      %s74 = sphi 0, %s74
      %s76 = sphi 0, %s74
      %s77 = sphi 0, %s76
      %s91 = sphi 0, %s77
      %s95 = sphi 0, %s95
      %s97 = sphi 0, %s95
      %s98 = sphi 0, %s97
      %s112 = sphi 0, %s98
    $region4: #{tpu_custom_call.1} parent=1 // loop_header_branch
      %22 = sbr.rel (%p20) target = $region8
    $region5: #{tpu_custom_call.1} parent=1 // loop_body
      %s24 = ssub.s32 %s19, 1
      %s25 = ssub.s32 %s19, 2
      %s26 = sadd.s32 %s19, 1
      %s27 = ssub.s32 %s19, %s26
      %p28 = scmp.eq.s32.totalorder %s27, 0
      %s30 = sadd.s32 %s29, 1
      %s31 = scalar_select %p28, %s29, %s30
      %p34 = pneg %p28
      %p35 = scmp.eq.s32.totalorder %s19, 1
      %p36 = por %p34, %p35
      %p37 = scmp.ne.s32.totalorder %s29, %s32
      %p38 = scmp.eq.s32.totalorder %s19, 0
      %p39 = por %p37, %p38
      %p40 = scmp.ne.s32.totalorder %s29, %s32
      %p41 = scmp.eq.s32.totalorder %s24, 1
      %p42 = por %p40, %p41
      %p43 = scmp.ne.s32.totalorder %s32, %s33
      %p44 = scmp.eq.s32.totalorder %s24, 0
      %p45 = por %p43, %p44
      %p46 = scmp.ne.s32.totalorder %s32, %s33
      %p47 = scmp.eq.s32.totalorder %s25, 1
      %p48 = por %p46, %p47
      %p50 = scmp.ne.s32.totalorder %s33, %s49
      %p51 = scmp.eq.s32.totalorder %s25, 0
      %p52 = por %p50, %p51
      %s54 = sadd.s32 %s53, 1
      %p57 = scmp.eq.s32.totalorder %s19, 1
      %p58 = scmp.ne.s32.totalorder %s53, %s55
      %p59 = scmp.eq.s32.totalorder %s19, 0
      %p60 = por %p58, %p59
      %p61 = scmp.ne.s32.totalorder %s53, %s55
      %p62 = scmp.eq.s32.totalorder %s24, 1
      %p63 = por %p61, %p62
      %p64 = scmp.ne.s32.totalorder %s55, %s56
      %p65 = scmp.eq.s32.totalorder %s24, 0
      %p66 = por %p64, %p65
      %p67 = scmp.ne.s32.totalorder %s55, %s56
      %p68 = scmp.eq.s32.totalorder %s25, 1
      %p69 = por %p67, %p68
      %p71 = scmp.ne.s32.totalorder %s56, %s70
      %p72 = scmp.eq.s32.totalorder %s25, 0
      %p73 = por %p71, %p72
      %s75 = sadd.s32 %s74, 1
      %p78 = scmp.eq.s32.totalorder %s19, 1
      %p79 = scmp.ne.s32.totalorder %s74, %s76
      %p80 = scmp.eq.s32.totalorder %s19, 0
      %p81 = por %p79, %p80
      %p82 = scmp.ne.s32.totalorder %s74, %s76
      %p83 = scmp.eq.s32.totalorder %s24, 1
      %p84 = por %p82, %p83
      %p85 = scmp.ne.s32.totalorder %s76, %s77
      %p86 = scmp.eq.s32.totalorder %s24, 0
      %p87 = por %p85, %p86
      %p88 = scmp.ne.s32.totalorder %s76, %s77
      %p89 = scmp.eq.s32.totalorder %s25, 1
      %p90 = por %p88, %p89
      %p92 = scmp.ne.s32.totalorder %s77, %s91
      %p93 = scmp.eq.s32.totalorder %s25, 0
      %p94 = por %p92, %p93
      %s96 = sadd.s32 %s95, 1
      %p99 = scmp.eq.s32.totalorder %s19, 1
      %p100 = scmp.ne.s32.totalorder %s95, %s97
      %p101 = scmp.eq.s32.totalorder %s19, 0
      %p102 = por %p100, %p101
      %p103 = scmp.ne.s32.totalorder %s95, %s97
      %p104 = scmp.eq.s32.totalorder %s24, 1
      %p105 = por %p103, %p104
      %p106 = scmp.ne.s32.totalorder %s97, %s98
      %p107 = scmp.eq.s32.totalorder %s24, 0
      %p108 = por %p106, %p107
      %p109 = scmp.ne.s32.totalorder %s97, %s98
      %p110 = scmp.eq.s32.totalorder %s25, 1
      %p111 = por %p109, %p110
      %p113 = scmp.ne.s32.totalorder %s98, %s112
      %p114 = scmp.eq.s32.totalorder %s25, 0
      %p115 = por %p113, %p114
      %p116 = scmp.le.s32.totalorder 1, %s19
      %p117 = scmp.lt.s32.totalorder %s19, 3
      %p118 = pnand %p116, %p117
      %p119 = pneg %p118
      // Predicated region
      $region9: #{tpu_custom_call.1} parent=5 // pred_check
        _
      $region10: #{tpu_custom_call.1} parent=5 // pred_check_branch
        %121 = sbr.rel (%p118) target = $region12
      $region11: #{tpu_custom_call.1} parent=5 // pred_region
        %s122 = ssub.s32 %s19, 1
        // Predicated region
        $region13: #{tpu_custom_call.1} parent=11 // pred_check
          %p123 = pneg %p66
        $region14: #{tpu_custom_call.1} parent=11 // pred_check_branch
          %125 = sbr.rel (%p123) target = $region16
        $region15: #{tpu_custom_call.1} parent=11 // pred_region
          _
        $region16: #{tpu_custom_call.1} parent=11 // pred_fallthru
          _
        // Predicated region
        $region17: #{tpu_custom_call.1} parent=11 // pred_check
          %p126 = pneg %p87
        $region18: #{tpu_custom_call.1} parent=11 // pred_check_branch
          %128 = sbr.rel (%p126) target = $region20
        $region19: #{tpu_custom_call.1} parent=11 // pred_region
          _
        $region20: #{tpu_custom_call.1} parent=11 // pred_fallthru
          _
      $region12: #{tpu_custom_call.1} parent=5 // pred_fallthru
        _
      %p129 = scmp.lt.s32.totalorder %s19, 2
      // Predicated region
      $region21: #{tpu_custom_call.1} parent=5 // pred_check
        %p130 = pneg %p129
      $region22: #{tpu_custom_call.1} parent=5 // pred_check_branch
        %132 = sbr.rel (%p130) target = $region24
      $region23: #{tpu_custom_call.1} parent=5 // pred_region
        // Predicated region
        $region25: #{tpu_custom_call.1} parent=23 // pred_check
          %p133 = pneg %p39
        $region26: #{tpu_custom_call.1} parent=23 // pred_check_branch
          %135 = sbr.rel (%p133) target = $region28
        $region27: #{tpu_custom_call.1} parent=23 // pred_region
          %p136 = scmp.lt.s32.totalorder %s19, 1
          %s137 = scalar_select %p136, %s19, 1
          %s138 = smul.addr %s137, 32
          %s139 = smul.addr %s138, 8
          %s140 = scalar_lea.vmem %s1, %s139
        $region28: #{tpu_custom_call.1} parent=23 // pred_fallthru
          _
      $region24: #{tpu_custom_call.1} parent=5 // pred_fallthru
        _
      %p141 = scmp.le.s32.totalorder 1, %s19
      %p142 = scmp.lt.s32.totalorder %s19, 3
      %p143 = pnand %p141, %p142
      %p144 = pneg %p143
      // Predicated region
      $region29: #{tpu_custom_call.1} parent=5 // pred_check
        _
      $region30: #{tpu_custom_call.1} parent=5 // pred_check_branch
        %146 = sbr.rel (%p143) target = $region32
      $region31: #{tpu_custom_call.1} parent=5 // pred_region
        %s147 = ssub.s32 %s19, 1
        %p148 = scmp.lt.s32.totalorder %s24, 1
        %s149 = scalar_select %p148, %s24, 1
        %s150 = smul.addr %s149, 32
        %s151 = smul.addr %s150, 8
        %s152 = scalar_lea.vmem %s1, %s151
        %p153 = pneg %p45
        %p154 = pneg %p42
        %p155 = pneg %p66
        %p156 = pneg %p63
        %p157 = pneg %p87
        %p158 = pneg %p84
        %p159 = pneg %p108
        %p160 = pneg %p105
        %p161 = scmp.lt.s32.totalorder %s24, 1
        %s162 = scalar_select %p161, %s24, 1
        %s163 = smul.addr %s162, 32
        %s164 = smul.addr %s163, 8
        %s165 = scalar_lea.vmem %s1, %s164
        %p166 = scmp.eq.s32.totalorder %s24, 0
        // Predicated region
        $region33: #{tpu_custom_call.1} parent=31 // pred_check
          %p167 = pneg %p166
        $region34: #{tpu_custom_call.1} parent=31 // pred_check_branch
          %169 = sbr.rel (%p167) target = $region36
        $region35: #{tpu_custom_call.1} parent=31 // pred_region
          %170 = vst [vmem:[#allocation4] sm:$0x1] 0.0
        $region36: #{tpu_custom_call.1} parent=31 // pred_fallthru
          _
        %v171 = vld [vmem:[%s165] sm:$0xff]
        %v172 = vld [vmem:[%s165 + $0x8] sm:$0xff]
        %v173 = vld [vmem:[%s165 + $0x10] sm:$0xff]
        %v174 = vld [vmem:[%s165 + $0x18] sm:$0xff]
        %v175 = vld [vmem:[%s165 + $0x20] sm:$0xff]
        %v176 = vld [vmem:[%s165 + $0x28] sm:$0xff]
        %v177 = vld [vmem:[%s165 + $0x30] sm:$0xff]
        %v178 = vld [vmem:[%s165 + $0x38] sm:$0xff]
        %v179 = vld [vmem:[%s165 + $0x40] sm:$0xff]
        %v180 = vld [vmem:[%s165 + $0x48] sm:$0xff]
        %v181 = vld [vmem:[%s165 + $0x50] sm:$0xff]
        %v182 = vld [vmem:[%s165 + $0x58] sm:$0xff]
        %v183 = vld [vmem:[%s165 + $0x60] sm:$0xff]
        %v184 = vld [vmem:[%s165 + $0x68] sm:$0xff]
        %v185 = vld [vmem:[%s165 + $0x70] sm:$0xff]
        %v186 = vld [vmem:[%s165 + $0x78] sm:$0xff]
        %v187 = vld [vmem:[%s165 + $0x80] sm:$0xff]
        %v188 = vld [vmem:[%s165 + $0x88] sm:$0xff]
        %v189 = vld [vmem:[%s165 + $0x90] sm:$0xff]
        %v190 = vld [vmem:[%s165 + $0x98] sm:$0xff]
        %v191 = vld [vmem:[%s165 + $0xa0] sm:$0xff]
        %v192 = vld [vmem:[%s165 + $0xa8] sm:$0xff]
        %v193 = vld [vmem:[%s165 + $0xb0] sm:$0xff]
        %v194 = vld [vmem:[%s165 + $0xb8] sm:$0xff]
        %v195 = vld [vmem:[%s165 + $0xc0] sm:$0xff]
        %v196 = vld [vmem:[%s165 + $0xc8] sm:$0xff]
        %v197 = vld [vmem:[%s165 + $0xd0] sm:$0xff]
        %v198 = vld [vmem:[%s165 + $0xd8] sm:$0xff]
        %v199 = vld [vmem:[%s165 + $0xe0] sm:$0xff]
        %v200 = vld [vmem:[%s165 + $0xe8] sm:$0xff]
        %v201 = vld [vmem:[%s165 + $0xf0] sm:$0xff]
        %v202 = vld [vmem:[%s165 + $0xf8] sm:$0xff]
        %v203 = vld [vmem:[%s2] sm:$0x1]
        %v204 = vld [vmem:[%s2 + $0x2] sm:$0x1]
        %206 = vset.pattern.permute.xlu0 0
        %207 = vperm.xlu0 %206, %v171
        %v208 = vpop.permute.xlu0 %207
        %211 = vset.pattern.permute.xlu0 0
        %212 = vperm.xlu0 %211, %v172
        %v213 = vpop.permute.xlu0 %212
        %216 = vset.pattern.permute.xlu0 0
        %217 = vperm.xlu0 %216, %v173
        %v218 = vpop.permute.xlu0 %217
        %221 = vset.pattern.permute.xlu0 0
        %222 = vperm.xlu0 %221, %v174
        %v223 = vpop.permute.xlu0 %222
        %226 = vset.pattern.permute.xlu0 0
        %227 = vperm.xlu0 %226, %v175
        %v228 = vpop.permute.xlu0 %227
        %231 = vset.pattern.permute.xlu0 0
        %232 = vperm.xlu0 %231, %v176
        %v233 = vpop.permute.xlu0 %232
        %236 = vset.pattern.permute.xlu0 0
        %237 = vperm.xlu0 %236, %v177
        %v238 = vpop.permute.xlu0 %237
        %241 = vset.pattern.permute.xlu0 0
        %242 = vperm.xlu0 %241, %v178
        %v243 = vpop.permute.xlu0 %242
        %246 = vset.pattern.permute.xlu0 0
        %247 = vperm.xlu0 %246, %v179
        %v248 = vpop.permute.xlu0 %247
        %251 = vset.pattern.permute.xlu0 0
        %252 = vperm.xlu0 %251, %v180
        %v253 = vpop.permute.xlu0 %252
        %256 = vset.pattern.permute.xlu0 0
        %257 = vperm.xlu0 %256, %v181
        %v258 = vpop.permute.xlu0 %257
        %261 = vset.pattern.permute.xlu0 0
        %262 = vperm.xlu0 %261, %v182
        %v263 = vpop.permute.xlu0 %262
        %266 = vset.pattern.permute.xlu0 0
        %267 = vperm.xlu0 %266, %v183
        %v268 = vpop.permute.xlu0 %267
        %271 = vset.pattern.permute.xlu0 0
        %272 = vperm.xlu0 %271, %v184
        %v273 = vpop.permute.xlu0 %272
        %276 = vset.pattern.permute.xlu0 0
        %277 = vperm.xlu0 %276, %v185
        %v278 = vpop.permute.xlu0 %277
        %281 = vset.pattern.permute.xlu0 0
        %282 = vperm.xlu0 %281, %v186
        %v283 = vpop.permute.xlu0 %282
        %286 = vset.pattern.permute.xlu0 0
        %287 = vperm.xlu0 %286, %v187
        %v288 = vpop.permute.xlu0 %287
        %291 = vset.pattern.permute.xlu0 0
        %292 = vperm.xlu0 %291, %v188
        %v293 = vpop.permute.xlu0 %292
        %296 = vset.pattern.permute.xlu0 0
        %297 = vperm.xlu0 %296, %v189
        %v298 = vpop.permute.xlu0 %297
        %301 = vset.pattern.permute.xlu0 0
        %302 = vperm.xlu0 %301, %v190
        %v303 = vpop.permute.xlu0 %302
        %306 = vset.pattern.permute.xlu0 0
        %307 = vperm.xlu0 %306, %v191
        %v308 = vpop.permute.xlu0 %307
        %311 = vset.pattern.permute.xlu0 0
        %312 = vperm.xlu0 %311, %v192
        %v313 = vpop.permute.xlu0 %312
        %316 = vset.pattern.permute.xlu0 0
        %317 = vperm.xlu0 %316, %v193
        %v318 = vpop.permute.xlu0 %317
        %321 = vset.pattern.permute.xlu0 0
        %322 = vperm.xlu0 %321, %v194
        %v323 = vpop.permute.xlu0 %322
        %326 = vset.pattern.permute.xlu0 0
        %327 = vperm.xlu0 %326, %v195
        %v328 = vpop.permute.xlu0 %327
        %331 = vset.pattern.permute.xlu0 0
        %332 = vperm.xlu0 %331, %v196
        %v333 = vpop.permute.xlu0 %332
        %336 = vset.pattern.permute.xlu0 0
        %337 = vperm.xlu0 %336, %v197
        %v338 = vpop.permute.xlu0 %337
        %341 = vset.pattern.permute.xlu0 0
        %342 = vperm.xlu0 %341, %v198
        %v343 = vpop.permute.xlu0 %342
        %346 = vset.pattern.permute.xlu0 0
        %347 = vperm.xlu0 %346, %v199
        %v348 = vpop.permute.xlu0 %347
        %351 = vset.pattern.permute.xlu0 0
        %352 = vperm.xlu0 %351, %v200
        %v353 = vpop.permute.xlu0 %352
        %356 = vset.pattern.permute.xlu0 0
        %357 = vperm.xlu0 %356, %v201
        %v358 = vpop.permute.xlu0 %357
        %361 = vset.pattern.permute.xlu0 0
        %362 = vperm.xlu0 %361, %v202
        %v363 = vpop.permute.xlu0 %362
        %v365 = vperm.slane %v204, 0
        %v366 = vmul.f32 %v208, %v365
        %v367 = vmul.f32 %v213, %v365
        %v368 = vmul.f32 %v218, %v365
        %v369 = vmul.f32 %v223, %v365
        %v370 = vmul.f32 %v228, %v365
        %v371 = vmul.f32 %v233, %v365
        %v372 = vmul.f32 %v238, %v365
        %v373 = vmul.f32 %v243, %v365
        %v374 = vmul.f32 %v248, %v365
        %v375 = vmul.f32 %v253, %v365
        %v376 = vmul.f32 %v258, %v365
        %v377 = vmul.f32 %v263, %v365
        %v378 = vmul.f32 %v268, %v365
        %v379 = vmul.f32 %v273, %v365
        %v380 = vmul.f32 %v278, %v365
        %v381 = vmul.f32 %v283, %v365
        %v382 = vmul.f32 %v288, %v365
        %v383 = vmul.f32 %v293, %v365
        %v384 = vmul.f32 %v298, %v365
        %v385 = vmul.f32 %v303, %v365
        %v386 = vmul.f32 %v308, %v365
        %v387 = vmul.f32 %v313, %v365
        %v388 = vmul.f32 %v318, %v365
        %v389 = vmul.f32 %v323, %v365
        %v390 = vmul.f32 %v328, %v365
        %v391 = vmul.f32 %v333, %v365
        %v392 = vmul.f32 %v338, %v365
        %v393 = vmul.f32 %v343, %v365
        %v394 = vmul.f32 %v348, %v365
        %v395 = vmul.f32 %v353, %v365
        %v396 = vmul.f32 %v358, %v365
        %v397 = vmul.f32 %v363, %v365
        %v398 = vperm.slane %v203, 0
        %v399 = vadd.f32 %v398, %v366
        %v400 = vadd.f32 %v398, %v367
        %v401 = vadd.f32 %v398, %v368
        %v402 = vadd.f32 %v398, %v369
        %v403 = vadd.f32 %v398, %v370
        %v404 = vadd.f32 %v398, %v371
        %v405 = vadd.f32 %v398, %v372
        %v406 = vadd.f32 %v398, %v373
        %v407 = vadd.f32 %v398, %v374
        %v408 = vadd.f32 %v398, %v375
        %v409 = vadd.f32 %v398, %v376
        %v410 = vadd.f32 %v398, %v377
        %v411 = vadd.f32 %v398, %v378
        %v412 = vadd.f32 %v398, %v379
        %v413 = vadd.f32 %v398, %v380
        %v414 = vadd.f32 %v398, %v381
        %v415 = vadd.f32 %v398, %v382
        %v416 = vadd.f32 %v398, %v383
        %v417 = vadd.f32 %v398, %v384
        %v418 = vadd.f32 %v398, %v385
        %v419 = vadd.f32 %v398, %v386
        %v420 = vadd.f32 %v398, %v387
        %v421 = vadd.f32 %v398, %v388
        %v422 = vadd.f32 %v398, %v389
        %v423 = vadd.f32 %v398, %v390
        %v424 = vadd.f32 %v398, %v391
        %v425 = vadd.f32 %v398, %v392
        %v426 = vadd.f32 %v398, %v393
        %v427 = vadd.f32 %v398, %v394
        %v428 = vadd.f32 %v398, %v395
        %v429 = vadd.f32 %v398, %v396
        %v430 = vadd.f32 %v398, %v397
        %v431 = vld [vmem:[%s2 + $0x4] sm:$0x1]
        %432 = vset.pattern.permute.xlu0 1
        %433 = vperm.xlu0 %432, %v171
        %v434 = vpop.permute.xlu0 %433
        %436 = vset.pattern.permute.xlu0 1
        %437 = vperm.xlu0 %436, %v172
        %v438 = vpop.permute.xlu0 %437
        %440 = vset.pattern.permute.xlu0 1
        %441 = vperm.xlu0 %440, %v173
        %v442 = vpop.permute.xlu0 %441
        %444 = vset.pattern.permute.xlu0 1
        %445 = vperm.xlu0 %444, %v174
        %v446 = vpop.permute.xlu0 %445
        %448 = vset.pattern.permute.xlu0 1
        %449 = vperm.xlu0 %448, %v175
        %v450 = vpop.permute.xlu0 %449
        %452 = vset.pattern.permute.xlu0 1
        %453 = vperm.xlu0 %452, %v176
        %v454 = vpop.permute.xlu0 %453
        %456 = vset.pattern.permute.xlu0 1
        %457 = vperm.xlu0 %456, %v177
        %v458 = vpop.permute.xlu0 %457
        %460 = vset.pattern.permute.xlu0 1
        %461 = vperm.xlu0 %460, %v178
        %v462 = vpop.permute.xlu0 %461
        %464 = vset.pattern.permute.xlu0 1
        %465 = vperm.xlu0 %464, %v179
        %v466 = vpop.permute.xlu0 %465
        %468 = vset.pattern.permute.xlu0 1
        %469 = vperm.xlu0 %468, %v180
        %v470 = vpop.permute.xlu0 %469
        %472 = vset.pattern.permute.xlu0 1
        %473 = vperm.xlu0 %472, %v181
        %v474 = vpop.permute.xlu0 %473
        %476 = vset.pattern.permute.xlu0 1
        %477 = vperm.xlu0 %476, %v182
        %v478 = vpop.permute.xlu0 %477
        %480 = vset.pattern.permute.xlu0 1
        %481 = vperm.xlu0 %480, %v183
        %v482 = vpop.permute.xlu0 %481
        %484 = vset.pattern.permute.xlu0 1
        %485 = vperm.xlu0 %484, %v184
        %v486 = vpop.permute.xlu0 %485
        %488 = vset.pattern.permute.xlu0 1
        %489 = vperm.xlu0 %488, %v185
        %v490 = vpop.permute.xlu0 %489
        %492 = vset.pattern.permute.xlu0 1
        %493 = vperm.xlu0 %492, %v186
        %v494 = vpop.permute.xlu0 %493
        %496 = vset.pattern.permute.xlu0 1
        %497 = vperm.xlu0 %496, %v187
        %v498 = vpop.permute.xlu0 %497
        %500 = vset.pattern.permute.xlu0 1
        %501 = vperm.xlu0 %500, %v188
        %v502 = vpop.permute.xlu0 %501
        %504 = vset.pattern.permute.xlu0 1
        %505 = vperm.xlu0 %504, %v189
        %v506 = vpop.permute.xlu0 %505
        %508 = vset.pattern.permute.xlu0 1
        %509 = vperm.xlu0 %508, %v190
        %v510 = vpop.permute.xlu0 %509
        %512 = vset.pattern.permute.xlu0 1
        %513 = vperm.xlu0 %512, %v191
        %v514 = vpop.permute.xlu0 %513
        %516 = vset.pattern.permute.xlu0 1
        %517 = vperm.xlu0 %516, %v192
        %v518 = vpop.permute.xlu0 %517
        %520 = vset.pattern.permute.xlu0 1
        %521 = vperm.xlu0 %520, %v193
        %v522 = vpop.permute.xlu0 %521
        %524 = vset.pattern.permute.xlu0 1
        %525 = vperm.xlu0 %524, %v194
        %v526 = vpop.permute.xlu0 %525
        %528 = vset.pattern.permute.xlu0 1
        %529 = vperm.xlu0 %528, %v195
        %v530 = vpop.permute.xlu0 %529
        %532 = vset.pattern.permute.xlu0 1
        %533 = vperm.xlu0 %532, %v196
        %v534 = vpop.permute.xlu0 %533
        %536 = vset.pattern.permute.xlu0 1
        %537 = vperm.xlu0 %536, %v197
        %v538 = vpop.permute.xlu0 %537
        %540 = vset.pattern.permute.xlu0 1
        %541 = vperm.xlu0 %540, %v198
        %v542 = vpop.permute.xlu0 %541
        %544 = vset.pattern.permute.xlu0 1
        %545 = vperm.xlu0 %544, %v199
        %v546 = vpop.permute.xlu0 %545
        %548 = vset.pattern.permute.xlu0 1
        %549 = vperm.xlu0 %548, %v200
        %v550 = vpop.permute.xlu0 %549
        %552 = vset.pattern.permute.xlu0 1
        %553 = vperm.xlu0 %552, %v201
        %v554 = vpop.permute.xlu0 %553
        %556 = vset.pattern.permute.xlu0 1
        %557 = vperm.xlu0 %556, %v202
        %v558 = vpop.permute.xlu0 %557
        %v560 = vperm.slane %v431, 0
        %v561 = vmul.f32 %v434, %v560
        %v562 = vmul.f32 %v438, %v560
        %v563 = vmul.f32 %v442, %v560
        %v564 = vmul.f32 %v446, %v560
        %v565 = vmul.f32 %v450, %v560
        %v566 = vmul.f32 %v454, %v560
        %v567 = vmul.f32 %v458, %v560
        %v568 = vmul.f32 %v462, %v560
        %v569 = vmul.f32 %v466, %v560
        %v570 = vmul.f32 %v470, %v560
        %v571 = vmul.f32 %v474, %v560
        %v572 = vmul.f32 %v478, %v560
        %v573 = vmul.f32 %v482, %v560
        %v574 = vmul.f32 %v486, %v560
        %v575 = vmul.f32 %v490, %v560
        %v576 = vmul.f32 %v494, %v560
        %v577 = vmul.f32 %v498, %v560
        %v578 = vmul.f32 %v502, %v560
        %v579 = vmul.f32 %v506, %v560
        %v580 = vmul.f32 %v510, %v560
        %v581 = vmul.f32 %v514, %v560
        %v582 = vmul.f32 %v518, %v560
        %v583 = vmul.f32 %v522, %v560
        %v584 = vmul.f32 %v526, %v560
        %v585 = vmul.f32 %v530, %v560
        %v586 = vmul.f32 %v534, %v560
        %v587 = vmul.f32 %v538, %v560
        %v588 = vmul.f32 %v542, %v560
        %v589 = vmul.f32 %v546, %v560
        %v590 = vmul.f32 %v550, %v560
        %v591 = vmul.f32 %v554, %v560
        %v592 = vmul.f32 %v558, %v560
        %v593 = vadd.f32 %v399, %v561
        %v594 = vadd.f32 %v400, %v562
        %v595 = vadd.f32 %v401, %v563
        %v596 = vadd.f32 %v402, %v564
        %v597 = vadd.f32 %v403, %v565
        %v598 = vadd.f32 %v404, %v566
        %v599 = vadd.f32 %v405, %v567
        %v600 = vadd.f32 %v406, %v568
        %v601 = vadd.f32 %v407, %v569
        %v602 = vadd.f32 %v408, %v570
        %v603 = vadd.f32 %v409, %v571
        %v604 = vadd.f32 %v410, %v572
        %v605 = vadd.f32 %v411, %v573
        %v606 = vadd.f32 %v412, %v574
        %v607 = vadd.f32 %v413, %v575
        %v608 = vadd.f32 %v414, %v576
        %v609 = vadd.f32 %v415, %v577
        %v610 = vadd.f32 %v416, %v578
        %v611 = vadd.f32 %v417, %v579
        %v612 = vadd.f32 %v418, %v580
        %v613 = vadd.f32 %v419, %v581
        %v614 = vadd.f32 %v420, %v582
        %v615 = vadd.f32 %v421, %v583
        %v616 = vadd.f32 %v422, %v584
        %v617 = vadd.f32 %v423, %v585
        %v618 = vadd.f32 %v424, %v586
        %v619 = vadd.f32 %v425, %v587
        %v620 = vadd.f32 %v426, %v588
        %v621 = vadd.f32 %v427, %v589
        %v622 = vadd.f32 %v428, %v590
        %v623 = vadd.f32 %v429, %v591
        %v624 = vadd.f32 %v430, %v592
        %v625 = vmul.f32 %v593, %v593
        %v626 = vmul.f32 %v594, %v594
        %v627 = vmul.f32 %v595, %v595
        %v628 = vmul.f32 %v596, %v596
        %v629 = vmul.f32 %v597, %v597
        %v630 = vmul.f32 %v598, %v598
        %v631 = vmul.f32 %v599, %v599
        %v632 = vmul.f32 %v600, %v600
        %v633 = vmul.f32 %v601, %v601
        %v634 = vmul.f32 %v602, %v602
        %v635 = vmul.f32 %v603, %v603
        %v636 = vmul.f32 %v604, %v604
        %v637 = vmul.f32 %v605, %v605
        %v638 = vmul.f32 %v606, %v606
        %v639 = vmul.f32 %v607, %v607
        %v640 = vmul.f32 %v608, %v608
        %v641 = vmul.f32 %v609, %v609
        %v642 = vmul.f32 %v610, %v610
        %v643 = vmul.f32 %v611, %v611
        %v644 = vmul.f32 %v612, %v612
        %v645 = vmul.f32 %v613, %v613
        %v646 = vmul.f32 %v614, %v614
        %v647 = vmul.f32 %v615, %v615
        %v648 = vmul.f32 %v616, %v616
        %v649 = vmul.f32 %v617, %v617
        %v650 = vmul.f32 %v618, %v618
        %v651 = vmul.f32 %v619, %v619
        %v652 = vmul.f32 %v620, %v620
        %v653 = vmul.f32 %v621, %v621
        %v654 = vmul.f32 %v622, %v622
        %v655 = vmul.f32 %v623, %v623
        %v656 = vmul.f32 %v624, %v624
        %v657 = vld [vmem:[%s2 + $0x1] sm:$0x1]
        %v658 = vld [vmem:[%s2 + $0x3] sm:$0x1]
        %v659 = vperm.slane %v658, 0
        %v660 = vmul.f32 %v208, %v659
        %v661 = vmul.f32 %v213, %v659
        %v662 = vmul.f32 %v218, %v659
        %v663 = vmul.f32 %v223, %v659
        %v664 = vmul.f32 %v228, %v659
        %v665 = vmul.f32 %v233, %v659
        %v666 = vmul.f32 %v238, %v659
        %v667 = vmul.f32 %v243, %v659
        %v668 = vmul.f32 %v248, %v659
        %v669 = vmul.f32 %v253, %v659
        %v670 = vmul.f32 %v258, %v659
        %v671 = vmul.f32 %v263, %v659
        %v672 = vmul.f32 %v268, %v659
        %v673 = vmul.f32 %v273, %v659
        %v674 = vmul.f32 %v278, %v659
        %v675 = vmul.f32 %v283, %v659
        %v676 = vmul.f32 %v288, %v659
        %v677 = vmul.f32 %v293, %v659
        %v678 = vmul.f32 %v298, %v659
        %v679 = vmul.f32 %v303, %v659
        %v680 = vmul.f32 %v308, %v659
        %v681 = vmul.f32 %v313, %v659
        %v682 = vmul.f32 %v318, %v659
        %v683 = vmul.f32 %v323, %v659
        %v684 = vmul.f32 %v328, %v659
        %v685 = vmul.f32 %v333, %v659
        %v686 = vmul.f32 %v338, %v659
        %v687 = vmul.f32 %v343, %v659
        %v688 = vmul.f32 %v348, %v659
        %v689 = vmul.f32 %v353, %v659
        %v690 = vmul.f32 %v358, %v659
        %v691 = vmul.f32 %v363, %v659
        %v692 = vperm.slane %v657, 0
        %v693 = vadd.f32 %v692, %v660
        %v694 = vadd.f32 %v692, %v661
        %v695 = vadd.f32 %v692, %v662
        %v696 = vadd.f32 %v692, %v663
        %v697 = vadd.f32 %v692, %v664
        %v698 = vadd.f32 %v692, %v665
        %v699 = vadd.f32 %v692, %v666
        %v700 = vadd.f32 %v692, %v667
        %v701 = vadd.f32 %v692, %v668
        %v702 = vadd.f32 %v692, %v669
        %v703 = vadd.f32 %v692, %v670
        %v704 = vadd.f32 %v692, %v671
        %v705 = vadd.f32 %v692, %v672
        %v706 = vadd.f32 %v692, %v673
        %v707 = vadd.f32 %v692, %v674
        %v708 = vadd.f32 %v692, %v675
        %v709 = vadd.f32 %v692, %v676
        %v710 = vadd.f32 %v692, %v677
        %v711 = vadd.f32 %v692, %v678
        %v712 = vadd.f32 %v692, %v679
        %v713 = vadd.f32 %v692, %v680
        %v714 = vadd.f32 %v692, %v681
        %v715 = vadd.f32 %v692, %v682
        %v716 = vadd.f32 %v692, %v683
        %v717 = vadd.f32 %v692, %v684
        %v718 = vadd.f32 %v692, %v685
        %v719 = vadd.f32 %v692, %v686
        %v720 = vadd.f32 %v692, %v687
        %v721 = vadd.f32 %v692, %v688
        %v722 = vadd.f32 %v692, %v689
        %v723 = vadd.f32 %v692, %v690
        %v724 = vadd.f32 %v692, %v691
        %v725 = vld [vmem:[%s2 + $0x5] sm:$0x1]
        %v726 = vperm.slane %v725, 0
        %v727 = vmul.f32 %v434, %v726
        %v728 = vmul.f32 %v438, %v726
        %v729 = vmul.f32 %v442, %v726
        %v730 = vmul.f32 %v446, %v726
        %v731 = vmul.f32 %v450, %v726
        %v732 = vmul.f32 %v454, %v726
        %v733 = vmul.f32 %v458, %v726
        %v734 = vmul.f32 %v462, %v726
        %v735 = vmul.f32 %v466, %v726
        %v736 = vmul.f32 %v470, %v726
        %v737 = vmul.f32 %v474, %v726
        %v738 = vmul.f32 %v478, %v726
        %v739 = vmul.f32 %v482, %v726
        %v740 = vmul.f32 %v486, %v726
        %v741 = vmul.f32 %v490, %v726
        %v742 = vmul.f32 %v494, %v726
        %v743 = vmul.f32 %v498, %v726
        %v744 = vmul.f32 %v502, %v726
        %v745 = vmul.f32 %v506, %v726
        %v746 = vmul.f32 %v510, %v726
        %v747 = vmul.f32 %v514, %v726
        %v748 = vmul.f32 %v518, %v726
        %v749 = vmul.f32 %v522, %v726
        %v750 = vmul.f32 %v526, %v726
        %v751 = vmul.f32 %v530, %v726
        %v752 = vmul.f32 %v534, %v726
        %v753 = vmul.f32 %v538, %v726
        %v754 = vmul.f32 %v542, %v726
        %v755 = vmul.f32 %v546, %v726
        %v756 = vmul.f32 %v550, %v726
        %v757 = vmul.f32 %v554, %v726
        %v758 = vmul.f32 %v558, %v726
        %v759 = vadd.f32 %v693, %v727
        %v760 = vadd.f32 %v694, %v728
        %v761 = vadd.f32 %v695, %v729
        %v762 = vadd.f32 %v696, %v730
        %v763 = vadd.f32 %v697, %v731
        %v764 = vadd.f32 %v698, %v732
        %v765 = vadd.f32 %v699, %v733
        %v766 = vadd.f32 %v700, %v734
        %v767 = vadd.f32 %v701, %v735
        %v768 = vadd.f32 %v702, %v736
        %v769 = vadd.f32 %v703, %v737
        %v770 = vadd.f32 %v704, %v738
        %v771 = vadd.f32 %v705, %v739
        %v772 = vadd.f32 %v706, %v740
        %v773 = vadd.f32 %v707, %v741
        %v774 = vadd.f32 %v708, %v742
        %v775 = vadd.f32 %v709, %v743
        %v776 = vadd.f32 %v710, %v744
        %v777 = vadd.f32 %v711, %v745
        %v778 = vadd.f32 %v712, %v746
        %v779 = vadd.f32 %v713, %v747
        %v780 = vadd.f32 %v714, %v748
        %v781 = vadd.f32 %v715, %v749
        %v782 = vadd.f32 %v716, %v750
        %v783 = vadd.f32 %v717, %v751
        %v784 = vadd.f32 %v718, %v752
        %v785 = vadd.f32 %v719, %v753
        %v786 = vadd.f32 %v720, %v754
        %v787 = vadd.f32 %v721, %v755
        %v788 = vadd.f32 %v722, %v756
        %v789 = vadd.f32 %v723, %v757
        %v790 = vadd.f32 %v724, %v758
        %v791 = vmul.f32 %v759, %v759
        %v792 = vmul.f32 %v760, %v760
        %v793 = vmul.f32 %v761, %v761
        %v794 = vmul.f32 %v762, %v762
        %v795 = vmul.f32 %v763, %v763
        %v796 = vmul.f32 %v764, %v764
        %v797 = vmul.f32 %v765, %v765
        %v798 = vmul.f32 %v766, %v766
        %v799 = vmul.f32 %v767, %v767
        %v800 = vmul.f32 %v768, %v768
        %v801 = vmul.f32 %v769, %v769
        %v802 = vmul.f32 %v770, %v770
        %v803 = vmul.f32 %v771, %v771
        %v804 = vmul.f32 %v772, %v772
        %v805 = vmul.f32 %v773, %v773
        %v806 = vmul.f32 %v774, %v774
        %v807 = vmul.f32 %v775, %v775
        %v808 = vmul.f32 %v776, %v776
        %v809 = vmul.f32 %v777, %v777
        %v810 = vmul.f32 %v778, %v778
        %v811 = vmul.f32 %v779, %v779
        %v812 = vmul.f32 %v780, %v780
        %v813 = vmul.f32 %v781, %v781
        %v814 = vmul.f32 %v782, %v782
        %v815 = vmul.f32 %v783, %v783
        %v816 = vmul.f32 %v784, %v784
        %v817 = vmul.f32 %v785, %v785
        %v818 = vmul.f32 %v786, %v786
        %v819 = vmul.f32 %v787, %v787
        %v820 = vmul.f32 %v788, %v788
        %v821 = vmul.f32 %v789, %v789
        %v822 = vmul.f32 %v790, %v790
        %v823 = vadd.f32 %v625, %v791
        %v824 = vadd.f32 %v626, %v792
        %v825 = vadd.f32 %v627, %v793
        %v826 = vadd.f32 %v628, %v794
        %v827 = vadd.f32 %v629, %v795
        %v828 = vadd.f32 %v630, %v796
        %v829 = vadd.f32 %v631, %v797
        %v830 = vadd.f32 %v632, %v798
        %v831 = vadd.f32 %v633, %v799
        %v832 = vadd.f32 %v634, %v800
        %v833 = vadd.f32 %v635, %v801
        %v834 = vadd.f32 %v636, %v802
        %v835 = vadd.f32 %v637, %v803
        %v836 = vadd.f32 %v638, %v804
        %v837 = vadd.f32 %v639, %v805
        %v838 = vadd.f32 %v640, %v806
        %v839 = vadd.f32 %v641, %v807
        %v840 = vadd.f32 %v642, %v808
        %v841 = vadd.f32 %v643, %v809
        %v842 = vadd.f32 %v644, %v810
        %v843 = vadd.f32 %v645, %v811
        %v844 = vadd.f32 %v646, %v812
        %v845 = vadd.f32 %v647, %v813
        %v846 = vadd.f32 %v648, %v814
        %v847 = vadd.f32 %v649, %v815
        %v848 = vadd.f32 %v650, %v816
        %v849 = vadd.f32 %v651, %v817
        %v850 = vadd.f32 %v652, %v818
        %v851 = vadd.f32 %v653, %v819
        %v852 = vadd.f32 %v654, %v820
        %v853 = vadd.f32 %v655, %v821
        %v854 = vadd.f32 %v656, %v822
        %v855 = vld [vmem:[%s3] sm:$0x1]
        %v856 = vrsqrt.pop %v823
        %v857 = vmul.f32 %v856, %v823
        %v858 = vmul.f32 %v857, %v856
        %v859 = vmul.f32 0.5, %v858
        %v860 = vsub.f32 1.5, %v859
        %v861 = vmul.f32 %v856, %v860
        %v862 = vmul.f32 %v823, %v861
        %vm863 = vcmp.eq.f32.partialorder %v823, inf
        %v864 = vsel %vm863, %v823, %v862
        %vm865 = vcmp.eq.f32.partialorder %v823, 0.0
        %v866 = vand.u32 %v823, 2147483648
        %v867 = vsel %vm865, %v866, %v864
        %v868 = vrsqrt.pop %v824
        %v869 = vmul.f32 %v868, %v824
        %v870 = vmul.f32 %v869, %v868
        %v871 = vmul.f32 0.5, %v870
        %v872 = vsub.f32 1.5, %v871
        %v873 = vmul.f32 %v868, %v872
        %v874 = vmul.f32 %v824, %v873
        %vm875 = vcmp.eq.f32.partialorder %v824, inf
        %v876 = vsel %vm875, %v824, %v874
        %vm877 = vcmp.eq.f32.partialorder %v824, 0.0
        %v878 = vand.u32 %v824, 2147483648
        %v879 = vsel %vm877, %v878, %v876
        %v880 = vrsqrt.pop %v825
        %v881 = vmul.f32 %v880, %v825
        %v882 = vmul.f32 %v881, %v880
        %v883 = vmul.f32 0.5, %v882
        %v884 = vsub.f32 1.5, %v883
        %v885 = vmul.f32 %v880, %v884
        %v886 = vmul.f32 %v825, %v885
        %vm887 = vcmp.eq.f32.partialorder %v825, inf
        %v888 = vsel %vm887, %v825, %v886
        %vm889 = vcmp.eq.f32.partialorder %v825, 0.0
        %v890 = vand.u32 %v825, 2147483648
        %v891 = vsel %vm889, %v890, %v888
        %v892 = vrsqrt.pop %v826
        %v893 = vmul.f32 %v892, %v826
        %v894 = vmul.f32 %v893, %v892
        %v895 = vmul.f32 0.5, %v894
        %v896 = vsub.f32 1.5, %v895
        %v897 = vmul.f32 %v892, %v896
        %v898 = vmul.f32 %v826, %v897
        %vm899 = vcmp.eq.f32.partialorder %v826, inf
        %v900 = vsel %vm899, %v826, %v898
        %vm901 = vcmp.eq.f32.partialorder %v826, 0.0
        %v902 = vand.u32 %v826, 2147483648
        %v903 = vsel %vm901, %v902, %v900
        %v904 = vrsqrt.pop %v827
        %v905 = vmul.f32 %v904, %v827
        %v906 = vmul.f32 %v905, %v904
        %v907 = vmul.f32 0.5, %v906
        %v908 = vsub.f32 1.5, %v907
        %v909 = vmul.f32 %v904, %v908
        %v910 = vmul.f32 %v827, %v909
        %vm911 = vcmp.eq.f32.partialorder %v827, inf
        %v912 = vsel %vm911, %v827, %v910
        %vm913 = vcmp.eq.f32.partialorder %v827, 0.0
        %v914 = vand.u32 %v827, 2147483648
        %v915 = vsel %vm913, %v914, %v912
        %v916 = vrsqrt.pop %v828
        %v917 = vmul.f32 %v916, %v828
        %v918 = vmul.f32 %v917, %v916
        %v919 = vmul.f32 0.5, %v918
        %v920 = vsub.f32 1.5, %v919
        %v921 = vmul.f32 %v916, %v920
        %v922 = vmul.f32 %v828, %v921
        %vm923 = vcmp.eq.f32.partialorder %v828, inf
        %v924 = vsel %vm923, %v828, %v922
        %vm925 = vcmp.eq.f32.partialorder %v828, 0.0
        %v926 = vand.u32 %v828, 2147483648
        %v927 = vsel %vm925, %v926, %v924
        %v928 = vrsqrt.pop %v829
        %v929 = vmul.f32 %v928, %v829
        %v930 = vmul.f32 %v929, %v928
        %v931 = vmul.f32 0.5, %v930
        %v932 = vsub.f32 1.5, %v931
        %v933 = vmul.f32 %v928, %v932
        %v934 = vmul.f32 %v829, %v933
        %vm935 = vcmp.eq.f32.partialorder %v829, inf
        %v936 = vsel %vm935, %v829, %v934
        %vm937 = vcmp.eq.f32.partialorder %v829, 0.0
        %v938 = vand.u32 %v829, 2147483648
        %v939 = vsel %vm937, %v938, %v936
        %v940 = vrsqrt.pop %v830
        %v941 = vmul.f32 %v940, %v830
        %v942 = vmul.f32 %v941, %v940
        %v943 = vmul.f32 0.5, %v942
        %v944 = vsub.f32 1.5, %v943
        %v945 = vmul.f32 %v940, %v944
        %v946 = vmul.f32 %v830, %v945
        %vm947 = vcmp.eq.f32.partialorder %v830, inf
        %v948 = vsel %vm947, %v830, %v946
        %vm949 = vcmp.eq.f32.partialorder %v830, 0.0
        %v950 = vand.u32 %v830, 2147483648
        %v951 = vsel %vm949, %v950, %v948
        %v952 = vrsqrt.pop %v831
        %v953 = vmul.f32 %v952, %v831
        %v954 = vmul.f32 %v953, %v952
        %v955 = vmul.f32 0.5, %v954
        %v956 = vsub.f32 1.5, %v955
        %v957 = vmul.f32 %v952, %v956
        %v958 = vmul.f32 %v831, %v957
        %vm959 = vcmp.eq.f32.partialorder %v831, inf
        %v960 = vsel %vm959, %v831, %v958
        %vm961 = vcmp.eq.f32.partialorder %v831, 0.0
        %v962 = vand.u32 %v831, 2147483648
        %v963 = vsel %vm961, %v962, %v960
        %v964 = vrsqrt.pop %v832
        %v965 = vmul.f32 %v964, %v832
        %v966 = vmul.f32 %v965, %v964
        %v967 = vmul.f32 0.5, %v966
        %v968 = vsub.f32 1.5, %v967
        %v969 = vmul.f32 %v964, %v968
        %v970 = vmul.f32 %v832, %v969
        %vm971 = vcmp.eq.f32.partialorder %v832, inf
        %v972 = vsel %vm971, %v832, %v970
        %vm973 = vcmp.eq.f32.partialorder %v832, 0.0
        %v974 = vand.u32 %v832, 2147483648
        %v975 = vsel %vm973, %v974, %v972
        %v976 = vrsqrt.pop %v833
        %v977 = vmul.f32 %v976, %v833
        %v978 = vmul.f32 %v977, %v976
        %v979 = vmul.f32 0.5, %v978
        %v980 = vsub.f32 1.5, %v979
        %v981 = vmul.f32 %v976, %v980
        %v982 = vmul.f32 %v833, %v981
        %vm983 = vcmp.eq.f32.partialorder %v833, inf
        %v984 = vsel %vm983, %v833, %v982
        %vm985 = vcmp.eq.f32.partialorder %v833, 0.0
        %v986 = vand.u32 %v833, 2147483648
        %v987 = vsel %vm985, %v986, %v984
        %v988 = vrsqrt.pop %v834
        %v989 = vmul.f32 %v988, %v834
        %v990 = vmul.f32 %v989, %v988
        %v991 = vmul.f32 0.5, %v990
        %v992 = vsub.f32 1.5, %v991
        %v993 = vmul.f32 %v988, %v992
        %v994 = vmul.f32 %v834, %v993
        %vm995 = vcmp.eq.f32.partialorder %v834, inf
        %v996 = vsel %vm995, %v834, %v994
        %vm997 = vcmp.eq.f32.partialorder %v834, 0.0
        %v998 = vand.u32 %v834, 2147483648
        %v999 = vsel %vm997, %v998, %v996
        %v1000 = vrsqrt.pop %v835
        %v1001 = vmul.f32 %v1000, %v835
        %v1002 = vmul.f32 %v1001, %v1000
        %v1003 = vmul.f32 0.5, %v1002
        %v1004 = vsub.f32 1.5, %v1003
        %v1005 = vmul.f32 %v1000, %v1004
        %v1006 = vmul.f32 %v835, %v1005
        %vm1007 = vcmp.eq.f32.partialorder %v835, inf
        %v1008 = vsel %vm1007, %v835, %v1006
        %vm1009 = vcmp.eq.f32.partialorder %v835, 0.0
        %v1010 = vand.u32 %v835, 2147483648
        %v1011 = vsel %vm1009, %v1010, %v1008
        %v1012 = vrsqrt.pop %v836
        %v1013 = vmul.f32 %v1012, %v836
        %v1014 = vmul.f32 %v1013, %v1012
        %v1015 = vmul.f32 0.5, %v1014
        %v1016 = vsub.f32 1.5, %v1015
        %v1017 = vmul.f32 %v1012, %v1016
        %v1018 = vmul.f32 %v836, %v1017
        %vm1019 = vcmp.eq.f32.partialorder %v836, inf
        %v1020 = vsel %vm1019, %v836, %v1018
        %vm1021 = vcmp.eq.f32.partialorder %v836, 0.0
        %v1022 = vand.u32 %v836, 2147483648
        %v1023 = vsel %vm1021, %v1022, %v1020
        %v1024 = vrsqrt.pop %v837
        %v1025 = vmul.f32 %v1024, %v837
        %v1026 = vmul.f32 %v1025, %v1024
        %v1027 = vmul.f32 0.5, %v1026
        %v1028 = vsub.f32 1.5, %v1027
        %v1029 = vmul.f32 %v1024, %v1028
        %v1030 = vmul.f32 %v837, %v1029
        %vm1031 = vcmp.eq.f32.partialorder %v837, inf
        %v1032 = vsel %vm1031, %v837, %v1030
        %vm1033 = vcmp.eq.f32.partialorder %v837, 0.0
        %v1034 = vand.u32 %v837, 2147483648
        %v1035 = vsel %vm1033, %v1034, %v1032
        %v1036 = vrsqrt.pop %v838
        %v1037 = vmul.f32 %v1036, %v838
        %v1038 = vmul.f32 %v1037, %v1036
        %v1039 = vmul.f32 0.5, %v1038
        %v1040 = vsub.f32 1.5, %v1039
        %v1041 = vmul.f32 %v1036, %v1040
        %v1042 = vmul.f32 %v838, %v1041
        %vm1043 = vcmp.eq.f32.partialorder %v838, inf
        %v1044 = vsel %vm1043, %v838, %v1042
        %vm1045 = vcmp.eq.f32.partialorder %v838, 0.0
        %v1046 = vand.u32 %v838, 2147483648
        %v1047 = vsel %vm1045, %v1046, %v1044
        %v1048 = vrsqrt.pop %v839
        %v1049 = vmul.f32 %v1048, %v839
        %v1050 = vmul.f32 %v1049, %v1048
        %v1051 = vmul.f32 0.5, %v1050
        %v1052 = vsub.f32 1.5, %v1051
        %v1053 = vmul.f32 %v1048, %v1052
        %v1054 = vmul.f32 %v839, %v1053
        %vm1055 = vcmp.eq.f32.partialorder %v839, inf
        %v1056 = vsel %vm1055, %v839, %v1054
        %vm1057 = vcmp.eq.f32.partialorder %v839, 0.0
        %v1058 = vand.u32 %v839, 2147483648
        %v1059 = vsel %vm1057, %v1058, %v1056
        %v1060 = vrsqrt.pop %v840
        %v1061 = vmul.f32 %v1060, %v840
        %v1062 = vmul.f32 %v1061, %v1060
        %v1063 = vmul.f32 0.5, %v1062
        %v1064 = vsub.f32 1.5, %v1063
        %v1065 = vmul.f32 %v1060, %v1064
        %v1066 = vmul.f32 %v840, %v1065
        %vm1067 = vcmp.eq.f32.partialorder %v840, inf
        %v1068 = vsel %vm1067, %v840, %v1066
        %vm1069 = vcmp.eq.f32.partialorder %v840, 0.0
        %v1070 = vand.u32 %v840, 2147483648
        %v1071 = vsel %vm1069, %v1070, %v1068
        %v1072 = vrsqrt.pop %v841
        %v1073 = vmul.f32 %v1072, %v841
        %v1074 = vmul.f32 %v1073, %v1072
        %v1075 = vmul.f32 0.5, %v1074
        %v1076 = vsub.f32 1.5, %v1075
        %v1077 = vmul.f32 %v1072, %v1076
        %v1078 = vmul.f32 %v841, %v1077
        %vm1079 = vcmp.eq.f32.partialorder %v841, inf
        %v1080 = vsel %vm1079, %v841, %v1078
        %vm1081 = vcmp.eq.f32.partialorder %v841, 0.0
        %v1082 = vand.u32 %v841, 2147483648
        %v1083 = vsel %vm1081, %v1082, %v1080
        %v1084 = vrsqrt.pop %v842
        %v1085 = vmul.f32 %v1084, %v842
        %v1086 = vmul.f32 %v1085, %v1084
        %v1087 = vmul.f32 0.5, %v1086
        %v1088 = vsub.f32 1.5, %v1087
        %v1089 = vmul.f32 %v1084, %v1088
        %v1090 = vmul.f32 %v842, %v1089
        %vm1091 = vcmp.eq.f32.partialorder %v842, inf
        %v1092 = vsel %vm1091, %v842, %v1090
        %vm1093 = vcmp.eq.f32.partialorder %v842, 0.0
        %v1094 = vand.u32 %v842, 2147483648
        %v1095 = vsel %vm1093, %v1094, %v1092
        %v1096 = vrsqrt.pop %v843
        %v1097 = vmul.f32 %v1096, %v843
        %v1098 = vmul.f32 %v1097, %v1096
        %v1099 = vmul.f32 0.5, %v1098
        %v1100 = vsub.f32 1.5, %v1099
        %v1101 = vmul.f32 %v1096, %v1100
        %v1102 = vmul.f32 %v843, %v1101
        %vm1103 = vcmp.eq.f32.partialorder %v843, inf
        %v1104 = vsel %vm1103, %v843, %v1102
        %vm1105 = vcmp.eq.f32.partialorder %v843, 0.0
        %v1106 = vand.u32 %v843, 2147483648
        %v1107 = vsel %vm1105, %v1106, %v1104
        %v1108 = vrsqrt.pop %v844
        %v1109 = vmul.f32 %v1108, %v844
        %v1110 = vmul.f32 %v1109, %v1108
        %v1111 = vmul.f32 0.5, %v1110
        %v1112 = vsub.f32 1.5, %v1111
        %v1113 = vmul.f32 %v1108, %v1112
        %v1114 = vmul.f32 %v844, %v1113
        %vm1115 = vcmp.eq.f32.partialorder %v844, inf
        %v1116 = vsel %vm1115, %v844, %v1114
        %vm1117 = vcmp.eq.f32.partialorder %v844, 0.0
        %v1118 = vand.u32 %v844, 2147483648
        %v1119 = vsel %vm1117, %v1118, %v1116
        %v1120 = vrsqrt.pop %v845
        %v1121 = vmul.f32 %v1120, %v845
        %v1122 = vmul.f32 %v1121, %v1120
        %v1123 = vmul.f32 0.5, %v1122
        %v1124 = vsub.f32 1.5, %v1123
        %v1125 = vmul.f32 %v1120, %v1124
        %v1126 = vmul.f32 %v845, %v1125
        %vm1127 = vcmp.eq.f32.partialorder %v845, inf
        %v1128 = vsel %vm1127, %v845, %v1126
        %vm1129 = vcmp.eq.f32.partialorder %v845, 0.0
        %v1130 = vand.u32 %v845, 2147483648
        %v1131 = vsel %vm1129, %v1130, %v1128
        %v1132 = vrsqrt.pop %v846
        %v1133 = vmul.f32 %v1132, %v846
        %v1134 = vmul.f32 %v1133, %v1132
        %v1135 = vmul.f32 0.5, %v1134
        %v1136 = vsub.f32 1.5, %v1135
        %v1137 = vmul.f32 %v1132, %v1136
        %v1138 = vmul.f32 %v846, %v1137
        %vm1139 = vcmp.eq.f32.partialorder %v846, inf
        %v1140 = vsel %vm1139, %v846, %v1138
        %vm1141 = vcmp.eq.f32.partialorder %v846, 0.0
        %v1142 = vand.u32 %v846, 2147483648
        %v1143 = vsel %vm1141, %v1142, %v1140
        %v1144 = vrsqrt.pop %v847
        %v1145 = vmul.f32 %v1144, %v847
        %v1146 = vmul.f32 %v1145, %v1144
        %v1147 = vmul.f32 0.5, %v1146
        %v1148 = vsub.f32 1.5, %v1147
        %v1149 = vmul.f32 %v1144, %v1148
        %v1150 = vmul.f32 %v847, %v1149
        %vm1151 = vcmp.eq.f32.partialorder %v847, inf
        %v1152 = vsel %vm1151, %v847, %v1150
        %vm1153 = vcmp.eq.f32.partialorder %v847, 0.0
        %v1154 = vand.u32 %v847, 2147483648
        %v1155 = vsel %vm1153, %v1154, %v1152
        %v1156 = vrsqrt.pop %v848
        %v1157 = vmul.f32 %v1156, %v848
        %v1158 = vmul.f32 %v1157, %v1156
        %v1159 = vmul.f32 0.5, %v1158
        %v1160 = vsub.f32 1.5, %v1159
        %v1161 = vmul.f32 %v1156, %v1160
        %v1162 = vmul.f32 %v848, %v1161
        %vm1163 = vcmp.eq.f32.partialorder %v848, inf
        %v1164 = vsel %vm1163, %v848, %v1162
        %vm1165 = vcmp.eq.f32.partialorder %v848, 0.0
        %v1166 = vand.u32 %v848, 2147483648
        %v1167 = vsel %vm1165, %v1166, %v1164
        %v1168 = vrsqrt.pop %v849
        %v1169 = vmul.f32 %v1168, %v849
        %v1170 = vmul.f32 %v1169, %v1168
        %v1171 = vmul.f32 0.5, %v1170
        %v1172 = vsub.f32 1.5, %v1171
        %v1173 = vmul.f32 %v1168, %v1172
        %v1174 = vmul.f32 %v849, %v1173
        %vm1175 = vcmp.eq.f32.partialorder %v849, inf
        %v1176 = vsel %vm1175, %v849, %v1174
        %vm1177 = vcmp.eq.f32.partialorder %v849, 0.0
        %v1178 = vand.u32 %v849, 2147483648
        %v1179 = vsel %vm1177, %v1178, %v1176
        %v1180 = vrsqrt.pop %v850
        %v1181 = vmul.f32 %v1180, %v850
        %v1182 = vmul.f32 %v1181, %v1180
        %v1183 = vmul.f32 0.5, %v1182
        %v1184 = vsub.f32 1.5, %v1183
        %v1185 = vmul.f32 %v1180, %v1184
        %v1186 = vmul.f32 %v850, %v1185
        %vm1187 = vcmp.eq.f32.partialorder %v850, inf
        %v1188 = vsel %vm1187, %v850, %v1186
        %vm1189 = vcmp.eq.f32.partialorder %v850, 0.0
        %v1190 = vand.u32 %v850, 2147483648
        %v1191 = vsel %vm1189, %v1190, %v1188
        %v1192 = vrsqrt.pop %v851
        %v1193 = vmul.f32 %v1192, %v851
        %v1194 = vmul.f32 %v1193, %v1192
        %v1195 = vmul.f32 0.5, %v1194
        %v1196 = vsub.f32 1.5, %v1195
        %v1197 = vmul.f32 %v1192, %v1196
        %v1198 = vmul.f32 %v851, %v1197
        %vm1199 = vcmp.eq.f32.partialorder %v851, inf
        %v1200 = vsel %vm1199, %v851, %v1198
        %vm1201 = vcmp.eq.f32.partialorder %v851, 0.0
        %v1202 = vand.u32 %v851, 2147483648
        %v1203 = vsel %vm1201, %v1202, %v1200
        %v1204 = vrsqrt.pop %v852
        %v1205 = vmul.f32 %v1204, %v852
        %v1206 = vmul.f32 %v1205, %v1204
        %v1207 = vmul.f32 0.5, %v1206
        %v1208 = vsub.f32 1.5, %v1207
        %v1209 = vmul.f32 %v1204, %v1208
        %v1210 = vmul.f32 %v852, %v1209
        %vm1211 = vcmp.eq.f32.partialorder %v852, inf
        %v1212 = vsel %vm1211, %v852, %v1210
        %vm1213 = vcmp.eq.f32.partialorder %v852, 0.0
        %v1214 = vand.u32 %v852, 2147483648
        %v1215 = vsel %vm1213, %v1214, %v1212
        %v1216 = vrsqrt.pop %v853
        %v1217 = vmul.f32 %v1216, %v853
        %v1218 = vmul.f32 %v1217, %v1216
        %v1219 = vmul.f32 0.5, %v1218
        %v1220 = vsub.f32 1.5, %v1219
        %v1221 = vmul.f32 %v1216, %v1220
        %v1222 = vmul.f32 %v853, %v1221
        %vm1223 = vcmp.eq.f32.partialorder %v853, inf
        %v1224 = vsel %vm1223, %v853, %v1222
        %vm1225 = vcmp.eq.f32.partialorder %v853, 0.0
        %v1226 = vand.u32 %v853, 2147483648
        %v1227 = vsel %vm1225, %v1226, %v1224
        %v1228 = vrsqrt.pop %v854
        %v1229 = vmul.f32 %v1228, %v854
        %v1230 = vmul.f32 %v1229, %v1228
        %v1231 = vmul.f32 0.5, %v1230
        %v1232 = vsub.f32 1.5, %v1231
        %v1233 = vmul.f32 %v1228, %v1232
        %v1234 = vmul.f32 %v854, %v1233
        %vm1235 = vcmp.eq.f32.partialorder %v854, inf
        %v1236 = vsel %vm1235, %v854, %v1234
        %vm1237 = vcmp.eq.f32.partialorder %v854, 0.0
        %v1238 = vand.u32 %v854, 2147483648
        %v1239 = vsel %vm1237, %v1238, %v1236
        %v1241 = vperm.slane %v855, 0
        %v1243 = vsub.f32 %v1241, %v867
        %v1244 = vsub.f32 %v1241, %v879
        %v1245 = vsub.f32 %v1241, %v891
        %v1246 = vsub.f32 %v1241, %v903
        %v1247 = vsub.f32 %v1241, %v915
        %v1248 = vsub.f32 %v1241, %v927
        %v1249 = vsub.f32 %v1241, %v939
        %v1250 = vsub.f32 %v1241, %v951
        %v1251 = vsub.f32 %v1241, %v963
        %v1252 = vsub.f32 %v1241, %v975
        %v1253 = vsub.f32 %v1241, %v987
        %v1254 = vsub.f32 %v1241, %v999
        %v1255 = vsub.f32 %v1241, %v1011
        %v1256 = vsub.f32 %v1241, %v1023
        %v1257 = vsub.f32 %v1241, %v1035
        %v1258 = vsub.f32 %v1241, %v1047
        %v1259 = vsub.f32 %v1241, %v1059
        %v1260 = vsub.f32 %v1241, %v1071
        %v1261 = vsub.f32 %v1241, %v1083
        %v1262 = vsub.f32 %v1241, %v1095
        %v1263 = vsub.f32 %v1241, %v1107
        %v1264 = vsub.f32 %v1241, %v1119
        %v1265 = vsub.f32 %v1241, %v1131
        %v1266 = vsub.f32 %v1241, %v1143
        %v1267 = vsub.f32 %v1241, %v1155
        %v1268 = vsub.f32 %v1241, %v1167
        %v1269 = vsub.f32 %v1241, %v1179
        %v1270 = vsub.f32 %v1241, %v1191
        %v1271 = vsub.f32 %v1241, %v1203
        %v1272 = vsub.f32 %v1241, %v1215
        %v1273 = vsub.f32 %v1241, %v1227
        %v1274 = vsub.f32 %v1241, %v1239
        %s1275 = sld [smem:[#allocation3 + %s24]]
        %p1276 = scmp.eq.s32.totalorder %s1275, 0
        // Predicated region
        $region37: #{tpu_custom_call.1} parent=31 // pred_check
          %p1277 = pneg %p1276
        $region38: #{tpu_custom_call.1} parent=31 // pred_check_branch
          %1279 = sbr.rel (%p1277) target = $region40
        $region39: #{tpu_custom_call.1} parent=31 // pred_region
          %v1280 = vld [vmem:[#allocation4] sm:$0x1]
          %v1281 = vmul.f32 %v1243, 1.442695
          %v1282 = vpow.pop %v1281
          %v1283 = vmul.f32 %v1244, 1.442695
          %v1284 = vpow.pop %v1283
          %v1285 = vmul.f32 %v1245, 1.442695
          %v1286 = vpow.pop %v1285
          %v1287 = vmul.f32 %v1246, 1.442695
          %v1288 = vpow.pop %v1287
          %v1289 = vmul.f32 %v1247, 1.442695
          %v1290 = vpow.pop %v1289
          %v1291 = vmul.f32 %v1248, 1.442695
          %v1292 = vpow.pop %v1291
          %v1293 = vmul.f32 %v1249, 1.442695
          %v1294 = vpow.pop %v1293
          %v1295 = vmul.f32 %v1250, 1.442695
          %v1296 = vpow.pop %v1295
          %v1297 = vmul.f32 %v1251, 1.442695
          %v1298 = vpow.pop %v1297
          %v1299 = vmul.f32 %v1252, 1.442695
          %v1300 = vpow.pop %v1299
          %v1301 = vmul.f32 %v1253, 1.442695
          %v1302 = vpow.pop %v1301
          %v1303 = vmul.f32 %v1254, 1.442695
          %v1304 = vpow.pop %v1303
          %v1305 = vmul.f32 %v1255, 1.442695
          %v1306 = vpow.pop %v1305
          %v1307 = vmul.f32 %v1256, 1.442695
          %v1308 = vpow.pop %v1307
          %v1309 = vmul.f32 %v1257, 1.442695
          %v1310 = vpow.pop %v1309
          %v1311 = vmul.f32 %v1258, 1.442695
          %v1312 = vpow.pop %v1311
          %v1313 = vmul.f32 %v1259, 1.442695
          %v1314 = vpow.pop %v1313
          %v1315 = vmul.f32 %v1260, 1.442695
          %v1316 = vpow.pop %v1315
          %v1317 = vmul.f32 %v1261, 1.442695
          %v1318 = vpow.pop %v1317
          %v1319 = vmul.f32 %v1262, 1.442695
          %v1320 = vpow.pop %v1319
          %v1321 = vmul.f32 %v1263, 1.442695
          %v1322 = vpow.pop %v1321
          %v1323 = vmul.f32 %v1264, 1.442695
          %v1324 = vpow.pop %v1323
          %v1325 = vmul.f32 %v1265, 1.442695
          %v1326 = vpow.pop %v1325
          %v1327 = vmul.f32 %v1266, 1.442695
          %v1328 = vpow.pop %v1327
          %v1329 = vmul.f32 %v1267, 1.442695
          %v1330 = vpow.pop %v1329
          %v1331 = vmul.f32 %v1268, 1.442695
          %v1332 = vpow.pop %v1331
          %v1333 = vmul.f32 %v1269, 1.442695
          %v1334 = vpow.pop %v1333
          %v1335 = vmul.f32 %v1270, 1.442695
          %v1336 = vpow.pop %v1335
          %v1337 = vmul.f32 %v1271, 1.442695
          %v1338 = vpow.pop %v1337
          %v1339 = vmul.f32 %v1272, 1.442695
          %v1340 = vpow.pop %v1339
          %v1341 = vmul.f32 %v1273, 1.442695
          %v1342 = vpow.pop %v1341
          %v1343 = vmul.f32 %v1274, 1.442695
          %v1344 = vpow.pop %v1343
          %1345 = vset.pattern.permute.xlu0 2
          %1346 = vperm.xlu0 %1345, %v171
          %v1347 = vpop.permute.xlu0 %1346
          %1349 = vset.pattern.permute.xlu0 2
          %1350 = vperm.xlu0 %1349, %v172
          %v1351 = vpop.permute.xlu0 %1350
          %1353 = vset.pattern.permute.xlu0 2
          %1354 = vperm.xlu0 %1353, %v173
          %v1355 = vpop.permute.xlu0 %1354
          %1357 = vset.pattern.permute.xlu0 2
          %1358 = vperm.xlu0 %1357, %v174
          %v1359 = vpop.permute.xlu0 %1358
          %1361 = vset.pattern.permute.xlu0 2
          %1362 = vperm.xlu0 %1361, %v175
          %v1363 = vpop.permute.xlu0 %1362
          %1365 = vset.pattern.permute.xlu0 2
          %1366 = vperm.xlu0 %1365, %v176
          %v1367 = vpop.permute.xlu0 %1366
          %1369 = vset.pattern.permute.xlu0 2
          %1370 = vperm.xlu0 %1369, %v177
          %v1371 = vpop.permute.xlu0 %1370
          %1373 = vset.pattern.permute.xlu0 2
          %1374 = vperm.xlu0 %1373, %v178
          %v1375 = vpop.permute.xlu0 %1374
          %1377 = vset.pattern.permute.xlu0 2
          %1378 = vperm.xlu0 %1377, %v179
          %v1379 = vpop.permute.xlu0 %1378
          %1381 = vset.pattern.permute.xlu0 2
          %1382 = vperm.xlu0 %1381, %v180
          %v1383 = vpop.permute.xlu0 %1382
          %1385 = vset.pattern.permute.xlu0 2
          %1386 = vperm.xlu0 %1385, %v181
          %v1387 = vpop.permute.xlu0 %1386
          %1389 = vset.pattern.permute.xlu0 2
          %1390 = vperm.xlu0 %1389, %v182
          %v1391 = vpop.permute.xlu0 %1390
          %1393 = vset.pattern.permute.xlu0 2
          %1394 = vperm.xlu0 %1393, %v183
          %v1395 = vpop.permute.xlu0 %1394
          %1397 = vset.pattern.permute.xlu0 2
          %1398 = vperm.xlu0 %1397, %v184
          %v1399 = vpop.permute.xlu0 %1398
          %1401 = vset.pattern.permute.xlu0 2
          %1402 = vperm.xlu0 %1401, %v185
          %v1403 = vpop.permute.xlu0 %1402
          %1405 = vset.pattern.permute.xlu0 2
          %1406 = vperm.xlu0 %1405, %v186
          %v1407 = vpop.permute.xlu0 %1406
          %1409 = vset.pattern.permute.xlu0 2
          %1410 = vperm.xlu0 %1409, %v187
          %v1411 = vpop.permute.xlu0 %1410
          %1413 = vset.pattern.permute.xlu0 2
          %1414 = vperm.xlu0 %1413, %v188
          %v1415 = vpop.permute.xlu0 %1414
          %1417 = vset.pattern.permute.xlu0 2
          %1418 = vperm.xlu0 %1417, %v189
          %v1419 = vpop.permute.xlu0 %1418
          %1421 = vset.pattern.permute.xlu0 2
          %1422 = vperm.xlu0 %1421, %v190
          %v1423 = vpop.permute.xlu0 %1422
          %1425 = vset.pattern.permute.xlu0 2
          %1426 = vperm.xlu0 %1425, %v191
          %v1427 = vpop.permute.xlu0 %1426
          %1429 = vset.pattern.permute.xlu0 2
          %1430 = vperm.xlu0 %1429, %v192
          %v1431 = vpop.permute.xlu0 %1430
          %1433 = vset.pattern.permute.xlu0 2
          %1434 = vperm.xlu0 %1433, %v193
          %v1435 = vpop.permute.xlu0 %1434
          %1437 = vset.pattern.permute.xlu0 2
          %1438 = vperm.xlu0 %1437, %v194
          %v1439 = vpop.permute.xlu0 %1438
          %1441 = vset.pattern.permute.xlu0 2
          %1442 = vperm.xlu0 %1441, %v195
          %v1443 = vpop.permute.xlu0 %1442
          %1445 = vset.pattern.permute.xlu0 2
          %1446 = vperm.xlu0 %1445, %v196
          %v1447 = vpop.permute.xlu0 %1446
          %1449 = vset.pattern.permute.xlu0 2
          %1450 = vperm.xlu0 %1449, %v197
          %v1451 = vpop.permute.xlu0 %1450
          %1453 = vset.pattern.permute.xlu0 2
          %1454 = vperm.xlu0 %1453, %v198
          %v1455 = vpop.permute.xlu0 %1454
          %1457 = vset.pattern.permute.xlu0 2
          %1458 = vperm.xlu0 %1457, %v199
          %v1459 = vpop.permute.xlu0 %1458
          %1461 = vset.pattern.permute.xlu0 2
          %1462 = vperm.xlu0 %1461, %v200
          %v1463 = vpop.permute.xlu0 %1462
          %1465 = vset.pattern.permute.xlu0 2
          %1466 = vperm.xlu0 %1465, %v201
          %v1467 = vpop.permute.xlu0 %1466
          %1469 = vset.pattern.permute.xlu0 2
          %1470 = vperm.xlu0 %1469, %v202
          %v1471 = vpop.permute.xlu0 %1470
          %v1473 = vmul.f32 %v1347, %v1282
          %v1474 = vmul.f32 %v1351, %v1284
          %v1475 = vmul.f32 %v1355, %v1286
          %v1476 = vmul.f32 %v1359, %v1288
          %v1477 = vmul.f32 %v1363, %v1290
          %v1478 = vmul.f32 %v1367, %v1292
          %v1479 = vmul.f32 %v1371, %v1294
          %v1480 = vmul.f32 %v1375, %v1296
          %v1481 = vmul.f32 %v1379, %v1298
          %v1482 = vmul.f32 %v1383, %v1300
          %v1483 = vmul.f32 %v1387, %v1302
          %v1484 = vmul.f32 %v1391, %v1304
          %v1485 = vmul.f32 %v1395, %v1306
          %v1486 = vmul.f32 %v1399, %v1308
          %v1487 = vmul.f32 %v1403, %v1310
          %v1488 = vmul.f32 %v1407, %v1312
          %v1489 = vmul.f32 %v1411, %v1314
          %v1490 = vmul.f32 %v1415, %v1316
          %v1491 = vmul.f32 %v1419, %v1318
          %v1492 = vmul.f32 %v1423, %v1320
          %v1493 = vmul.f32 %v1427, %v1322
          %v1494 = vmul.f32 %v1431, %v1324
          %v1495 = vmul.f32 %v1435, %v1326
          %v1496 = vmul.f32 %v1439, %v1328
          %v1497 = vmul.f32 %v1443, %v1330
          %v1498 = vmul.f32 %v1447, %v1332
          %v1499 = vmul.f32 %v1451, %v1334
          %v1500 = vmul.f32 %v1455, %v1336
          %v1501 = vmul.f32 %v1459, %v1338
          %v1502 = vmul.f32 %v1463, %v1340
          %v1503 = vmul.f32 %v1467, %v1342
          %v1504 = vmul.f32 %v1471, %v1344
          %v1505 = vadd.f32 %v1473, %v1474
          %v1506 = vadd.f32 %v1505, %v1475
          %v1507 = vadd.f32 %v1506, %v1476
          %v1508 = vadd.f32 %v1507, %v1477
          %v1509 = vadd.f32 %v1508, %v1478
          %v1510 = vadd.f32 %v1509, %v1479
          %v1511 = vadd.f32 %v1510, %v1480
          %v1512 = vadd.f32 %v1511, %v1481
          %v1513 = vadd.f32 %v1512, %v1482
          %v1514 = vadd.f32 %v1513, %v1483
          %v1515 = vadd.f32 %v1514, %v1484
          %v1516 = vadd.f32 %v1515, %v1485
          %v1517 = vadd.f32 %v1516, %v1486
          %v1518 = vadd.f32 %v1517, %v1487
          %v1519 = vadd.f32 %v1518, %v1488
          %v1520 = vadd.f32 %v1519, %v1489
          %v1521 = vadd.f32 %v1520, %v1490
          %v1522 = vadd.f32 %v1521, %v1491
          %v1523 = vadd.f32 %v1522, %v1492
          %v1524 = vadd.f32 %v1523, %v1493
          %v1525 = vadd.f32 %v1524, %v1494
          %v1526 = vadd.f32 %v1525, %v1495
          %v1527 = vadd.f32 %v1526, %v1496
          %v1528 = vadd.f32 %v1527, %v1497
          %v1529 = vadd.f32 %v1528, %v1498
          %v1530 = vadd.f32 %v1529, %v1499
          %v1531 = vadd.f32 %v1530, %v1500
          %v1532 = vadd.f32 %v1531, %v1501
          %v1533 = vadd.f32 %v1532, %v1502
          %v1534 = vadd.f32 %v1533, %v1503
          %v1535 = vadd.f32 %v1534, %v1504
          %v1536 = vrot.slane %v1535, 4
          %v1537 = vadd.f32 %v1535, %v1536
          %v1538 = vrot.slane %v1537, 2
          %v1539 = vadd.f32 %v1537, %v1538
          %v1540 = vrot.slane %v1539, 1
          %v1541 = vadd.f32 %v1539, %v1540
          %v1542 = vadd.f32 %v1280, %v1541
          %1543 = vst [vmem:[#allocation4] sm:$0x1] %v1542
        $region40: #{tpu_custom_call.1} parent=31 // pred_fallthru
          _
        %p1544 = scmp.eq.s32.totalorder %s1275, 1
        // Predicated region
        $region41: #{tpu_custom_call.1} parent=31 // pred_check
          %p1545 = pneg %p1544
        $region42: #{tpu_custom_call.1} parent=31 // pred_check_branch
          %1547 = sbr.rel (%p1545) target = $region44
        $region43: #{tpu_custom_call.1} parent=31 // pred_region
          %v1548 = vld [vmem:[#allocation4] sm:$0x1]
          %v1549 = vsub.f32 0.0, %v1243
          %v1550 = vsub.f32 0.0, %v1244
          %v1551 = vsub.f32 0.0, %v1245
          %v1552 = vsub.f32 0.0, %v1246
          %v1553 = vsub.f32 0.0, %v1247
          %v1554 = vsub.f32 0.0, %v1248
          %v1555 = vsub.f32 0.0, %v1249
          %v1556 = vsub.f32 0.0, %v1250
          %v1557 = vsub.f32 0.0, %v1251
          %v1558 = vsub.f32 0.0, %v1252
          %v1559 = vsub.f32 0.0, %v1253
          %v1560 = vsub.f32 0.0, %v1254
          %v1561 = vsub.f32 0.0, %v1255
          %v1562 = vsub.f32 0.0, %v1256
          %v1563 = vsub.f32 0.0, %v1257
          %v1564 = vsub.f32 0.0, %v1258
          %v1565 = vsub.f32 0.0, %v1259
          %v1566 = vsub.f32 0.0, %v1260
          %v1567 = vsub.f32 0.0, %v1261
          %v1568 = vsub.f32 0.0, %v1262
          %v1569 = vsub.f32 0.0, %v1263
          %v1570 = vsub.f32 0.0, %v1264
          %v1571 = vsub.f32 0.0, %v1265
          %v1572 = vsub.f32 0.0, %v1266
          %v1573 = vsub.f32 0.0, %v1267
          %v1574 = vsub.f32 0.0, %v1268
          %v1575 = vsub.f32 0.0, %v1269
          %v1576 = vsub.f32 0.0, %v1270
          %v1577 = vsub.f32 0.0, %v1271
          %v1578 = vsub.f32 0.0, %v1272
          %v1579 = vsub.f32 0.0, %v1273
          %v1580 = vsub.f32 0.0, %v1274
          %1581 = vset.pattern.permute.xlu0 2
          %1582 = vperm.xlu0 %1581, %v171
          %v1583 = vpop.permute.xlu0 %1582
          %1585 = vset.pattern.permute.xlu0 2
          %1586 = vperm.xlu0 %1585, %v172
          %v1587 = vpop.permute.xlu0 %1586
          %1589 = vset.pattern.permute.xlu0 2
          %1590 = vperm.xlu0 %1589, %v173
          %v1591 = vpop.permute.xlu0 %1590
          %1593 = vset.pattern.permute.xlu0 2
          %1594 = vperm.xlu0 %1593, %v174
          %v1595 = vpop.permute.xlu0 %1594
          %1597 = vset.pattern.permute.xlu0 2
          %1598 = vperm.xlu0 %1597, %v175
          %v1599 = vpop.permute.xlu0 %1598
          %1601 = vset.pattern.permute.xlu0 2
          %1602 = vperm.xlu0 %1601, %v176
          %v1603 = vpop.permute.xlu0 %1602
          %1605 = vset.pattern.permute.xlu0 2
          %1606 = vperm.xlu0 %1605, %v177
          %v1607 = vpop.permute.xlu0 %1606
          %1609 = vset.pattern.permute.xlu0 2
          %1610 = vperm.xlu0 %1609, %v178
          %v1611 = vpop.permute.xlu0 %1610
          %1613 = vset.pattern.permute.xlu0 2
          %1614 = vperm.xlu0 %1613, %v179
          %v1615 = vpop.permute.xlu0 %1614
          %1617 = vset.pattern.permute.xlu0 2
          %1618 = vperm.xlu0 %1617, %v180
          %v1619 = vpop.permute.xlu0 %1618
          %1621 = vset.pattern.permute.xlu0 2
          %1622 = vperm.xlu0 %1621, %v181
          %v1623 = vpop.permute.xlu0 %1622
          %1625 = vset.pattern.permute.xlu0 2
          %1626 = vperm.xlu0 %1625, %v182
          %v1627 = vpop.permute.xlu0 %1626
          %1629 = vset.pattern.permute.xlu0 2
          %1630 = vperm.xlu0 %1629, %v183
          %v1631 = vpop.permute.xlu0 %1630
          %1633 = vset.pattern.permute.xlu0 2
          %1634 = vperm.xlu0 %1633, %v184
          %v1635 = vpop.permute.xlu0 %1634
          %1637 = vset.pattern.permute.xlu0 2
          %1638 = vperm.xlu0 %1637, %v185
          %v1639 = vpop.permute.xlu0 %1638
          %1641 = vset.pattern.permute.xlu0 2
          %1642 = vperm.xlu0 %1641, %v186
          %v1643 = vpop.permute.xlu0 %1642
          %1645 = vset.pattern.permute.xlu0 2
          %1646 = vperm.xlu0 %1645, %v187
          %v1647 = vpop.permute.xlu0 %1646
          %1649 = vset.pattern.permute.xlu0 2
          %1650 = vperm.xlu0 %1649, %v188
          %v1651 = vpop.permute.xlu0 %1650
          %1653 = vset.pattern.permute.xlu0 2
          %1654 = vperm.xlu0 %1653, %v189
          %v1655 = vpop.permute.xlu0 %1654
          %1657 = vset.pattern.permute.xlu0 2
          %1658 = vperm.xlu0 %1657, %v190
          %v1659 = vpop.permute.xlu0 %1658
          %1661 = vset.pattern.permute.xlu0 2
          %1662 = vperm.xlu0 %1661, %v191
          %v1663 = vpop.permute.xlu0 %1662
          %1665 = vset.pattern.permute.xlu0 2
          %1666 = vperm.xlu0 %1665, %v192
          %v1667 = vpop.permute.xlu0 %1666
          %1669 = vset.pattern.permute.xlu0 2
          %1670 = vperm.xlu0 %1669, %v193
          %v1671 = vpop.permute.xlu0 %1670
          %1673 = vset.pattern.permute.xlu0 2
          %1674 = vperm.xlu0 %1673, %v194
          %v1675 = vpop.permute.xlu0 %1674
          %1677 = vset.pattern.permute.xlu0 2
          %1678 = vperm.xlu0 %1677, %v195
          %v1679 = vpop.permute.xlu0 %1678
          %1681 = vset.pattern.permute.xlu0 2
          %1682 = vperm.xlu0 %1681, %v196
          %v1683 = vpop.permute.xlu0 %1682
          %1685 = vset.pattern.permute.xlu0 2
          %1686 = vperm.xlu0 %1685, %v197
          %v1687 = vpop.permute.xlu0 %1686
          %1689 = vset.pattern.permute.xlu0 2
          %1690 = vperm.xlu0 %1689, %v198
          %v1691 = vpop.permute.xlu0 %1690
          %1693 = vset.pattern.permute.xlu0 2
          %1694 = vperm.xlu0 %1693, %v199
          %v1695 = vpop.permute.xlu0 %1694
          %1697 = vset.pattern.permute.xlu0 2
          %1698 = vperm.xlu0 %1697, %v200
          %v1699 = vpop.permute.xlu0 %1698
          %1701 = vset.pattern.permute.xlu0 2
          %1702 = vperm.xlu0 %1701, %v201
          %v1703 = vpop.permute.xlu0 %1702
          %1705 = vset.pattern.permute.xlu0 2
          %1706 = vperm.xlu0 %1705, %v202
          %v1707 = vpop.permute.xlu0 %1706
          %v1709 = vmul.f32 %v1583, %v1549
          %v1710 = vmul.f32 %v1587, %v1550
          %v1711 = vmul.f32 %v1591, %v1551
          %v1712 = vmul.f32 %v1595, %v1552
          %v1713 = vmul.f32 %v1599, %v1553
          %v1714 = vmul.f32 %v1603, %v1554
          %v1715 = vmul.f32 %v1607, %v1555
          %v1716 = vmul.f32 %v1611, %v1556
          %v1717 = vmul.f32 %v1615, %v1557
          %v1718 = vmul.f32 %v1619, %v1558
          %v1719 = vmul.f32 %v1623, %v1559
          %v1720 = vmul.f32 %v1627, %v1560
          %v1721 = vmul.f32 %v1631, %v1561
          %v1722 = vmul.f32 %v1635, %v1562
          %v1723 = vmul.f32 %v1639, %v1563
          %v1724 = vmul.f32 %v1643, %v1564
          %v1725 = vmul.f32 %v1647, %v1565
          %v1726 = vmul.f32 %v1651, %v1566
          %v1727 = vmul.f32 %v1655, %v1567
          %v1728 = vmul.f32 %v1659, %v1568
          %v1729 = vmul.f32 %v1663, %v1569
          %v1730 = vmul.f32 %v1667, %v1570
          %v1731 = vmul.f32 %v1671, %v1571
          %v1732 = vmul.f32 %v1675, %v1572
          %v1733 = vmul.f32 %v1679, %v1573
          %v1734 = vmul.f32 %v1683, %v1574
          %v1735 = vmul.f32 %v1687, %v1575
          %v1736 = vmul.f32 %v1691, %v1576
          %v1737 = vmul.f32 %v1695, %v1577
          %v1738 = vmul.f32 %v1699, %v1578
          %v1739 = vmul.f32 %v1703, %v1579
          %v1740 = vmul.f32 %v1707, %v1580
          %v1741 = vadd.f32 %v1709, %v1710
          %v1742 = vadd.f32 %v1741, %v1711
          %v1743 = vadd.f32 %v1742, %v1712
          %v1744 = vadd.f32 %v1743, %v1713
          %v1745 = vadd.f32 %v1744, %v1714
          %v1746 = vadd.f32 %v1745, %v1715
          %v1747 = vadd.f32 %v1746, %v1716
          %v1748 = vadd.f32 %v1747, %v1717
          %v1749 = vadd.f32 %v1748, %v1718
          %v1750 = vadd.f32 %v1749, %v1719
          %v1751 = vadd.f32 %v1750, %v1720
          %v1752 = vadd.f32 %v1751, %v1721
          %v1753 = vadd.f32 %v1752, %v1722
          %v1754 = vadd.f32 %v1753, %v1723
          %v1755 = vadd.f32 %v1754, %v1724
          %v1756 = vadd.f32 %v1755, %v1725
          %v1757 = vadd.f32 %v1756, %v1726
          %v1758 = vadd.f32 %v1757, %v1727
          %v1759 = vadd.f32 %v1758, %v1728
          %v1760 = vadd.f32 %v1759, %v1729
          %v1761 = vadd.f32 %v1760, %v1730
          %v1762 = vadd.f32 %v1761, %v1731
          %v1763 = vadd.f32 %v1762, %v1732
          %v1764 = vadd.f32 %v1763, %v1733
          %v1765 = vadd.f32 %v1764, %v1734
          %v1766 = vadd.f32 %v1765, %v1735
          %v1767 = vadd.f32 %v1766, %v1736
          %v1768 = vadd.f32 %v1767, %v1737
          %v1769 = vadd.f32 %v1768, %v1738
          %v1770 = vadd.f32 %v1769, %v1739
          %v1771 = vadd.f32 %v1770, %v1740
          %v1772 = vrot.slane %v1771, 4
          %v1773 = vadd.f32 %v1771, %v1772
          %v1774 = vrot.slane %v1773, 2
          %v1775 = vadd.f32 %v1773, %v1774
          %v1776 = vrot.slane %v1775, 1
          %v1777 = vadd.f32 %v1775, %v1776
          %v1778 = vadd.f32 %v1548, %v1777
          %1779 = vst [vmem:[#allocation4] sm:$0x1] %v1778
        $region44: #{tpu_custom_call.1} parent=31 // pred_fallthru
          _
        // Predicated region
        $region45: #{tpu_custom_call.1} parent=31 // pred_check
          %p1780 = pneg %p105
        $region46: #{tpu_custom_call.1} parent=31 // pred_check_branch
          %1782 = sbr.rel (%p1780) target = $region48
        $region47: #{tpu_custom_call.1} parent=31 // pred_region
          %1784 = vsyncadd [#allocation5], 0
          %s1786 = sshll.u32 [#allocation4], 4
          %s1787 = int_to_ptr.vmem [resolvable:$true] %s1786
          %s1788 = sshll.u32 %s4, 4
          %s1789 = int_to_ptr.hbm [resolvable:$true] %s1788
          %1791 = dma.vmem_to_hbm [thread:$0]  %s1787, 16, %s1789, [#allocation5]
        $region48: #{tpu_custom_call.1} parent=31 // pred_fallthru
          _
        // Predicated region
        $region49: #{tpu_custom_call.1} parent=31 // pred_check
          %p1792 = pneg %p105
        $region50: #{tpu_custom_call.1} parent=31 // pred_check_branch
          %1794 = sbr.rel (%p1792) target = $region52
        $region51: #{tpu_custom_call.1} parent=31 // pred_region
          %1796 = dma.done [#allocation5], 16
        $region52: #{tpu_custom_call.1} parent=31 // pred_fallthru
          _
      $region32: #{tpu_custom_call.1} parent=5 // pred_fallthru
        _
      %p1797 = scmp.le.s32.totalorder 2, %s19
      // Predicated region
      $region53: #{tpu_custom_call.1} parent=5 // pred_check
        %p1798 = pneg %p1797
      $region54: #{tpu_custom_call.1} parent=5 // pred_check_branch
        %1800 = sbr.rel (%p1798) target = $region56
      $region55: #{tpu_custom_call.1} parent=5 // pred_region
        %s1801 = ssub.s32 %s19, 2
      $region56: #{tpu_custom_call.1} parent=5 // pred_fallthru
        _
    $region6: #{tpu_custom_call.1} parent=1 // loop_footer
      %s23 = sadd.s32 1, %s19
    $region7: #{tpu_custom_call.1} parent=1 // loop_footer_branch
      %18 = sbr.rel target = $region3
    $region8: #{tpu_custom_call.1} parent=1 // loop_exit
      _
    %1802 = vsyncpa [#allocation5], 1
    %s1803 = scalar_lea.sflag [#allocation5], 1
    %1804 = vsyncpa %s1803, 1

</llo_original>
